<compile_context>
chip_gen: v6e
topology: v6e:2x2x1
jax: 0.10.0
libtpu: 0.0.40
codegen_flags: <defaults>
</compile_context>

<pallas_src>
import re
import functools

import jax
import jax.numpy as jnp
from jax.experimental import pallas as pl
from jax.experimental.pallas import tpu as pltpu

EPS_LN = 1e-5
EPS_AGG = 1e-5


def _layer_norm(x, gamma, beta):
    mu = jnp.mean(x, axis=-1, keepdims=True)
    var = jnp.mean(jnp.square(x - mu), axis=-1, keepdims=True)
    return (x - mu) * jax.lax.rsqrt(var + EPS_LN) * gamma + beta


def _tpu_generation(default=6):
    """Best-effort TPU generation (5/6/7) from device_kind; trace-time Python."""
    try:
        kind = jax.devices()[0].device_kind
    except Exception:
        return default
    m = re.search(r"(\d+)", kind)
    return int(m.group(1)) if m else default


def _make_kernel(*, fuse, Ed, Er, M, gelu_dtype):
    """Build the kernel; `fuse`/`gelu_dtype` are static generation-dependent choices."""

    def kernel(
        dist_ref,               # (R, Ed)   R = TN*M flattened edge rows
        dir_ref,                # (R, Er)
        mask_ref,               # (R, 1)    flat neighbor mask (lane-broadcastable)
        cnt_ref,                # (TN, 1)   precomputed neighbor counts
        wl_ref,                 # (Ed+Er, H) edge_linear weight (MXU dtype)
        bl_ref,                 # (1, H)
        ln1_g_ref, ln1_b_ref,   # (1, H)    InputLayer.norm
        w1_ref, b1_ref,         # (H, H), (1, H)  edge_ffn layer 1 (MXU dtype weight)
        w2_ref, b2_ref,         # (H, H), (1, H)  edge_ffn layer 2 (MXU dtype weight)
        ln2_g_ref, ln2_b_ref,   # (1, H)    InputBlock.norm (shared node/edge)
        node_out_ref,           # (TN, H)
        edge_out_ref,           # (R, H)
    ):
        mxu = wl_ref.dtype
        R, H = edge_out_ref.shape
        TN = R // M

        # --- edge_linear ----------------------------------------------------
        if fuse:
            # v6e/v7x: one K=Ed+Er push fills the 256-deep MXU; in-VMEM concat
            # of two 128-lane-aligned halves is a cheap vst, far less than the
            # saved LHS row-pushes once the kernel is no longer HBM-bound.
            x = jnp.concatenate(
                [dist_ref[...].astype(mxu), dir_ref[...].astype(mxu)], axis=-1)
            eh = jnp.dot(x, wl_ref[...], preferred_element_type=jnp.float32)
        else:
            # v5e: 128-deep MXU — split matmuls, skip the concat traffic.
            eh = (
                jnp.dot(dist_ref[...].astype(mxu), wl_ref[pl.ds(0, Ed), :],
                        preferred_element_type=jnp.float32)
                + jnp.dot(dir_ref[...].astype(mxu), wl_ref[pl.ds(Ed, Er), :],
                          preferred_element_type=jnp.float32)
            )
        eh = eh + bl_ref[...]                                   # (R, H) f32

        # --- edge_ffn(norm(eh)) + residual ----------------------------------
        xn = _layer_norm(eh, ln1_g_ref[...], ln1_b_ref[...])    # stats in f32
        h = jnp.dot(xn.astype(mxu), w1_ref[...],
                    preferred_element_type=jnp.float32) + b1_ref[...]
        # GELU in bf16 on v6e/v7x (bf16 EUP/VPU); it is cast to the MXU dtype
        # for the next matmul anyway, so this costs no extra precision.
        h = jax.nn.gelu(h.astype(gelu_dtype))                   # tanh-approx GELU
        h = jnp.dot(h.astype(mxu), w2_ref[...],
                    preferred_element_type=jnp.float32) + b2_ref[...]
        edge_output = eh + h                                     # (R, H) f32

        # --- masked-mean aggregation over neighbors -> node features --------
        # (R,1) mask broadcasts along lanes; (R,H)->(TN,M,H) is sublane-aligned
        # (M == 8), effectively free.  Counts are precomputed in the wrapper.
        masked = edge_output * mask_ref[...]
        num = jnp.sum(masked.reshape(TN, M, H), axis=1)          # (TN, H)
        inv = pl.reciprocal(cnt_ref[...] + EPS_AGG, approx=False)  # tiny vector
        node = num * inv                                         # (TN, H)

        # --- InputBlock.norm on both node and edge features (shared params) -
        g_out = ln2_g_ref[...]
        b_out = ln2_b_ref[...]
        node_out_ref[...] = _layer_norm(node, g_out, b_out).astype(node_out_ref.dtype)
        edge_out_ref[...] = _layer_norm(edge_output, g_out, b_out).astype(edge_out_ref.dtype)

    return kernel


def _choose_tile_nodes(N, M, Ed, Er, H, *, gen, in_isz, edge_out_isz, node_out_isz):
    """Largest node tile (multiple of 8, divides N) fitting the per-generation
    VMEM budget.  Single-TC v5e/v6e: just take the biggest (grid is a serial
    loop, extra steps only add overhead).  Dual-TC v7x: prefer an even number
    of grid steps (ideally >= 4) so both TensorCores stay balanced."""
    if gen >= 7:
        vmem_budget, num_cores = 28 << 20, 2     # 64 MiB/TC physical
    else:
        vmem_budget, num_cores = 48 << 20, 1     # 128 MiB VMEM, 1 TC

    per_row = (2 * (Ed + Er) * in_isz            # dist+dir, double-buffered
               + 2 * H * edge_out_isz            # edge output block, double-buffered
               + 2 * 128 * 4                     # lane-padded (R,1) mask block
               + 6 * H * 4                       # live f32 intermediates
               + (2 * H * node_out_isz + 2 * 128 * 4) // max(M, 1))  # per-node bits
    cap_rows = max(8 * M, vmem_budget // per_row)

    cands = [tn for tn in range(8, N + 1, 8)
             if N % tn == 0 and tn * M <= cap_rows]
    if not cands:
        return 8 if N % 8 == 0 else N

    if num_cores > 1:
        good = [tn for tn in cands
                if (N // tn) % num_cores == 0 and (N // tn) >= 2 * num_cores]
        if not good:
            good = [tn for tn in cands if (N // tn) % num_cores == 0]
        if good:
            return max(good)
    return max(cands)


def input_block(edge_dist, edge_dir, neighbor_mask, params, *,
                tile_nodes=None, mxu_dtype=jnp.bfloat16,
                node_out_dtype=jnp.float32, edge_out_dtype=jnp.bfloat16,
                fuse_edge_linear=None, tpu_generation=None):
    """edge_dist: [N, M, Ed]  edge_dir: [N, M, Er]  neighbor_mask: [N, M] float.
    Returns (node_out [N, H], edge_out [N, M, H]).

    For best HBM bandwidth feed edge_dist/edge_dir already stored as bf16 by the
    producer (this wrapper never inserts an astype pass over the big inputs)."""
    N, M, Ed = edge_dist.shape
    Er = edge_dir.shape[-1]
    H = params["w_lin"].shape[1]
    assert params["w_lin"].shape[0] == Ed + Er

    gen = _tpu_generation() if tpu_generation is None else tpu_generation
    if fuse_edge_linear is None:
        fuse_edge_linear = gen >= 6          # 256-deep MXU on v6e/v7x
    gelu_dtype = mxu_dtype if gen >= 6 else jnp.float32   # bf16 VPU/EUP on v6e+

    in_isz = edge_dist.dtype.itemsize
    mxu_isz = jnp.dtype(mxu_dtype).itemsize
    e_isz = jnp.dtype(edge_out_dtype).itemsize
    n_isz = jnp.dtype(node_out_dtype).itemsize

    if tile_nodes is None:
        tile_nodes = _choose_tile_nodes(N, M, Ed, Er, H, gen=gen, in_isz=in_isz,
                                        edge_out_isz=e_isz, node_out_isz=n_isz)
    TN = tile_nodes
    assert N % TN == 0, (N, TN)
    R = TN * M

    # Row-major flattens (pure metadata, no HBM copy).
    dist_flat = edge_dist.reshape(N * M, Ed)
    dir_flat = edge_dir.reshape(N * M, Er)
    mask_f32 = neighbor_mask.astype(jnp.float32)            # (N, M), tiny
    mask_flat = mask_f32.reshape(N * M, 1)                   # lane-broadcastable
    cnt = jnp.sum(mask_f32, axis=1, keepdims=True)           # (N, 1) neighbor counts

    # Matmul weights resident in MXU dtype; w_lin stays un-split (the kernel
    # slices it when the dist/dir matmuls are kept separate on v5e).
    w_lin = params["w_lin"].astype(mxu_dtype)
    w1 = params["w1"].astype(mxu_dtype)
    w2 = params["w2"].astype(mxu_dtype)

    full = lambda i: (0, 0)
    row_blk = lambda i: (i, 0)

    # NOTE: at production H (512-1024) mark the constant weight/bias specs
    # pipeline_mode=pl.Buffered(1) to reclaim the duplicate copy from VMEM;
    # negligible at H=128 so we keep the portable default here.
    grid_spec = pltpu.PrefetchScalarGridSpec(
        num_scalar_prefetch=0,
        grid=(N // TN,),
        in_specs=[
            pl.BlockSpec((R, Ed), row_blk),
            pl.BlockSpec((R, Er), row_blk),
            pl.BlockSpec((R, 1), row_blk),     # flat mask
            pl.BlockSpec((TN, 1), row_blk),    # neighbor counts
            pl.BlockSpec((Ed + Er, H), full),  # w_lin
            pl.BlockSpec((1, H), full),        # b_lin
            pl.BlockSpec((1, H), full),        # ln1_g
            pl.BlockSpec((1, H), full),        # ln1_b
            pl.BlockSpec((H, H), full),        # w1
            pl.BlockSpec((1, H), full),        # b1
            pl.BlockSpec((H, H), full),        # w2
            pl.BlockSpec((1, H), full),        # b2
            pl.BlockSpec((1, H), full),        # ln2_g
            pl.BlockSpec((1, H), full),        # ln2_b
        ],
        out_specs=[
            pl.BlockSpec((TN, H), row_blk),
            pl.BlockSpec((R, H), row_blk),
        ],
    )

    # Scoped-VMEM limit sized to the working set, with a generation-aware cap:
    # <= 56 MiB on v7x (64 MiB physical, leave compiler headroom), up to
    # ~112 MiB on single-TC v5e/v6e (128 MiB physical).
    w_bytes = (Ed + Er + 2 * H) * H * mxu_isz + 8 * H * 4
    step_bytes = (2 * R * (Ed + Er) * in_isz     # inputs, double-buffered
                  + 2 * R * H * e_isz            # edge out, double-buffered
                  + 2 * TN * H * n_isz           # node out, double-buffered
                  + 2 * R * 128 * 4              # lane-padded mask block
                  + 2 * TN * 128 * 4             # lane-padded count block
                  + 2 * w_bytes                  # weights
                  + 6 * R * H * 4)               # in-body f32 temporaries
    vmem_cap = (56 << 20) if gen >= 7 else (112 << 20)
    vmem_limit = int(min(max(step_bytes + (4 << 20), 16 << 20), vmem_cap))

    # Advisory cost estimate so XLA schedules surrounding ops around the kernel.
    flops = 2 * N * M * (Ed + Er + 2 * H) * H
    transcendentals = N * M * H                  # tanh-GELU (LN rsqrt is noise)
    bytes_accessed = (N * M * (Ed + Er) * in_isz + N * M * 4 + N * 4
                      + w_bytes
                      + N * M * H * e_isz + N * H * n_isz)
    cost = pl.CostEstimate(flops=int(flops),
                           transcendentals=int(transcendentals),
                           bytes_accessed=int(bytes_accessed))

    kernel = _make_kernel(fuse=fuse_edge_linear, Ed=Ed, Er=Er, M=M,
                          gelu_dtype=gelu_dtype)

    node_out, edge_flat = pl.pallas_call(
        kernel,
        grid_spec=grid_spec,
        out_shape=[
            jax.ShapeDtypeStruct((N, H), node_out_dtype),
            jax.ShapeDtypeStruct((N * M, H), edge_out_dtype),
        ],
        compiler_params=pltpu.CompilerParams(
            dimension_semantics=("parallel",),
            vmem_limit_bytes=vmem_limit,
        ),
        cost_estimate=cost,
    )(
        dist_flat, dir_flat, mask_flat, cnt,
        w_lin, params["b_lin"],
        params["ln1_g"], params["ln1_b"],
        w1, params["b1"], w2, params["b2"],
        params["ln2_g"], params["ln2_b"],
    )
    return node_out, edge_flat.reshape(N, M, H)


def reference(edge_dist, edge_dir, neighbor_mask, params):
    hp = jax.lax.Precision.HIGHEST
    ef = jnp.concatenate([edge_dist, edge_dir], axis=-1)
    eh = jnp.dot(ef, params["w_lin"], precision=hp) + params["b_lin"]
    xn = _layer_norm(eh, params["ln1_g"], params["ln1_b"])
    h = jax.nn.gelu(jnp.dot(xn, params["w1"], precision=hp) + params["b1"])
    h = jnp.dot(h, params["w2"], precision=hp) + params["b2"]
    edge_output = eh + h
    num = jnp.sum(edge_output * neighbor_mask[..., None], axis=1)
    den = jnp.sum(neighbor_mask, axis=1, keepdims=True) + EPS_AGG
    node = num / den
    return (
        _layer_norm(node, params["ln2_g"], params["ln2_b"]),
        _layer_norm(edge_output, params["ln2_g"], params["ln2_b"]),
    )


if __name__ == "__main__":
    # Small but lane-dense shapes: feature/hidden dims are multiples of 128 so
    # every matmul operand and the dominant edge-output store is 128-lane dense.
    N, M = 64, 8          # nodes, max neighbors (M == sublane count)
    Ed, Er = 128, 128     # distance / direction expansion sizes
    H = 128               # global_cfg.hidden_size

    key = jax.random.PRNGKey(0)
    ks = jax.random.split(key, 10)

    # Kept f32 here so the reference is full precision; in production store
    # these activations as bf16 at the producer (the kernel consumes either).
    edge_dist = jax.random.normal(ks[0], (N, M, Ed), jnp.float32)
    edge_dir = jax.random.normal(ks[1], (N, M, Er), jnp.float32)
    neighbor_mask = (jax.random.uniform(ks[2], (N, M)) > 0.3).astype(jnp.float32)

    def lin_init(k, fan_in, shape):
        return jax.random.normal(k, shape, jnp.float32) * (1.0 / jnp.sqrt(fan_in))

    E = Ed + Er
    params = {
        "w_lin": lin_init(ks[3], E, (E, H)),
        "b_lin": lin_init(ks[4], E, (1, H)),
        "ln1_g": jnp.ones((1, H), jnp.float32),
        "ln1_b": jnp.zeros((1, H), jnp.float32),
        "w1": lin_init(ks[5], H, (H, H)),
        "b1": lin_init(ks[6], H, (1, H)),
        "w2": lin_init(ks[7], H, (H, H)),
        "b2": lin_init(ks[8], H, (1, H)),
        "ln2_g": jnp.ones((1, H), jnp.float32),
        "ln2_b": jnp.zeros((1, H), jnp.float32),
    }

    run = jax.jit(
        input_block,
        static_argnames=("tile_nodes", "mxu_dtype", "node_out_dtype",
                         "edge_out_dtype", "fuse_edge_linear", "tpu_generation"),
    )
    node_out, edge_out = run(edge_dist, edge_dir, neighbor_mask, params)
    jax.block_until_ready((node_out, edge_out))

    node_ref, edge_ref = reference(edge_dist, edge_dir, neighbor_mask, params)
    assert node_out.shape == (N, H) and edge_out.shape == (N, M, H)
    # bf16 MXU operands + bf16 edge output vs the f32 HIGHEST reference drift
    # by a few 1e-3 on these LayerNorm-normalized O(1) outputs; 5e-2 bounds it.
    assert jnp.allclose(node_out, node_ref, atol=5e-2, rtol=5e-2)
    assert jnp.allclose(edge_out.astype(jnp.float32), edge_ref, atol=5e-2, rtol=5e-2)

    print("KERNEL_OK")
</pallas_src>

<mosaic_0001>
module attributes {stable_mosaic.version = 11 : i64} {
  func.func @kernel(%arg0: i32, %arg1: memref<512x128xf32, #tpu.memory_space<vmem>>, %arg2: memref<512x128xf32, #tpu.memory_space<vmem>>, %arg3: memref<512x1xf32, #tpu.memory_space<vmem>>, %arg4: memref<64x1xf32, #tpu.memory_space<vmem>>, %arg5: memref<256x128xbf16, #tpu.memory_space<vmem>>, %arg6: memref<1x128xf32, #tpu.memory_space<vmem>>, %arg7: memref<1x128xf32, #tpu.memory_space<vmem>>, %arg8: memref<1x128xf32, #tpu.memory_space<vmem>>, %arg9: memref<128x128xbf16, #tpu.memory_space<vmem>>, %arg10: memref<1x128xf32, #tpu.memory_space<vmem>>, %arg11: memref<128x128xbf16, #tpu.memory_space<vmem>>, %arg12: memref<1x128xf32, #tpu.memory_space<vmem>>, %arg13: memref<1x128xf32, #tpu.memory_space<vmem>>, %arg14: memref<1x128xf32, #tpu.memory_space<vmem>>, %arg15: memref<64x128xf32, #tpu.memory_space<vmem>>, %arg16: memref<512x128xbf16, #tpu.memory_space<vmem>>) attributes {dimension_semantics = [#tpu.dimension_semantics<parallel>], iteration_bounds = array<i64: 1>, scalar_prefetch = 0 : i64, scratch_operands = 0 : i64, tpu.core_type = #tpu.core_type<tc>, window_params = [{transform_indices = @transform_0, window_bounds = array<i64: 512, 128>}, {transform_indices = @transform_1, window_bounds = array<i64: 512, 128>}, {transform_indices = @transform_2, window_bounds = array<i64: 512, 1>}, {transform_indices = @transform_3, window_bounds = array<i64: 64, 1>}, {pipeline_mode = #tpu.pipeline_mode<synchronous>, transform_indices = @transform_4, window_bounds = array<i64: 256, 128>}, {pipeline_mode = #tpu.pipeline_mode<synchronous>, transform_indices = @transform_5, window_bounds = array<i64: 1, 128>}, {pipeline_mode = #tpu.pipeline_mode<synchronous>, transform_indices = @transform_6, window_bounds = array<i64: 1, 128>}, {pipeline_mode = #tpu.pipeline_mode<synchronous>, transform_indices = @transform_7, window_bounds = array<i64: 1, 128>}, {pipeline_mode = #tpu.pipeline_mode<synchronous>, transform_indices = @transform_8, window_bounds = array<i64: 128, 128>}, {pipeline_mode = #tpu.pipeline_mode<synchronous>, transform_indices = @transform_9, window_bounds = array<i64: 1, 128>}, {pipeline_mode = #tpu.pipeline_mode<synchronous>, transform_indices = @transform_10, window_bounds = array<i64: 128, 128>}, {pipeline_mode = #tpu.pipeline_mode<synchronous>, transform_indices = @transform_11, window_bounds = array<i64: 1, 128>}, {pipeline_mode = #tpu.pipeline_mode<synchronous>, transform_indices = @transform_12, window_bounds = array<i64: 1, 128>}, {pipeline_mode = #tpu.pipeline_mode<synchronous>, transform_indices = @transform_13, window_bounds = array<i64: 1, 128>}, {transform_indices = @transform_14, window_bounds = array<i64: 64, 128>}, {transform_indices = @transform_15, window_bounds = array<i64: 512, 128>}]} {
    %c0 = arith.constant 0 : index
    %c0_0 = arith.constant 0 : index
    %0 = vector.load %arg1[%c0, %c0_0] : memref<512x128xf32, #tpu.memory_space<vmem>>, vector<512x128xf32>
    %1 = arith.truncf %0 : vector<512x128xf32> to vector<512x128xbf16>
    %c0_1 = arith.constant 0 : index
    %c0_2 = arith.constant 0 : index
    %2 = vector.load %arg2[%c0_1, %c0_2] : memref<512x128xf32, #tpu.memory_space<vmem>>, vector<512x128xf32>
    %3 = arith.truncf %2 : vector<512x128xf32> to vector<512x128xbf16>
    %4 = tpu.concatenate %1, %3 in 1 : vector<512x128xbf16>, vector<512x128xbf16> -> vector<512x256xbf16>
    %c0_3 = arith.constant 0 : index
    %c0_4 = arith.constant 0 : index
    %5 = vector.load %arg5[%c0_3, %c0_4] : memref<256x128xbf16, #tpu.memory_space<vmem>>, vector<256x128xbf16>
    %cst = arith.constant dense<0.000000e+00> : vector<512x128xf32>
    %6 = tpu.matmul %4, %5, %cst {dimension_numbers = #tpu.dot_dimension_numbers<[1], [0], [0], [1], [0, 0, 1, 1], [], []>} : vector<512x256xbf16>, vector<256x128xbf16>, vector<512x128xf32> -> vector<512x128xf32>
    %c0_5 = arith.constant 0 : index
    %c0_6 = arith.constant 0 : index
    %7 = vector.load %arg6[%c0_5, %c0_6] : memref<1x128xf32, #tpu.memory_space<vmem>>, vector<1x128xf32>
    %8 = vector.broadcast %7 : vector<1x128xf32> to vector<512x128xf32>
    %9 = arith.addf %6, %8 : vector<512x128xf32>
    %c0_7 = arith.constant 0 : index
    %c0_8 = arith.constant 0 : index
    %10 = vector.load %arg7[%c0_7, %c0_8] : memref<1x128xf32, #tpu.memory_space<vmem>>, vector<1x128xf32>
    %c0_9 = arith.constant 0 : index
    %c0_10 = arith.constant 0 : index
    %11 = vector.load %arg8[%c0_9, %c0_10] : memref<1x128xf32, #tpu.memory_space<vmem>>, vector<1x128xf32>
    %cst_11 = arith.constant dense<0.000000e+00> : vector<512xf32>
    %12 = vector.multi_reduction <add>, %9, %cst_11 [1] : vector<512x128xf32> to vector<512xf32>
    %13 = vector.shape_cast %12 : vector<512xf32> to vector<512x1xf32>
    %cst_12 = arith.constant 1.280000e+02 : f32
    %14 = vector.broadcast %cst_12 : f32 to vector<512x1xf32>
    %15 = arith.divf %13, %14 : vector<512x1xf32>
    %16 = vector.broadcast %15 : vector<512x1xf32> to vector<512x128xf32>
    %17 = arith.subf %9, %16 : vector<512x128xf32>
    %18 = arith.mulf %17, %17 : vector<512x128xf32>
    %cst_13 = arith.constant dense<0.000000e+00> : vector<512xf32>
    %19 = vector.multi_reduction <add>, %18, %cst_13 [1] : vector<512x128xf32> to vector<512xf32>
    %20 = vector.shape_cast %19 : vector<512xf32> to vector<512x1xf32>
    %cst_14 = arith.constant 1.280000e+02 : f32
    %21 = vector.broadcast %cst_14 : f32 to vector<512x1xf32>
    %22 = arith.divf %20, %21 : vector<512x1xf32>
    %23 = vector.broadcast %15 : vector<512x1xf32> to vector<512x128xf32>
    %24 = arith.subf %9, %23 : vector<512x128xf32>
    %cst_15 = arith.constant 9.99999974E-6 : f32
    %25 = vector.broadcast %cst_15 : f32 to vector<512x1xf32>
    %26 = arith.addf %22, %25 : vector<512x1xf32>
    %27 = math.rsqrt %26 : vector<512x1xf32>
    %28 = vector.broadcast %27 : vector<512x1xf32> to vector<512x128xf32>
    %29 = arith.mulf %24, %28 : vector<512x128xf32>
    %30 = vector.broadcast %10 : vector<1x128xf32> to vector<512x128xf32>
    %31 = arith.mulf %29, %30 : vector<512x128xf32>
    %32 = vector.broadcast %11 : vector<1x128xf32> to vector<512x128xf32>
    %33 = arith.addf %31, %32 : vector<512x128xf32>
    %34 = arith.truncf %33 : vector<512x128xf32> to vector<512x128xbf16>
    %c0_16 = arith.constant 0 : index
    %c0_17 = arith.constant 0 : index
    %35 = vector.load %arg9[%c0_16, %c0_17] : memref<128x128xbf16, #tpu.memory_space<vmem>>, vector<128x128xbf16>
    %cst_18 = arith.constant dense<0.000000e+00> : vector<512x128xf32>
    %36 = tpu.matmul %34, %35, %cst_18 {dimension_numbers = #tpu.dot_dimension_numbers<[1], [0], [0], [1], [0, 0, 1, 1], [], []>} : vector<512x128xbf16>, vector<128x128xbf16>, vector<512x128xf32> -> vector<512x128xf32>
    %c0_19 = arith.constant 0 : index
    %c0_20 = arith.constant 0 : index
    %37 = vector.load %arg10[%c0_19, %c0_20] : memref<1x128xf32, #tpu.memory_space<vmem>>, vector<1x128xf32>
    %38 = vector.broadcast %37 : vector<1x128xf32> to vector<512x128xf32>
    %39 = arith.addf %36, %38 : vector<512x128xf32>
    %40 = arith.truncf %39 : vector<512x128xf32> to vector<512x128xbf16>
    %41 = arith.mulf %40, %40 : vector<512x128xbf16>
    %42 = arith.mulf %40, %41 : vector<512x128xbf16>
    %cst_21 = arith.constant 4.467770e-02 : bf16
    %43 = vector.broadcast %cst_21 : bf16 to vector<512x128xbf16>
    %44 = arith.mulf %43, %42 : vector<512x128xbf16>
    %45 = arith.addf %40, %44 : vector<512x128xbf16>
    %cst_22 = arith.constant 7.968750e-01 : bf16
    %46 = vector.broadcast %cst_22 : bf16 to vector<512x128xbf16>
    %47 = arith.mulf %46, %45 : vector<512x128xbf16>
    %48 = math.tanh %47 : vector<512x128xbf16>
    %cst_23 = arith.constant 1.000000e+00 : bf16
    %49 = vector.broadcast %cst_23 : bf16 to vector<512x128xbf16>
    %50 = arith.addf %49, %48 : vector<512x128xbf16>
    %cst_24 = arith.constant 5.000000e-01 : bf16
    %51 = vector.broadcast %cst_24 : bf16 to vector<512x128xbf16>
    %52 = arith.mulf %51, %50 : vector<512x128xbf16>
    %53 = arith.mulf %40, %52 : vector<512x128xbf16>
    %c0_25 = arith.constant 0 : index
    %c0_26 = arith.constant 0 : index
    %54 = vector.load %arg11[%c0_25, %c0_26] : memref<128x128xbf16, #tpu.memory_space<vmem>>, vector<128x128xbf16>
    %cst_27 = arith.constant dense<0.000000e+00> : vector<512x128xf32>
    %55 = tpu.matmul %53, %54, %cst_27 {dimension_numbers = #tpu.dot_dimension_numbers<[1], [0], [0], [1], [0, 0, 1, 1], [], []>} : vector<512x128xbf16>, vector<128x128xbf16>, vector<512x128xf32> -> vector<512x128xf32>
    %c0_28 = arith.constant 0 : index
    %c0_29 = arith.constant 0 : index
    %56 = vector.load %arg12[%c0_28, %c0_29] : memref<1x128xf32, #tpu.memory_space<vmem>>, vector<1x128xf32>
    %57 = vector.broadcast %56 : vector<1x128xf32> to vector<512x128xf32>
    %58 = arith.addf %55, %57 : vector<512x128xf32>
    %59 = arith.addf %9, %58 : vector<512x128xf32>
    %c0_30 = arith.constant 0 : index
    %c0_31 = arith.constant 0 : index
    %60 = vector.load %arg3[%c0_30, %c0_31] : memref<512x1xf32, #tpu.memory_space<vmem>>, vector<512x1xf32>
    %61 = vector.broadcast %60 : vector<512x1xf32> to vector<512x128xf32>
    %62 = arith.mulf %59, %61 : vector<512x128xf32>
    %63 = vector.shape_cast %62 : vector<512x128xf32> to vector<64x8x128xf32>
    %cst_32 = arith.constant dense<0.000000e+00> : vector<64x128xf32>
    %64 = vector.multi_reduction <add>, %63, %cst_32 [1] : vector<64x8x128xf32> to vector<64x128xf32>
    %c0_33 = arith.constant 0 : index
    %c0_34 = arith.constant 0 : index
    %65 = vector.load %arg4[%c0_33, %c0_34] : memref<64x1xf32, #tpu.memory_space<vmem>>, vector<64x1xf32>
    %cst_35 = arith.constant 9.99999974E-6 : f32
    %66 = vector.broadcast %cst_35 : f32 to vector<64x1xf32>
    %67 = arith.addf %65, %66 : vector<64x1xf32>
    %68 = tpu.reciprocal %67 : vector<64x1xf32> -> vector<64x1xf32>
    %69 = vector.broadcast %68 : vector<64x1xf32> to vector<64x128xf32>
    %70 = arith.mulf %64, %69 : vector<64x128xf32>
    %c0_36 = arith.constant 0 : index
    %c0_37 = arith.constant 0 : index
    %71 = vector.load %arg13[%c0_36, %c0_37] : memref<1x128xf32, #tpu.memory_space<vmem>>, vector<1x128xf32>
    %c0_38 = arith.constant 0 : index
    %c0_39 = arith.constant 0 : index
    %72 = vector.load %arg14[%c0_38, %c0_39] : memref<1x128xf32, #tpu.memory_space<vmem>>, vector<1x128xf32>
    %cst_40 = arith.constant dense<0.000000e+00> : vector<64xf32>
    %73 = vector.multi_reduction <add>, %70, %cst_40 [1] : vector<64x128xf32> to vector<64xf32>
    %74 = vector.shape_cast %73 : vector<64xf32> to vector<64x1xf32>
    %cst_41 = arith.constant 1.280000e+02 : f32
    %75 = vector.broadcast %cst_41 : f32 to vector<64x1xf32>
    %76 = arith.divf %74, %75 : vector<64x1xf32>
    %77 = vector.broadcast %76 : vector<64x1xf32> to vector<64x128xf32>
    %78 = arith.subf %70, %77 : vector<64x128xf32>
    %79 = arith.mulf %78, %78 : vector<64x128xf32>
    %cst_42 = arith.constant dense<0.000000e+00> : vector<64xf32>
    %80 = vector.multi_reduction <add>, %79, %cst_42 [1] : vector<64x128xf32> to vector<64xf32>
    %81 = vector.shape_cast %80 : vector<64xf32> to vector<64x1xf32>
    %cst_43 = arith.constant 1.280000e+02 : f32
    %82 = vector.broadcast %cst_43 : f32 to vector<64x1xf32>
    %83 = arith.divf %81, %82 : vector<64x1xf32>
    %84 = vector.broadcast %76 : vector<64x1xf32> to vector<64x128xf32>
    %85 = arith.subf %70, %84 : vector<64x128xf32>
    %cst_44 = arith.constant 9.99999974E-6 : f32
    %86 = vector.broadcast %cst_44 : f32 to vector<64x1xf32>
    %87 = arith.addf %83, %86 : vector<64x1xf32>
    %88 = math.rsqrt %87 : vector<64x1xf32>
    %89 = vector.broadcast %88 : vector<64x1xf32> to vector<64x128xf32>
    %90 = arith.mulf %85, %89 : vector<64x128xf32>
    %91 = vector.broadcast %71 : vector<1x128xf32> to vector<64x128xf32>
    %92 = arith.mulf %90, %91 : vector<64x128xf32>
    %93 = vector.broadcast %72 : vector<1x128xf32> to vector<64x128xf32>
    %94 = arith.addf %92, %93 : vector<64x128xf32>
    %c0_45 = arith.constant 0 : index
    %c0_46 = arith.constant 0 : index
    %95 = vector.load %arg15[%c0_45, %c0_46] : memref<64x128xf32, #tpu.memory_space<vmem>>, vector<64x128xf32>
    tpu.vector_store %arg15[%c0_45, %c0_46], %94 {strides = array<i32>} : memref<64x128xf32, #tpu.memory_space<vmem>>, vector<64x128xf32>,
    %cst_47 = arith.constant dense<0.000000e+00> : vector<512xf32>
    %96 = vector.multi_reduction <add>, %59, %cst_47 [1] : vector<512x128xf32> to vector<512xf32>
    %97 = vector.shape_cast %96 : vector<512xf32> to vector<512x1xf32>
    %cst_48 = arith.constant 1.280000e+02 : f32
    %98 = vector.broadcast %cst_48 : f32 to vector<512x1xf32>
    %99 = arith.divf %97, %98 : vector<512x1xf32>
    %100 = vector.broadcast %99 : vector<512x1xf32> to vector<512x128xf32>
    %101 = arith.subf %59, %100 : vector<512x128xf32>
    %102 = arith.mulf %101, %101 : vector<512x128xf32>
    %cst_49 = arith.constant dense<0.000000e+00> : vector<512xf32>
    %103 = vector.multi_reduction <add>, %102, %cst_49 [1] : vector<512x128xf32> to vector<512xf32>
    %104 = vector.shape_cast %103 : vector<512xf32> to vector<512x1xf32>
    %cst_50 = arith.constant 1.280000e+02 : f32
    %105 = vector.broadcast %cst_50 : f32 to vector<512x1xf32>
    %106 = arith.divf %104, %105 : vector<512x1xf32>
    %107 = vector.broadcast %99 : vector<512x1xf32> to vector<512x128xf32>
    %108 = arith.subf %59, %107 : vector<512x128xf32>
    %cst_51 = arith.constant 9.99999974E-6 : f32
    %109 = vector.broadcast %cst_51 : f32 to vector<512x1xf32>
    %110 = arith.addf %106, %109 : vector<512x1xf32>
    %111 = math.rsqrt %110 : vector<512x1xf32>
    %112 = vector.broadcast %111 : vector<512x1xf32> to vector<512x128xf32>
    %113 = arith.mulf %108, %112 : vector<512x128xf32>
    %114 = vector.broadcast %71 : vector<1x128xf32> to vector<512x128xf32>
    %115 = arith.mulf %113, %114 : vector<512x128xf32>
    %116 = vector.broadcast %72 : vector<1x128xf32> to vector<512x128xf32>
    %117 = arith.addf %115, %116 : vector<512x128xf32>
    %118 = arith.truncf %117 : vector<512x128xf32> to vector<512x128xbf16>
    %c0_52 = arith.constant 0 : index
    %c0_53 = arith.constant 0 : index
    %119 = vector.load %arg16[%c0_52, %c0_53] : memref<512x128xbf16, #tpu.memory_space<vmem>>, vector<512x128xbf16>
    tpu.vector_store %arg16[%c0_52, %c0_53], %118 {strides = array<i32>} : memref<512x128xbf16, #tpu.memory_space<vmem>>, vector<512x128xbf16>,
    return
  }
  func.func @transform_0(%arg0: i32) -> (i32, i32) {
    %c0_i32 = arith.constant 0 : i32
    %c0_i32_0 = arith.constant 0 : i32
    return %arg0, %c0_i32 : i32, i32
  }
  func.func @transform_1(%arg0: i32) -> (i32, i32) {
    %c0_i32 = arith.constant 0 : i32
    %c0_i32_0 = arith.constant 0 : i32
    return %arg0, %c0_i32 : i32, i32
  }
  func.func @transform_2(%arg0: i32) -> (i32, i32) {
    %c0_i32 = arith.constant 0 : i32
    %c0_i32_0 = arith.constant 0 : i32
    return %arg0, %c0_i32 : i32, i32
  }
  func.func @transform_3(%arg0: i32) -> (i32, i32) {
    %c0_i32 = arith.constant 0 : i32
    %c0_i32_0 = arith.constant 0 : i32
    return %arg0, %c0_i32 : i32, i32
  }
  func.func @transform_4(%arg0: i32) -> (i32, i32) {
    %c0_i32 = arith.constant 0 : i32
    %c0_i32_0 = arith.constant 0 : i32
    %c0_i32_1 = arith.constant 0 : i32
    return %c0_i32, %c0_i32_0 : i32, i32
  }
  func.func @transform_5(%arg0: i32) -> (i32, i32) {
    %c0_i32 = arith.constant 0 : i32
    %c0_i32_0 = arith.constant 0 : i32
    %c0_i32_1 = arith.constant 0 : i32
    return %c0_i32, %c0_i32_0 : i32, i32
  }
  func.func @transform_6(%arg0: i32) -> (i32, i32) {
    %c0_i32 = arith.constant 0 : i32
    %c0_i32_0 = arith.constant 0 : i32
    %c0_i32_1 = arith.constant 0 : i32
    return %c0_i32, %c0_i32_0 : i32, i32
  }
  func.func @transform_7(%arg0: i32) -> (i32, i32) {
    %c0_i32 = arith.constant 0 : i32
    %c0_i32_0 = arith.constant 0 : i32
    %c0_i32_1 = arith.constant 0 : i32
    return %c0_i32, %c0_i32_0 : i32, i32
  }
  func.func @transform_8(%arg0: i32) -> (i32, i32) {
    %c0_i32 = arith.constant 0 : i32
    %c0_i32_0 = arith.constant 0 : i32
    %c0_i32_1 = arith.constant 0 : i32
    return %c0_i32, %c0_i32_0 : i32, i32
  }
  func.func @transform_9(%arg0: i32) -> (i32, i32) {
    %c0_i32 = arith.constant 0 : i32
    %c0_i32_0 = arith.constant 0 : i32
    %c0_i32_1 = arith.constant 0 : i32
    return %c0_i32, %c0_i32_0 : i32, i32
  }
  func.func @transform_10(%arg0: i32) -> (i32, i32) {
    %c0_i32 = arith.constant 0 : i32
    %c0_i32_0 = arith.constant 0 : i32
    %c0_i32_1 = arith.constant 0 : i32
    return %c0_i32, %c0_i32_0 : i32, i32
  }
  func.func @transform_11(%arg0: i32) -> (i32, i32) {
    %c0_i32 = arith.constant 0 : i32
    %c0_i32_0 = arith.constant 0 : i32
    %c0_i32_1 = arith.constant 0 : i32
    return %c0_i32, %c0_i32_0 : i32, i32
  }
  func.func @transform_12(%arg0: i32) -> (i32, i32) {
    %c0_i32 = arith.constant 0 : i32
    %c0_i32_0 = arith.constant 0 : i32
    %c0_i32_1 = arith.constant 0 : i32
    return %c0_i32, %c0_i32_0 : i32, i32
  }
  func.func @transform_13(%arg0: i32) -> (i32, i32) {
    %c0_i32 = arith.constant 0 : i32
    %c0_i32_0 = arith.constant 0 : i32
    %c0_i32_1 = arith.constant 0 : i32
    return %c0_i32, %c0_i32_0 : i32, i32
  }
  func.func @transform_14(%arg0: i32) -> (i32, i32) {
    %c0_i32 = arith.constant 0 : i32
    %c0_i32_0 = arith.constant 0 : i32
    return %arg0, %c0_i32 : i32, i32
  }
  func.func @transform_15(%arg0: i32) -> (i32, i32) {
    %c0_i32 = arith.constant 0 : i32
    %c0_i32_0 = arith.constant 0 : i32
    return %arg0, %c0_i32 : i32, i32
  }
}

</mosaic_0001>

<llo_original>
// kernel: input_block.1
$region0: #{input_block.1}
  #allocation0 [shape = 'u32[]', space=smem, size = 0x4, offset = 0x4, fixed_abs, tag = 'smem constant byte address 0x4 - core index']
  #allocation1 [shape = 'u32[144,128]{1,0:T(1,128)}', space=vmem, size = 0x12000, scoped, tag = 'internal scratch']
  %s0 = inlined_call_operand.vmem [shape: f32[512,128], index: 0, kind: input, shape index: {}]
  %s1 = inlined_call_operand.vmem [shape: f32[512,128], index: 1, kind: input, shape index: {}]
  %s2 = inlined_call_operand.vmem [shape: f32[512,1], index: 2, kind: input, shape index: {}]
  %s3 = inlined_call_operand.vmem [shape: f32[64,1], index: 3, kind: input, shape index: {}]
  %s4 = inlined_call_operand.vmem [shape: bf16[256,128], index: 4, kind: input, shape index: {}]
  %s5 = inlined_call_operand.vmem [shape: f32[1,128], index: 5, kind: input, shape index: {}]
  %s6 = inlined_call_operand.vmem [shape: f32[1,128], index: 6, kind: input, shape index: {}]
  %s7 = inlined_call_operand.vmem [shape: f32[1,128], index: 7, kind: input, shape index: {}]
  %s8 = inlined_call_operand.vmem [shape: bf16[128,128], index: 8, kind: input, shape index: {}]
  %s9 = inlined_call_operand.vmem [shape: f32[1,128], index: 9, kind: input, shape index: {}]
  %s10 = inlined_call_operand.vmem [shape: bf16[128,128], index: 10, kind: input, shape index: {}]
  %s11 = inlined_call_operand.vmem [shape: f32[1,128], index: 11, kind: input, shape index: {}]
  %s12 = inlined_call_operand.vmem [shape: f32[1,128], index: 12, kind: input, shape index: {}]
  %s13 = inlined_call_operand.vmem [shape: f32[1,128], index: 13, kind: input, shape index: {}]
  %s14 = inlined_call_operand.hbm [shape: f32[64,128], index: 14, kind: output, shape index: {0}]
  %s15 = inlined_call_operand.hbm [shape: bf16[512,128], index: 15, kind: output, shape index: {1}]
  %16 = xla_tuple %s14, %s15
  %s17 = sld [smem:[#allocation0]]
  $region74: #{input_block.1} parent=0
    _
  %s19 = ssub.s32 1, %s17
  %s20 = scalar_select 0, %s19, %s17
  $region1: #{input_block.1} parent=0
    #allocation2 [shape = 'u8[32768]{0}', space=vmem, size = 0x8000, scoped, tag = 'output window, operand 0, single buffered']
    #allocation3 [shape = 's32[1]{0}', space=sflag, size = 0x4, scoped, tag = 'scoped memory for input_block.1']
    #allocation4 [shape = 'u8[131072]{0}', space=vmem, size = 0x20000, scoped, tag = 'output window, operand 1, single buffered']
    #allocation5 [shape = 's32[1]{0}', space=sflag, size = 0x4, scoped, tag = 'scoped memory for input_block.1']
    %21 = vsyncpa [#allocation3], 0
    %22 = vsyncpa [#allocation5], 0
    // Predicated region
    $region2: #{input_block.1} parent=1 // pred_check
      _
    $region3: #{input_block.1} parent=1 // pred_check_branch
      %24 = sbr.rel (0) target = $region5
    $region4: #{input_block.1} parent=1 // pred_region
      _
    $region5: #{input_block.1} parent=1 // pred_fallthru
      _
    // Predicated region
    $region6: #{input_block.1} parent=1 // pred_check
      _
    $region7: #{input_block.1} parent=1 // pred_check_branch
      %26 = sbr.rel (0) target = $region9
    $region8: #{input_block.1} parent=1 // pred_region
      _
    $region9: #{input_block.1} parent=1 // pred_fallthru
      _
    // Predicated region
    $region10: #{input_block.1} parent=1 // pred_check
      _
    $region11: #{input_block.1} parent=1 // pred_check_branch
      %28 = sbr.rel (0) target = $region13
    $region12: #{input_block.1} parent=1 // pred_region
      _
    $region13: #{input_block.1} parent=1 // pred_fallthru
      _
    // Predicated region
    $region14: #{input_block.1} parent=1 // pred_check
      _
    $region15: #{input_block.1} parent=1 // pred_check_branch
      %30 = sbr.rel (0) target = $region17
    $region16: #{input_block.1} parent=1 // pred_region
      _
    $region17: #{input_block.1} parent=1 // pred_fallthru
      _
    // Predicated region
    $region18: #{input_block.1} parent=1 // pred_check
      _
    $region19: #{input_block.1} parent=1 // pred_check_branch
      %32 = sbr.rel (0) target = $region21
    $region20: #{input_block.1} parent=1 // pred_region
      _
    $region21: #{input_block.1} parent=1 // pred_fallthru
      _
    // Predicated region
    $region22: #{input_block.1} parent=1 // pred_check
      _
    $region23: #{input_block.1} parent=1 // pred_check_branch
      %34 = sbr.rel (0) target = $region25
    $region24: #{input_block.1} parent=1 // pred_region
      _
    $region25: #{input_block.1} parent=1 // pred_fallthru
      _
    // Predicated region
    $region26: #{input_block.1} parent=1 // pred_check
      _
    $region27: #{input_block.1} parent=1 // pred_check_branch
      %36 = sbr.rel (0) target = $region29
    $region28: #{input_block.1} parent=1 // pred_region
      _
    $region29: #{input_block.1} parent=1 // pred_fallthru
      _
    // Predicated region
    $region30: #{input_block.1} parent=1 // pred_check
      _
    $region31: #{input_block.1} parent=1 // pred_check_branch
      %38 = sbr.rel (0) target = $region33
    $region32: #{input_block.1} parent=1 // pred_region
      _
    $region33: #{input_block.1} parent=1 // pred_fallthru
      _
    // Predicated region
    $region34: #{input_block.1} parent=1 // pred_check
      _
    $region35: #{input_block.1} parent=1 // pred_check_branch
      %40 = sbr.rel (0) target = $region37
    $region36: #{input_block.1} parent=1 // pred_region
      _
    $region37: #{input_block.1} parent=1 // pred_fallthru
      _
    // Predicated region
    $region38: #{input_block.1} parent=1 // pred_check
      _
    $region39: #{input_block.1} parent=1 // pred_check_branch
      %42 = sbr.rel (0) target = $region41
    $region40: #{input_block.1} parent=1 // pred_region
      _
    $region41: #{input_block.1} parent=1 // pred_fallthru
      _
    // Predicated region
    $region42: #{input_block.1} parent=1 // pred_check
      _
    $region43: #{input_block.1} parent=1 // pred_check_branch
      %44 = sbr.rel (0) target = $region45
    $region44: #{input_block.1} parent=1 // pred_region
      _
    $region45: #{input_block.1} parent=1 // pred_fallthru
      _
    // Predicated region
    $region46: #{input_block.1} parent=1 // pred_check
      _
    $region47: #{input_block.1} parent=1 // pred_check_branch
      %46 = sbr.rel (0) target = $region49
    $region48: #{input_block.1} parent=1 // pred_region
      _
    $region49: #{input_block.1} parent=1 // pred_fallthru
      _
    // Predicated region
    $region50: #{input_block.1} parent=1 // pred_check
      _
    $region51: #{input_block.1} parent=1 // pred_check_branch
      %48 = sbr.rel (0) target = $region53
    $region52: #{input_block.1} parent=1 // pred_region
      _
    $region53: #{input_block.1} parent=1 // pred_fallthru
      _
    // Predicated region
    $region54: #{input_block.1} parent=1 // pred_check
      _
    $region55: #{input_block.1} parent=1 // pred_check_branch
      %50 = sbr.rel (0) target = $region57
    $region56: #{input_block.1} parent=1 // pred_region
      _
    $region57: #{input_block.1} parent=1 // pred_fallthru
      _
    %v56 = vld [vmem:[%s0] sm:$0xff]
    %v57 = vld [vmem:[%s0 + $0x8] sm:$0xff]
    %v58 = vld [vmem:[%s0 + $0x10] sm:$0xff]
    %v59 = vld [vmem:[%s0 + $0x18] sm:$0xff]
    %v60 = vld [vmem:[%s0 + $0x20] sm:$0xff]
    %v61 = vld [vmem:[%s0 + $0x28] sm:$0xff]
    %v62 = vld [vmem:[%s0 + $0x30] sm:$0xff]
    %v63 = vld [vmem:[%s0 + $0x38] sm:$0xff]
    %v64 = vld [vmem:[%s0 + $0x40] sm:$0xff]
    %v65 = vld [vmem:[%s0 + $0x48] sm:$0xff]
    %v66 = vld [vmem:[%s0 + $0x50] sm:$0xff]
    %v67 = vld [vmem:[%s0 + $0x58] sm:$0xff]
    %v68 = vld [vmem:[%s0 + $0x60] sm:$0xff]
    %v69 = vld [vmem:[%s0 + $0x68] sm:$0xff]
    %v70 = vld [vmem:[%s0 + $0x70] sm:$0xff]
    %v71 = vld [vmem:[%s0 + $0x78] sm:$0xff]
    %v72 = vld [vmem:[%s0 + $0x80] sm:$0xff]
    %v73 = vld [vmem:[%s0 + $0x88] sm:$0xff]
    %v74 = vld [vmem:[%s0 + $0x90] sm:$0xff]
    %v75 = vld [vmem:[%s0 + $0x98] sm:$0xff]
    %v76 = vld [vmem:[%s0 + $0xa0] sm:$0xff]
    %v77 = vld [vmem:[%s0 + $0xa8] sm:$0xff]
    %v78 = vld [vmem:[%s0 + $0xb0] sm:$0xff]
    %v79 = vld [vmem:[%s0 + $0xb8] sm:$0xff]
    %v80 = vld [vmem:[%s0 + $0xc0] sm:$0xff]
    %v81 = vld [vmem:[%s0 + $0xc8] sm:$0xff]
    %v82 = vld [vmem:[%s0 + $0xd0] sm:$0xff]
    %v83 = vld [vmem:[%s0 + $0xd8] sm:$0xff]
    %v84 = vld [vmem:[%s0 + $0xe0] sm:$0xff]
    %v85 = vld [vmem:[%s0 + $0xe8] sm:$0xff]
    %v86 = vld [vmem:[%s0 + $0xf0] sm:$0xff]
    %v87 = vld [vmem:[%s0 + $0xf8] sm:$0xff]
    %v88 = vld [vmem:[%s0 + $0x100] sm:$0xff]
    %v89 = vld [vmem:[%s0 + $0x108] sm:$0xff]
    %v90 = vld [vmem:[%s0 + $0x110] sm:$0xff]
    %v91 = vld [vmem:[%s0 + $0x118] sm:$0xff]
    %v92 = vld [vmem:[%s0 + $0x120] sm:$0xff]
    %v93 = vld [vmem:[%s0 + $0x128] sm:$0xff]
    %v94 = vld [vmem:[%s0 + $0x130] sm:$0xff]
    %v95 = vld [vmem:[%s0 + $0x138] sm:$0xff]
    %v96 = vld [vmem:[%s0 + $0x140] sm:$0xff]
    %v97 = vld [vmem:[%s0 + $0x148] sm:$0xff]
    %v98 = vld [vmem:[%s0 + $0x150] sm:$0xff]
    %v99 = vld [vmem:[%s0 + $0x158] sm:$0xff]
    %v100 = vld [vmem:[%s0 + $0x160] sm:$0xff]
    %v101 = vld [vmem:[%s0 + $0x168] sm:$0xff]
    %v102 = vld [vmem:[%s0 + $0x170] sm:$0xff]
    %v103 = vld [vmem:[%s0 + $0x178] sm:$0xff]
    %v104 = vld [vmem:[%s0 + $0x180] sm:$0xff]
    %v105 = vld [vmem:[%s0 + $0x188] sm:$0xff]
    %v106 = vld [vmem:[%s0 + $0x190] sm:$0xff]
    %v107 = vld [vmem:[%s0 + $0x198] sm:$0xff]
    %v108 = vld [vmem:[%s0 + $0x1a0] sm:$0xff]
    %v109 = vld [vmem:[%s0 + $0x1a8] sm:$0xff]
    %v110 = vld [vmem:[%s0 + $0x1b0] sm:$0xff]
    %v111 = vld [vmem:[%s0 + $0x1b8] sm:$0xff]
    %v112 = vld [vmem:[%s0 + $0x1c0] sm:$0xff]
    %v113 = vld [vmem:[%s0 + $0x1c8] sm:$0xff]
    %v114 = vld [vmem:[%s0 + $0x1d0] sm:$0xff]
    %v115 = vld [vmem:[%s0 + $0x1d8] sm:$0xff]
    %v116 = vld [vmem:[%s0 + $0x1e0] sm:$0xff]
    %v117 = vld [vmem:[%s0 + $0x1e8] sm:$0xff]
    %v118 = vld [vmem:[%s0 + $0x1f0] sm:$0xff]
    %v119 = vld [vmem:[%s0 + $0x1f8] sm:$0xff]
    %v120 = vpack.c.bf16 %v57, %v56
    %v121 = vpack.c.bf16 %v59, %v58
    %v122 = vpack.c.bf16 %v61, %v60
    %v123 = vpack.c.bf16 %v63, %v62
    %v124 = vpack.c.bf16 %v65, %v64
    %v125 = vpack.c.bf16 %v67, %v66
    %v126 = vpack.c.bf16 %v69, %v68
    %v127 = vpack.c.bf16 %v71, %v70
    %v128 = vpack.c.bf16 %v73, %v72
    %v129 = vpack.c.bf16 %v75, %v74
    %v130 = vpack.c.bf16 %v77, %v76
    %v131 = vpack.c.bf16 %v79, %v78
    %v132 = vpack.c.bf16 %v81, %v80
    %v133 = vpack.c.bf16 %v83, %v82
    %v134 = vpack.c.bf16 %v85, %v84
    %v135 = vpack.c.bf16 %v87, %v86
    %v136 = vpack.c.bf16 %v89, %v88
    %v137 = vpack.c.bf16 %v91, %v90
    %v138 = vpack.c.bf16 %v93, %v92
    %v139 = vpack.c.bf16 %v95, %v94
    %v140 = vpack.c.bf16 %v97, %v96
    %v141 = vpack.c.bf16 %v99, %v98
    %v142 = vpack.c.bf16 %v101, %v100
    %v143 = vpack.c.bf16 %v103, %v102
    %v144 = vpack.c.bf16 %v105, %v104
    %v145 = vpack.c.bf16 %v107, %v106
    %v146 = vpack.c.bf16 %v109, %v108
    %v147 = vpack.c.bf16 %v111, %v110
    %v148 = vpack.c.bf16 %v113, %v112
    %v149 = vpack.c.bf16 %v115, %v114
    %v150 = vpack.c.bf16 %v117, %v116
    %v151 = vpack.c.bf16 %v119, %v118
    %v152 = vld [vmem:[%s1] sm:$0xff]
    %v153 = vld [vmem:[%s1 + $0x8] sm:$0xff]
    %v154 = vld [vmem:[%s1 + $0x10] sm:$0xff]
    %v155 = vld [vmem:[%s1 + $0x18] sm:$0xff]
    %v156 = vld [vmem:[%s1 + $0x20] sm:$0xff]
    %v157 = vld [vmem:[%s1 + $0x28] sm:$0xff]
    %v158 = vld [vmem:[%s1 + $0x30] sm:$0xff]
    %v159 = vld [vmem:[%s1 + $0x38] sm:$0xff]
    %v160 = vld [vmem:[%s1 + $0x40] sm:$0xff]
    %v161 = vld [vmem:[%s1 + $0x48] sm:$0xff]
    %v162 = vld [vmem:[%s1 + $0x50] sm:$0xff]
    %v163 = vld [vmem:[%s1 + $0x58] sm:$0xff]
    %v164 = vld [vmem:[%s1 + $0x60] sm:$0xff]
    %v165 = vld [vmem:[%s1 + $0x68] sm:$0xff]
    %v166 = vld [vmem:[%s1 + $0x70] sm:$0xff]
    %v167 = vld [vmem:[%s1 + $0x78] sm:$0xff]
    %v168 = vld [vmem:[%s1 + $0x80] sm:$0xff]
    %v169 = vld [vmem:[%s1 + $0x88] sm:$0xff]
    %v170 = vld [vmem:[%s1 + $0x90] sm:$0xff]
    %v171 = vld [vmem:[%s1 + $0x98] sm:$0xff]
    %v172 = vld [vmem:[%s1 + $0xa0] sm:$0xff]
    %v173 = vld [vmem:[%s1 + $0xa8] sm:$0xff]
    %v174 = vld [vmem:[%s1 + $0xb0] sm:$0xff]
    %v175 = vld [vmem:[%s1 + $0xb8] sm:$0xff]
    %v176 = vld [vmem:[%s1 + $0xc0] sm:$0xff]
    %v177 = vld [vmem:[%s1 + $0xc8] sm:$0xff]
    %v178 = vld [vmem:[%s1 + $0xd0] sm:$0xff]
    %v179 = vld [vmem:[%s1 + $0xd8] sm:$0xff]
    %v180 = vld [vmem:[%s1 + $0xe0] sm:$0xff]
    %v181 = vld [vmem:[%s1 + $0xe8] sm:$0xff]
    %v182 = vld [vmem:[%s1 + $0xf0] sm:$0xff]
    %v183 = vld [vmem:[%s1 + $0xf8] sm:$0xff]
    %v184 = vld [vmem:[%s1 + $0x100] sm:$0xff]
    %v185 = vld [vmem:[%s1 + $0x108] sm:$0xff]
    %v186 = vld [vmem:[%s1 + $0x110] sm:$0xff]
    %v187 = vld [vmem:[%s1 + $0x118] sm:$0xff]
    %v188 = vld [vmem:[%s1 + $0x120] sm:$0xff]
    %v189 = vld [vmem:[%s1 + $0x128] sm:$0xff]
    %v190 = vld [vmem:[%s1 + $0x130] sm:$0xff]
    %v191 = vld [vmem:[%s1 + $0x138] sm:$0xff]
    %v192 = vld [vmem:[%s1 + $0x140] sm:$0xff]
    %v193 = vld [vmem:[%s1 + $0x148] sm:$0xff]
    %v194 = vld [vmem:[%s1 + $0x150] sm:$0xff]
    %v195 = vld [vmem:[%s1 + $0x158] sm:$0xff]
    %v196 = vld [vmem:[%s1 + $0x160] sm:$0xff]
    %v197 = vld [vmem:[%s1 + $0x168] sm:$0xff]
    %v198 = vld [vmem:[%s1 + $0x170] sm:$0xff]
    %v199 = vld [vmem:[%s1 + $0x178] sm:$0xff]
    %v200 = vld [vmem:[%s1 + $0x180] sm:$0xff]
    %v201 = vld [vmem:[%s1 + $0x188] sm:$0xff]
    %v202 = vld [vmem:[%s1 + $0x190] sm:$0xff]
    %v203 = vld [vmem:[%s1 + $0x198] sm:$0xff]
    %v204 = vld [vmem:[%s1 + $0x1a0] sm:$0xff]
    %v205 = vld [vmem:[%s1 + $0x1a8] sm:$0xff]
    %v206 = vld [vmem:[%s1 + $0x1b0] sm:$0xff]
    %v207 = vld [vmem:[%s1 + $0x1b8] sm:$0xff]
    %v208 = vld [vmem:[%s1 + $0x1c0] sm:$0xff]
    %v209 = vld [vmem:[%s1 + $0x1c8] sm:$0xff]
    %v210 = vld [vmem:[%s1 + $0x1d0] sm:$0xff]
    %v211 = vld [vmem:[%s1 + $0x1d8] sm:$0xff]
    %v212 = vld [vmem:[%s1 + $0x1e0] sm:$0xff]
    %v213 = vld [vmem:[%s1 + $0x1e8] sm:$0xff]
    %v214 = vld [vmem:[%s1 + $0x1f0] sm:$0xff]
    %v215 = vld [vmem:[%s1 + $0x1f8] sm:$0xff]
    %v216 = vpack.c.bf16 %v153, %v152
    %v217 = vpack.c.bf16 %v155, %v154
    %v218 = vpack.c.bf16 %v157, %v156
    %v219 = vpack.c.bf16 %v159, %v158
    %v220 = vpack.c.bf16 %v161, %v160
    %v221 = vpack.c.bf16 %v163, %v162
    %v222 = vpack.c.bf16 %v165, %v164
    %v223 = vpack.c.bf16 %v167, %v166
    %v224 = vpack.c.bf16 %v169, %v168
    %v225 = vpack.c.bf16 %v171, %v170
    %v226 = vpack.c.bf16 %v173, %v172
    %v227 = vpack.c.bf16 %v175, %v174
    %v228 = vpack.c.bf16 %v177, %v176
    %v229 = vpack.c.bf16 %v179, %v178
    %v230 = vpack.c.bf16 %v181, %v180
    %v231 = vpack.c.bf16 %v183, %v182
    %v232 = vpack.c.bf16 %v185, %v184
    %v233 = vpack.c.bf16 %v187, %v186
    %v234 = vpack.c.bf16 %v189, %v188
    %v235 = vpack.c.bf16 %v191, %v190
    %v236 = vpack.c.bf16 %v193, %v192
    %v237 = vpack.c.bf16 %v195, %v194
    %v238 = vpack.c.bf16 %v197, %v196
    %v239 = vpack.c.bf16 %v199, %v198
    %v240 = vpack.c.bf16 %v201, %v200
    %v241 = vpack.c.bf16 %v203, %v202
    %v242 = vpack.c.bf16 %v205, %v204
    %v243 = vpack.c.bf16 %v207, %v206
    %v244 = vpack.c.bf16 %v209, %v208
    %v245 = vpack.c.bf16 %v211, %v210
    %v246 = vpack.c.bf16 %v213, %v212
    %v247 = vpack.c.bf16 %v215, %v214
    %v248 = vld [vmem:[%s4] sm:$0xf]
    %v249 = vld [vmem:[%s4 + $0x4] sm:$0xf]
    %v250 = vld [vmem:[%s4 + $0x8] sm:$0xf]
    %v251 = vld [vmem:[%s4 + $0xc] sm:$0xf]
    %v252 = vld [vmem:[%s4 + $0x10] sm:$0xf]
    %v253 = vld [vmem:[%s4 + $0x14] sm:$0xf]
    %v254 = vld [vmem:[%s4 + $0x18] sm:$0xf]
    %v255 = vld [vmem:[%s4 + $0x1c] sm:$0xf]
    %v256 = vld [vmem:[%s4 + $0x20] sm:$0xf]
    %v257 = vld [vmem:[%s4 + $0x24] sm:$0xf]
    %v258 = vld [vmem:[%s4 + $0x28] sm:$0xf]
    %v259 = vld [vmem:[%s4 + $0x2c] sm:$0xf]
    %v260 = vld [vmem:[%s4 + $0x30] sm:$0xf]
    %v261 = vld [vmem:[%s4 + $0x34] sm:$0xf]
    %v262 = vld [vmem:[%s4 + $0x38] sm:$0xf]
    %v263 = vld [vmem:[%s4 + $0x3c] sm:$0xf]
    %v264 = vld [vmem:[%s4 + $0x40] sm:$0xf]
    %v265 = vld [vmem:[%s4 + $0x44] sm:$0xf]
    %v266 = vld [vmem:[%s4 + $0x48] sm:$0xf]
    %v267 = vld [vmem:[%s4 + $0x4c] sm:$0xf]
    %v268 = vld [vmem:[%s4 + $0x50] sm:$0xf]
    %v269 = vld [vmem:[%s4 + $0x54] sm:$0xf]
    %v270 = vld [vmem:[%s4 + $0x58] sm:$0xf]
    %v271 = vld [vmem:[%s4 + $0x5c] sm:$0xf]
    %v272 = vld [vmem:[%s4 + $0x60] sm:$0xf]
    %v273 = vld [vmem:[%s4 + $0x64] sm:$0xf]
    %v274 = vld [vmem:[%s4 + $0x68] sm:$0xf]
    %v275 = vld [vmem:[%s4 + $0x6c] sm:$0xf]
    %v276 = vld [vmem:[%s4 + $0x70] sm:$0xf]
    %v277 = vld [vmem:[%s4 + $0x74] sm:$0xf]
    %v278 = vld [vmem:[%s4 + $0x78] sm:$0xf]
    %v279 = vld [vmem:[%s4 + $0x7c] sm:$0xf]
    %v280 = vld [vmem:[%s5] sm:$0x1]
    %v282 = vlaneseq
    %v283 = vshrl.u32 %v282, 7
    %v284 = vsub.s32 0, %v283
    %v285 = vrot.slane %v280, %v284
    %v319 = vunpack.c.l.b16 %v248
    %v320 = vunpack.c.l.b16 %v249
    %v321 = vunpack.c.l.b16 %v250
    %v322 = vunpack.c.l.b16 %v251
    %v323 = vunpack.c.l.b16 %v252
    %v324 = vunpack.c.l.b16 %v253
    %v325 = vunpack.c.l.b16 %v254
    %v326 = vunpack.c.l.b16 %v255
    %v327 = vunpack.c.l.b16 %v256
    %v328 = vunpack.c.l.b16 %v257
    %v329 = vunpack.c.l.b16 %v258
    %v330 = vunpack.c.l.b16 %v259
    %v331 = vunpack.c.l.b16 %v260
    %v332 = vunpack.c.l.b16 %v261
    %v333 = vunpack.c.l.b16 %v262
    %v334 = vunpack.c.l.b16 %v263
    %v335 = vunpack.c.l.b16 %v264
    %v336 = vunpack.c.l.b16 %v265
    %v337 = vunpack.c.l.b16 %v266
    %v338 = vunpack.c.l.b16 %v267
    %v339 = vunpack.c.l.b16 %v268
    %v340 = vunpack.c.l.b16 %v269
    %v341 = vunpack.c.l.b16 %v270
    %v342 = vunpack.c.l.b16 %v271
    %v343 = vunpack.c.l.b16 %v272
    %v344 = vunpack.c.l.b16 %v273
    %v345 = vunpack.c.l.b16 %v274
    %v346 = vunpack.c.l.b16 %v275
    %v347 = vunpack.c.l.b16 %v276
    %v348 = vunpack.c.l.b16 %v277
    %v349 = vunpack.c.l.b16 %v278
    %v350 = vunpack.c.l.b16 %v279
    %v351 = vpack.c.b16 %v320, %v319
    %v352 = vpack.c.b16 %v322, %v321
    %v353 = vpack.c.b16 %v324, %v323
    %v354 = vpack.c.b16 %v326, %v325
    %v355 = vpack.c.b16 %v328, %v327
    %v356 = vpack.c.b16 %v330, %v329
    %v357 = vpack.c.b16 %v332, %v331
    %v358 = vpack.c.b16 %v334, %v333
    %v359 = vpack.c.b16 %v336, %v335
    %v360 = vpack.c.b16 %v338, %v337
    %v361 = vpack.c.b16 %v340, %v339
    %v362 = vpack.c.b16 %v342, %v341
    %v363 = vpack.c.b16 %v344, %v343
    %v364 = vpack.c.b16 %v346, %v345
    %v365 = vpack.c.b16 %v348, %v347
    %v366 = vpack.c.b16 %v350, %v349
    %383 = vmatprep.subr.bf16.mxu0 0
    %384 = vmatpush1.bf16.msra.mxu0 %v358
    %385 = vmatprep.subr.bf16.mxu0 0
    %386 = vmatpush1.bf16.msra.mxu0 %v357
    %387 = vmatprep.subr.bf16.mxu0 0
    %388 = vmatpush1.bf16.msra.mxu0 %v356
    %389 = vmatprep.subr.bf16.mxu0 0
    %390 = vmatpush1.bf16.msra.mxu0 %v355
    %391 = vmatprep.subr.bf16.mxu0 0
    %392 = vmatpush1.bf16.msra.mxu0 %v354
    %393 = vmatprep.subr.bf16.mxu0 0
    %394 = vmatpush1.bf16.msra.mxu0 %v353
    %395 = vmatprep.subr.bf16.mxu0 0
    %396 = vmatpush1.bf16.msra.mxu0 %v352
    %397 = vmatprep.subr.bf16.mxu0 0
    %398 = vmatpush1.bf16.msra.mxu0 %v351
    %399 = vmatprep.subr.bf16.mxu0 0
    %400 = vmatpush2.bf16.msra.mxu0 %v366
    %401 = vmatprep.subr.bf16.mxu0 0
    %402 = vmatpush2.bf16.msra.mxu0 %v365
    %403 = vmatprep.subr.bf16.mxu0 0
    %404 = vmatpush2.bf16.msra.mxu0 %v364
    %405 = vmatprep.subr.bf16.mxu0 0
    %406 = vmatpush2.bf16.msra.mxu0 %v363
    %407 = vmatprep.subr.bf16.mxu0 0
    %408 = vmatpush2.bf16.msra.mxu0 %v362
    %409 = vmatprep.subr.bf16.mxu0 0
    %410 = vmatpush2.bf16.msra.mxu0 %v361
    %411 = vmatprep.subr.bf16.mxu0 0
    %412 = vmatpush2.bf16.msra.mxu0 %v360
    %413 = vmatprep.subr.bf16.mxu0 0
    %414 = vmatpush2.bf16.msra.mxu0 %v359
    %415 = vmatprep.mubr.bf16.mxu0 %v216
    %416 = vmatmul.mubr.bf16.gmra.mxu0 %v120
    %v417 = vpop.f32.mrf.mxu0
    %v418 = vadd.f32 %v285, %v417
    %v419 = vpop.f32.mrf.mxu0
    %v420 = vpop.f32.mrf.mxu0
    %v421 = vadd.f32 %v285, %v420
    %v422 = vpop.f32.mrf.mxu0
    %423 = vmatprep.mubr.bf16.mxu0 %v217
    %424 = vmatmul.mubr.bf16.gmra.mxu0 %v121
    %v425 = vpop.f32.mrf.mxu0
    %v426 = vadd.f32 %v285, %v425
    %v427 = vpop.f32.mrf.mxu0
    %v428 = vpop.f32.mrf.mxu0
    %v429 = vadd.f32 %v285, %v428
    %v430 = vpop.f32.mrf.mxu0
    %431 = vmatprep.mubr.bf16.mxu0 %v218
    %432 = vmatmul.mubr.bf16.gmra.mxu0 %v122
    %v433 = vpop.f32.mrf.mxu0
    %v434 = vadd.f32 %v285, %v433
    %v435 = vpop.f32.mrf.mxu0
    %v436 = vpop.f32.mrf.mxu0
    %v437 = vadd.f32 %v285, %v436
    %v438 = vpop.f32.mrf.mxu0
    %439 = vmatprep.mubr.bf16.mxu0 %v219
    %440 = vmatmul.mubr.bf16.gmra.mxu0 %v123
    %v441 = vpop.f32.mrf.mxu0
    %v442 = vadd.f32 %v285, %v441
    %v443 = vpop.f32.mrf.mxu0
    %v444 = vpop.f32.mrf.mxu0
    %v445 = vadd.f32 %v285, %v444
    %v446 = vpop.f32.mrf.mxu0
    %447 = vmatprep.mubr.bf16.mxu0 %v220
    %448 = vmatmul.mubr.bf16.gmra.mxu0 %v124
    %v449 = vpop.f32.mrf.mxu0
    %v450 = vadd.f32 %v285, %v449
    %v451 = vpop.f32.mrf.mxu0
    %v452 = vpop.f32.mrf.mxu0
    %v453 = vadd.f32 %v285, %v452
    %v454 = vpop.f32.mrf.mxu0
    %455 = vmatprep.mubr.bf16.mxu0 %v221
    %456 = vmatmul.mubr.bf16.gmra.mxu0 %v125
    %v457 = vpop.f32.mrf.mxu0
    %v458 = vadd.f32 %v285, %v457
    %v459 = vpop.f32.mrf.mxu0
    %v460 = vpop.f32.mrf.mxu0
    %v461 = vadd.f32 %v285, %v460
    %v462 = vpop.f32.mrf.mxu0
    %463 = vmatprep.mubr.bf16.mxu0 %v222
    %464 = vmatmul.mubr.bf16.gmra.mxu0 %v126
    %v465 = vpop.f32.mrf.mxu0
    %v466 = vadd.f32 %v285, %v465
    %v467 = vpop.f32.mrf.mxu0
    %v468 = vpop.f32.mrf.mxu0
    %v469 = vadd.f32 %v285, %v468
    %v470 = vpop.f32.mrf.mxu0
    %471 = vmatprep.mubr.bf16.mxu0 %v223
    %472 = vmatmul.mubr.bf16.gmra.mxu0 %v127
    %v473 = vpop.f32.mrf.mxu0
    %v474 = vadd.f32 %v285, %v473
    %v475 = vpop.f32.mrf.mxu0
    %v476 = vpop.f32.mrf.mxu0
    %v477 = vadd.f32 %v285, %v476
    %v478 = vpop.f32.mrf.mxu0
    %479 = vmatprep.mubr.bf16.mxu0 %v224
    %480 = vmatmul.mubr.bf16.gmra.mxu0 %v128
    %v481 = vpop.f32.mrf.mxu0
    %v482 = vadd.f32 %v285, %v481
    %v483 = vpop.f32.mrf.mxu0
    %v484 = vpop.f32.mrf.mxu0
    %v485 = vadd.f32 %v285, %v484
    %v486 = vpop.f32.mrf.mxu0
    %487 = vmatprep.mubr.bf16.mxu0 %v225
    %488 = vmatmul.mubr.bf16.gmra.mxu0 %v129
    %v489 = vpop.f32.mrf.mxu0
    %v490 = vadd.f32 %v285, %v489
    %v491 = vpop.f32.mrf.mxu0
    %v492 = vpop.f32.mrf.mxu0
    %v493 = vadd.f32 %v285, %v492
    %v494 = vpop.f32.mrf.mxu0
    %495 = vmatprep.mubr.bf16.mxu0 %v226
    %496 = vmatmul.mubr.bf16.gmra.mxu0 %v130
    %v497 = vpop.f32.mrf.mxu0
    %v498 = vadd.f32 %v285, %v497
    %v499 = vpop.f32.mrf.mxu0
    %v500 = vpop.f32.mrf.mxu0
    %v501 = vadd.f32 %v285, %v500
    %v502 = vpop.f32.mrf.mxu0
    %503 = vmatprep.mubr.bf16.mxu0 %v227
    %504 = vmatmul.mubr.bf16.gmra.mxu0 %v131
    %v505 = vpop.f32.mrf.mxu0
    %v506 = vadd.f32 %v285, %v505
    %v507 = vpop.f32.mrf.mxu0
    %v508 = vpop.f32.mrf.mxu0
    %v509 = vadd.f32 %v285, %v508
    %v510 = vpop.f32.mrf.mxu0
    %511 = vmatprep.mubr.bf16.mxu0 %v228
    %512 = vmatmul.mubr.bf16.gmra.mxu0 %v132
    %v513 = vpop.f32.mrf.mxu0
    %v514 = vadd.f32 %v285, %v513
    %v515 = vpop.f32.mrf.mxu0
    %v516 = vpop.f32.mrf.mxu0
    %v517 = vadd.f32 %v285, %v516
    %v518 = vpop.f32.mrf.mxu0
    %519 = vmatprep.mubr.bf16.mxu0 %v229
    %520 = vmatmul.mubr.bf16.gmra.mxu0 %v133
    %v521 = vpop.f32.mrf.mxu0
    %v522 = vadd.f32 %v285, %v521
    %v523 = vpop.f32.mrf.mxu0
    %v524 = vpop.f32.mrf.mxu0
    %v525 = vadd.f32 %v285, %v524
    %v526 = vpop.f32.mrf.mxu0
    %527 = vmatprep.mubr.bf16.mxu0 %v230
    %528 = vmatmul.mubr.bf16.gmra.mxu0 %v134
    %v529 = vpop.f32.mrf.mxu0
    %v530 = vadd.f32 %v285, %v529
    %v531 = vpop.f32.mrf.mxu0
    %v532 = vpop.f32.mrf.mxu0
    %v533 = vadd.f32 %v285, %v532
    %v534 = vpop.f32.mrf.mxu0
    %535 = vmatprep.mubr.bf16.mxu0 %v231
    %536 = vmatmul.mubr.bf16.gmra.mxu0 %v135
    %v537 = vpop.f32.mrf.mxu0
    %v538 = vadd.f32 %v285, %v537
    %v539 = vpop.f32.mrf.mxu0
    %v540 = vpop.f32.mrf.mxu0
    %v541 = vadd.f32 %v285, %v540
    %v542 = vpop.f32.mrf.mxu0
    %543 = vmatprep.mubr.bf16.mxu0 %v232
    %544 = vmatmul.mubr.bf16.gmra.mxu0 %v136
    %v545 = vpop.f32.mrf.mxu0
    %v546 = vadd.f32 %v285, %v545
    %v547 = vpop.f32.mrf.mxu0
    %v548 = vpop.f32.mrf.mxu0
    %v549 = vadd.f32 %v285, %v548
    %v550 = vpop.f32.mrf.mxu0
    %551 = vmatprep.mubr.bf16.mxu0 %v233
    %552 = vmatmul.mubr.bf16.gmra.mxu0 %v137
    %v553 = vpop.f32.mrf.mxu0
    %v554 = vadd.f32 %v285, %v553
    %v555 = vpop.f32.mrf.mxu0
    %v556 = vpop.f32.mrf.mxu0
    %v557 = vadd.f32 %v285, %v556
    %v558 = vpop.f32.mrf.mxu0
    %559 = vmatprep.mubr.bf16.mxu0 %v234
    %560 = vmatmul.mubr.bf16.gmra.mxu0 %v138
    %v561 = vpop.f32.mrf.mxu0
    %v562 = vadd.f32 %v285, %v561
    %v563 = vpop.f32.mrf.mxu0
    %v564 = vpop.f32.mrf.mxu0
    %v565 = vadd.f32 %v285, %v564
    %v566 = vpop.f32.mrf.mxu0
    %567 = vmatprep.mubr.bf16.mxu0 %v235
    %568 = vmatmul.mubr.bf16.gmra.mxu0 %v139
    %v569 = vpop.f32.mrf.mxu0
    %v570 = vadd.f32 %v285, %v569
    %v571 = vpop.f32.mrf.mxu0
    %v572 = vpop.f32.mrf.mxu0
    %v573 = vadd.f32 %v285, %v572
    %v574 = vpop.f32.mrf.mxu0
    %575 = vmatprep.mubr.bf16.mxu0 %v236
    %576 = vmatmul.mubr.bf16.gmra.mxu0 %v140
    %v577 = vpop.f32.mrf.mxu0
    %v578 = vadd.f32 %v285, %v577
    %v579 = vpop.f32.mrf.mxu0
    %v580 = vpop.f32.mrf.mxu0
    %v581 = vadd.f32 %v285, %v580
    %v582 = vpop.f32.mrf.mxu0
    %583 = vmatprep.mubr.bf16.mxu0 %v237
    %584 = vmatmul.mubr.bf16.gmra.mxu0 %v141
    %v585 = vpop.f32.mrf.mxu0
    %v586 = vadd.f32 %v285, %v585
    %v587 = vpop.f32.mrf.mxu0
    %v588 = vpop.f32.mrf.mxu0
    %v589 = vadd.f32 %v285, %v588
    %v590 = vpop.f32.mrf.mxu0
    %591 = vmatprep.mubr.bf16.mxu0 %v238
    %592 = vmatmul.mubr.bf16.gmra.mxu0 %v142
    %v593 = vpop.f32.mrf.mxu0
    %v594 = vadd.f32 %v285, %v593
    %v595 = vpop.f32.mrf.mxu0
    %v596 = vpop.f32.mrf.mxu0
    %v597 = vadd.f32 %v285, %v596
    %v598 = vpop.f32.mrf.mxu0
    %599 = vmatprep.mubr.bf16.mxu0 %v239
    %600 = vmatmul.mubr.bf16.gmra.mxu0 %v143
    %v601 = vpop.f32.mrf.mxu0
    %v602 = vadd.f32 %v285, %v601
    %v603 = vpop.f32.mrf.mxu0
    %v604 = vpop.f32.mrf.mxu0
    %v605 = vadd.f32 %v285, %v604
    %v606 = vpop.f32.mrf.mxu0
    %607 = vmatprep.mubr.bf16.mxu0 %v240
    %608 = vmatmul.mubr.bf16.gmra.mxu0 %v144
    %v609 = vpop.f32.mrf.mxu0
    %v610 = vadd.f32 %v285, %v609
    %v611 = vpop.f32.mrf.mxu0
    %v612 = vpop.f32.mrf.mxu0
    %v613 = vadd.f32 %v285, %v612
    %v614 = vpop.f32.mrf.mxu0
    %615 = vmatprep.mubr.bf16.mxu0 %v241
    %616 = vmatmul.mubr.bf16.gmra.mxu0 %v145
    %v617 = vpop.f32.mrf.mxu0
    %v618 = vadd.f32 %v285, %v617
    %v619 = vpop.f32.mrf.mxu0
    %v620 = vpop.f32.mrf.mxu0
    %v621 = vadd.f32 %v285, %v620
    %v622 = vpop.f32.mrf.mxu0
    %623 = vmatprep.mubr.bf16.mxu0 %v242
    %624 = vmatmul.mubr.bf16.gmra.mxu0 %v146
    %v625 = vpop.f32.mrf.mxu0
    %v626 = vadd.f32 %v285, %v625
    %v627 = vpop.f32.mrf.mxu0
    %v628 = vpop.f32.mrf.mxu0
    %v629 = vadd.f32 %v285, %v628
    %v630 = vpop.f32.mrf.mxu0
    %631 = vmatprep.mubr.bf16.mxu0 %v243
    %632 = vmatmul.mubr.bf16.gmra.mxu0 %v147
    %v633 = vpop.f32.mrf.mxu0
    %v634 = vadd.f32 %v285, %v633
    %v635 = vpop.f32.mrf.mxu0
    %v636 = vpop.f32.mrf.mxu0
    %v637 = vadd.f32 %v285, %v636
    %v638 = vpop.f32.mrf.mxu0
    %639 = vmatprep.mubr.bf16.mxu0 %v244
    %640 = vmatmul.mubr.bf16.gmra.mxu0 %v148
    %v641 = vpop.f32.mrf.mxu0
    %v642 = vadd.f32 %v285, %v641
    %v643 = vpop.f32.mrf.mxu0
    %v644 = vpop.f32.mrf.mxu0
    %v645 = vadd.f32 %v285, %v644
    %v646 = vpop.f32.mrf.mxu0
    %647 = vmatprep.mubr.bf16.mxu0 %v245
    %648 = vmatmul.mubr.bf16.gmra.mxu0 %v149
    %v649 = vpop.f32.mrf.mxu0
    %v650 = vadd.f32 %v285, %v649
    %v651 = vpop.f32.mrf.mxu0
    %v652 = vpop.f32.mrf.mxu0
    %v653 = vadd.f32 %v285, %v652
    %v654 = vpop.f32.mrf.mxu0
    %655 = vmatprep.mubr.bf16.mxu0 %v246
    %656 = vmatmul.mubr.bf16.gmra.mxu0 %v150
    %v657 = vpop.f32.mrf.mxu0
    %v658 = vadd.f32 %v285, %v657
    %v659 = vpop.f32.mrf.mxu0
    %v660 = vpop.f32.mrf.mxu0
    %v661 = vadd.f32 %v285, %v660
    %v662 = vpop.f32.mrf.mxu0
    %663 = vmatprep.mubr.bf16.mxu0 %v247
    %664 = vmatmul.mubr.bf16.gmra.mxu0 %v151
    %v665 = vpop.f32.mrf.mxu0
    %v666 = vadd.f32 %v285, %v665
    %v667 = vpop.f32.mrf.mxu0
    %v668 = vpop.f32.mrf.mxu0
    %v669 = vadd.f32 %v285, %v668
    %v670 = vpop.f32.mrf.mxu0
    %671 = vdwg.mxu0
    %v672 = vld [vmem:[%s6] sm:$0x1]
    %v673 = vld [vmem:[%s7] sm:$0x1]
    %674 = vadd.xlane.f32.xlu0 %v418
    %v675 = vpop.xlane.xlu0 %674
    %676 = vadd.xlane.f32.xlu0 %v421
    %v677 = vpop.xlane.xlu0 %676
    %678 = vadd.xlane.f32.xlu0 %v426
    %v679 = vpop.xlane.xlu0 %678
    %680 = vadd.xlane.f32.xlu0 %v429
    %v681 = vpop.xlane.xlu0 %680
    %682 = vadd.xlane.f32.xlu0 %v434
    %v683 = vpop.xlane.xlu0 %682
    %684 = vadd.xlane.f32.xlu0 %v437
    %v685 = vpop.xlane.xlu0 %684
    %686 = vadd.xlane.f32.xlu0 %v442
    %v687 = vpop.xlane.xlu0 %686
    %688 = vadd.xlane.f32.xlu0 %v445
    %v689 = vpop.xlane.xlu0 %688
    %690 = vadd.xlane.f32.xlu0 %v450
    %v691 = vpop.xlane.xlu0 %690
    %692 = vadd.xlane.f32.xlu0 %v453
    %v693 = vpop.xlane.xlu0 %692
    %694 = vadd.xlane.f32.xlu0 %v458
    %v695 = vpop.xlane.xlu0 %694
    %696 = vadd.xlane.f32.xlu0 %v461
    %v697 = vpop.xlane.xlu0 %696
    %698 = vadd.xlane.f32.xlu0 %v466
    %v699 = vpop.xlane.xlu0 %698
    %700 = vadd.xlane.f32.xlu0 %v469
    %v701 = vpop.xlane.xlu0 %700
    %702 = vadd.xlane.f32.xlu0 %v474
    %v703 = vpop.xlane.xlu0 %702
    %704 = vadd.xlane.f32.xlu0 %v477
    %v705 = vpop.xlane.xlu0 %704
    %706 = vadd.xlane.f32.xlu0 %v482
    %v707 = vpop.xlane.xlu0 %706
    %708 = vadd.xlane.f32.xlu0 %v485
    %v709 = vpop.xlane.xlu0 %708
    %710 = vadd.xlane.f32.xlu0 %v490
    %v711 = vpop.xlane.xlu0 %710
    %712 = vadd.xlane.f32.xlu0 %v493
    %v713 = vpop.xlane.xlu0 %712
    %714 = vadd.xlane.f32.xlu0 %v498
    %v715 = vpop.xlane.xlu0 %714
    %716 = vadd.xlane.f32.xlu0 %v501
    %v717 = vpop.xlane.xlu0 %716
    %718 = vadd.xlane.f32.xlu0 %v506
    %v719 = vpop.xlane.xlu0 %718
    %720 = vadd.xlane.f32.xlu0 %v509
    %v721 = vpop.xlane.xlu0 %720
    %722 = vadd.xlane.f32.xlu0 %v514
    %v723 = vpop.xlane.xlu0 %722
    %724 = vadd.xlane.f32.xlu0 %v517
    %v725 = vpop.xlane.xlu0 %724
    %726 = vadd.xlane.f32.xlu0 %v522
    %v727 = vpop.xlane.xlu0 %726
    %728 = vadd.xlane.f32.xlu0 %v525
    %v729 = vpop.xlane.xlu0 %728
    %730 = vadd.xlane.f32.xlu0 %v530
    %v731 = vpop.xlane.xlu0 %730
    %732 = vadd.xlane.f32.xlu0 %v533
    %v733 = vpop.xlane.xlu0 %732
    %734 = vadd.xlane.f32.xlu0 %v538
    %v735 = vpop.xlane.xlu0 %734
    %736 = vadd.xlane.f32.xlu0 %v541
    %v737 = vpop.xlane.xlu0 %736
    %738 = vadd.xlane.f32.xlu0 %v546
    %v739 = vpop.xlane.xlu0 %738
    %740 = vadd.xlane.f32.xlu0 %v549
    %v741 = vpop.xlane.xlu0 %740
    %742 = vadd.xlane.f32.xlu0 %v554
    %v743 = vpop.xlane.xlu0 %742
    %744 = vadd.xlane.f32.xlu0 %v557
    %v745 = vpop.xlane.xlu0 %744
    %746 = vadd.xlane.f32.xlu0 %v562
    %v747 = vpop.xlane.xlu0 %746
    %748 = vadd.xlane.f32.xlu0 %v565
    %v749 = vpop.xlane.xlu0 %748
    %750 = vadd.xlane.f32.xlu0 %v570
    %v751 = vpop.xlane.xlu0 %750
    %752 = vadd.xlane.f32.xlu0 %v573
    %v753 = vpop.xlane.xlu0 %752
    %754 = vadd.xlane.f32.xlu0 %v578
    %v755 = vpop.xlane.xlu0 %754
    %756 = vadd.xlane.f32.xlu0 %v581
    %v757 = vpop.xlane.xlu0 %756
    %758 = vadd.xlane.f32.xlu0 %v586
    %v759 = vpop.xlane.xlu0 %758
    %760 = vadd.xlane.f32.xlu0 %v589
    %v761 = vpop.xlane.xlu0 %760
    %762 = vadd.xlane.f32.xlu0 %v594
    %v763 = vpop.xlane.xlu0 %762
    %764 = vadd.xlane.f32.xlu0 %v597
    %v765 = vpop.xlane.xlu0 %764
    %766 = vadd.xlane.f32.xlu0 %v602
    %v767 = vpop.xlane.xlu0 %766
    %768 = vadd.xlane.f32.xlu0 %v605
    %v769 = vpop.xlane.xlu0 %768
    %770 = vadd.xlane.f32.xlu0 %v610
    %v771 = vpop.xlane.xlu0 %770
    %772 = vadd.xlane.f32.xlu0 %v613
    %v773 = vpop.xlane.xlu0 %772
    %774 = vadd.xlane.f32.xlu0 %v618
    %v775 = vpop.xlane.xlu0 %774
    %776 = vadd.xlane.f32.xlu0 %v621
    %v777 = vpop.xlane.xlu0 %776
    %778 = vadd.xlane.f32.xlu0 %v626
    %v779 = vpop.xlane.xlu0 %778
    %780 = vadd.xlane.f32.xlu0 %v629
    %v781 = vpop.xlane.xlu0 %780
    %782 = vadd.xlane.f32.xlu0 %v634
    %v783 = vpop.xlane.xlu0 %782
    %784 = vadd.xlane.f32.xlu0 %v637
    %v785 = vpop.xlane.xlu0 %784
    %786 = vadd.xlane.f32.xlu0 %v642
    %v787 = vpop.xlane.xlu0 %786
    %788 = vadd.xlane.f32.xlu0 %v645
    %v789 = vpop.xlane.xlu0 %788
    %790 = vadd.xlane.f32.xlu0 %v650
    %v791 = vpop.xlane.xlu0 %790
    %792 = vadd.xlane.f32.xlu0 %v653
    %v793 = vpop.xlane.xlu0 %792
    %794 = vadd.xlane.f32.xlu0 %v658
    %v795 = vpop.xlane.xlu0 %794
    %796 = vadd.xlane.f32.xlu0 %v661
    %v797 = vpop.xlane.xlu0 %796
    %798 = vadd.xlane.f32.xlu0 %v666
    %v799 = vpop.xlane.xlu0 %798
    %800 = vadd.xlane.f32.xlu0 %v669
    %v801 = vpop.xlane.xlu0 %800
    %v802 = vrcp.pop 128.0
    %v803 = vmul.f32 %v675, %v802
    %v804 = vmul.f32 %v677, %v802
    %v805 = vmul.f32 %v679, %v802
    %v806 = vmul.f32 %v681, %v802
    %v807 = vmul.f32 %v683, %v802
    %v808 = vmul.f32 %v685, %v802
    %v809 = vmul.f32 %v687, %v802
    %v810 = vmul.f32 %v689, %v802
    %v811 = vmul.f32 %v691, %v802
    %v812 = vmul.f32 %v693, %v802
    %v813 = vmul.f32 %v695, %v802
    %v814 = vmul.f32 %v697, %v802
    %v815 = vmul.f32 %v699, %v802
    %v816 = vmul.f32 %v701, %v802
    %v817 = vmul.f32 %v703, %v802
    %v818 = vmul.f32 %v705, %v802
    %v819 = vmul.f32 %v707, %v802
    %v820 = vmul.f32 %v709, %v802
    %v821 = vmul.f32 %v711, %v802
    %v822 = vmul.f32 %v713, %v802
    %v823 = vmul.f32 %v715, %v802
    %v824 = vmul.f32 %v717, %v802
    %v825 = vmul.f32 %v719, %v802
    %v826 = vmul.f32 %v721, %v802
    %v827 = vmul.f32 %v723, %v802
    %v828 = vmul.f32 %v725, %v802
    %v829 = vmul.f32 %v727, %v802
    %v830 = vmul.f32 %v729, %v802
    %v831 = vmul.f32 %v731, %v802
    %v832 = vmul.f32 %v733, %v802
    %v833 = vmul.f32 %v735, %v802
    %v834 = vmul.f32 %v737, %v802
    %v835 = vmul.f32 %v739, %v802
    %v836 = vmul.f32 %v741, %v802
    %v837 = vmul.f32 %v743, %v802
    %v838 = vmul.f32 %v745, %v802
    %v839 = vmul.f32 %v747, %v802
    %v840 = vmul.f32 %v749, %v802
    %v841 = vmul.f32 %v751, %v802
    %v842 = vmul.f32 %v753, %v802
    %v843 = vmul.f32 %v755, %v802
    %v844 = vmul.f32 %v757, %v802
    %v845 = vmul.f32 %v759, %v802
    %v846 = vmul.f32 %v761, %v802
    %v847 = vmul.f32 %v763, %v802
    %v848 = vmul.f32 %v765, %v802
    %v849 = vmul.f32 %v767, %v802
    %v850 = vmul.f32 %v769, %v802
    %v851 = vmul.f32 %v771, %v802
    %v852 = vmul.f32 %v773, %v802
    %v853 = vmul.f32 %v775, %v802
    %v854 = vmul.f32 %v777, %v802
    %v855 = vmul.f32 %v779, %v802
    %v856 = vmul.f32 %v781, %v802
    %v857 = vmul.f32 %v783, %v802
    %v858 = vmul.f32 %v785, %v802
    %v859 = vmul.f32 %v787, %v802
    %v860 = vmul.f32 %v789, %v802
    %v861 = vmul.f32 %v791, %v802
    %v862 = vmul.f32 %v793, %v802
    %v863 = vmul.f32 %v795, %v802
    %v864 = vmul.f32 %v797, %v802
    %v865 = vmul.f32 %v799, %v802
    %v866 = vmul.f32 %v801, %v802
    %v867 = vsub.f32 %v418, %v803
    %v868 = vsub.f32 %v421, %v804
    %v869 = vsub.f32 %v426, %v805
    %v870 = vsub.f32 %v429, %v806
    %v871 = vsub.f32 %v434, %v807
    %v872 = vsub.f32 %v437, %v808
    %v873 = vsub.f32 %v442, %v809
    %v874 = vsub.f32 %v445, %v810
    %v875 = vsub.f32 %v450, %v811
    %v876 = vsub.f32 %v453, %v812
    %v877 = vsub.f32 %v458, %v813
    %v878 = vsub.f32 %v461, %v814
    %v879 = vsub.f32 %v466, %v815
    %v880 = vsub.f32 %v469, %v816
    %v881 = vsub.f32 %v474, %v817
    %v882 = vsub.f32 %v477, %v818
    %v883 = vsub.f32 %v482, %v819
    %v884 = vsub.f32 %v485, %v820
    %v885 = vsub.f32 %v490, %v821
    %v886 = vsub.f32 %v493, %v822
    %v887 = vsub.f32 %v498, %v823
    %v888 = vsub.f32 %v501, %v824
    %v889 = vsub.f32 %v506, %v825
    %v890 = vsub.f32 %v509, %v826
    %v891 = vsub.f32 %v514, %v827
    %v892 = vsub.f32 %v517, %v828
    %v893 = vsub.f32 %v522, %v829
    %v894 = vsub.f32 %v525, %v830
    %v895 = vsub.f32 %v530, %v831
    %v896 = vsub.f32 %v533, %v832
    %v897 = vsub.f32 %v538, %v833
    %v898 = vsub.f32 %v541, %v834
    %v899 = vsub.f32 %v546, %v835
    %v900 = vsub.f32 %v549, %v836
    %v901 = vsub.f32 %v554, %v837
    %v902 = vsub.f32 %v557, %v838
    %v903 = vsub.f32 %v562, %v839
    %v904 = vsub.f32 %v565, %v840
    %v905 = vsub.f32 %v570, %v841
    %v906 = vsub.f32 %v573, %v842
    %v907 = vsub.f32 %v578, %v843
    %v908 = vsub.f32 %v581, %v844
    %v909 = vsub.f32 %v586, %v845
    %v910 = vsub.f32 %v589, %v846
    %v911 = vsub.f32 %v594, %v847
    %v912 = vsub.f32 %v597, %v848
    %v913 = vsub.f32 %v602, %v849
    %v914 = vsub.f32 %v605, %v850
    %v915 = vsub.f32 %v610, %v851
    %v916 = vsub.f32 %v613, %v852
    %v917 = vsub.f32 %v618, %v853
    %v918 = vsub.f32 %v621, %v854
    %v919 = vsub.f32 %v626, %v855
    %v920 = vsub.f32 %v629, %v856
    %v921 = vsub.f32 %v634, %v857
    %v922 = vsub.f32 %v637, %v858
    %v923 = vsub.f32 %v642, %v859
    %v924 = vsub.f32 %v645, %v860
    %v925 = vsub.f32 %v650, %v861
    %v926 = vsub.f32 %v653, %v862
    %v927 = vsub.f32 %v658, %v863
    %v928 = vsub.f32 %v661, %v864
    %v929 = vsub.f32 %v666, %v865
    %v930 = vsub.f32 %v669, %v866
    %v931 = vmul.f32 %v867, %v867
    %v932 = vmul.f32 %v868, %v868
    %v933 = vmul.f32 %v869, %v869
    %v934 = vmul.f32 %v870, %v870
    %v935 = vmul.f32 %v871, %v871
    %v936 = vmul.f32 %v872, %v872
    %v937 = vmul.f32 %v873, %v873
    %v938 = vmul.f32 %v874, %v874
    %v939 = vmul.f32 %v875, %v875
    %v940 = vmul.f32 %v876, %v876
    %v941 = vmul.f32 %v877, %v877
    %v942 = vmul.f32 %v878, %v878
    %v943 = vmul.f32 %v879, %v879
    %v944 = vmul.f32 %v880, %v880
    %v945 = vmul.f32 %v881, %v881
    %v946 = vmul.f32 %v882, %v882
    %v947 = vmul.f32 %v883, %v883
    %v948 = vmul.f32 %v884, %v884
    %v949 = vmul.f32 %v885, %v885
    %v950 = vmul.f32 %v886, %v886
    %v951 = vmul.f32 %v887, %v887
    %v952 = vmul.f32 %v888, %v888
    %v953 = vmul.f32 %v889, %v889
    %v954 = vmul.f32 %v890, %v890
    %v955 = vmul.f32 %v891, %v891
    %v956 = vmul.f32 %v892, %v892
    %v957 = vmul.f32 %v893, %v893
    %v958 = vmul.f32 %v894, %v894
    %v959 = vmul.f32 %v895, %v895
    %v960 = vmul.f32 %v896, %v896
    %v961 = vmul.f32 %v897, %v897
    %v962 = vmul.f32 %v898, %v898
    %v963 = vmul.f32 %v899, %v899
    %v964 = vmul.f32 %v900, %v900
    %v965 = vmul.f32 %v901, %v901
    %v966 = vmul.f32 %v902, %v902
    %v967 = vmul.f32 %v903, %v903
    %v968 = vmul.f32 %v904, %v904
    %v969 = vmul.f32 %v905, %v905
    %v970 = vmul.f32 %v906, %v906
    %v971 = vmul.f32 %v907, %v907
    %v972 = vmul.f32 %v908, %v908
    %v973 = vmul.f32 %v909, %v909
    %v974 = vmul.f32 %v910, %v910
    %v975 = vmul.f32 %v911, %v911
    %v976 = vmul.f32 %v912, %v912
    %v977 = vmul.f32 %v913, %v913
    %v978 = vmul.f32 %v914, %v914
    %v979 = vmul.f32 %v915, %v915
    %v980 = vmul.f32 %v916, %v916
    %v981 = vmul.f32 %v917, %v917
    %v982 = vmul.f32 %v918, %v918
    %v983 = vmul.f32 %v919, %v919
    %v984 = vmul.f32 %v920, %v920
    %v985 = vmul.f32 %v921, %v921
    %v986 = vmul.f32 %v922, %v922
    %v987 = vmul.f32 %v923, %v923
    %v988 = vmul.f32 %v924, %v924
    %v989 = vmul.f32 %v925, %v925
    %v990 = vmul.f32 %v926, %v926
    %v991 = vmul.f32 %v927, %v927
    %v992 = vmul.f32 %v928, %v928
    %v993 = vmul.f32 %v929, %v929
    %v994 = vmul.f32 %v930, %v930
    %995 = vadd.xlane.f32.xlu0 %v931
    %v996 = vpop.xlane.xlu0 %995
    %997 = vadd.xlane.f32.xlu0 %v932
    %v998 = vpop.xlane.xlu0 %997
    %999 = vadd.xlane.f32.xlu0 %v933
    %v1000 = vpop.xlane.xlu0 %999
    %1001 = vadd.xlane.f32.xlu0 %v934
    %v1002 = vpop.xlane.xlu0 %1001
    %1003 = vadd.xlane.f32.xlu0 %v935
    %v1004 = vpop.xlane.xlu0 %1003
    %1005 = vadd.xlane.f32.xlu0 %v936
    %v1006 = vpop.xlane.xlu0 %1005
    %1007 = vadd.xlane.f32.xlu0 %v937
    %v1008 = vpop.xlane.xlu0 %1007
    %1009 = vadd.xlane.f32.xlu0 %v938
    %v1010 = vpop.xlane.xlu0 %1009
    %1011 = vadd.xlane.f32.xlu0 %v939
    %v1012 = vpop.xlane.xlu0 %1011
    %1013 = vadd.xlane.f32.xlu0 %v940
    %v1014 = vpop.xlane.xlu0 %1013
    %1015 = vadd.xlane.f32.xlu0 %v941
    %v1016 = vpop.xlane.xlu0 %1015
    %1017 = vadd.xlane.f32.xlu0 %v942
    %v1018 = vpop.xlane.xlu0 %1017
    %1019 = vadd.xlane.f32.xlu0 %v943
    %v1020 = vpop.xlane.xlu0 %1019
    %1021 = vadd.xlane.f32.xlu0 %v944
    %v1022 = vpop.xlane.xlu0 %1021
    %1023 = vadd.xlane.f32.xlu0 %v945
    %v1024 = vpop.xlane.xlu0 %1023
    %1025 = vadd.xlane.f32.xlu0 %v946
    %v1026 = vpop.xlane.xlu0 %1025
    %1027 = vadd.xlane.f32.xlu0 %v947
    %v1028 = vpop.xlane.xlu0 %1027
    %1029 = vadd.xlane.f32.xlu0 %v948
    %v1030 = vpop.xlane.xlu0 %1029
    %1031 = vadd.xlane.f32.xlu0 %v949
    %v1032 = vpop.xlane.xlu0 %1031
    %1033 = vadd.xlane.f32.xlu0 %v950
    %v1034 = vpop.xlane.xlu0 %1033
    %1035 = vadd.xlane.f32.xlu0 %v951
    %v1036 = vpop.xlane.xlu0 %1035
    %1037 = vadd.xlane.f32.xlu0 %v952
    %v1038 = vpop.xlane.xlu0 %1037
    %1039 = vadd.xlane.f32.xlu0 %v953
    %v1040 = vpop.xlane.xlu0 %1039
    %1041 = vadd.xlane.f32.xlu0 %v954
    %v1042 = vpop.xlane.xlu0 %1041
    %1043 = vadd.xlane.f32.xlu0 %v955
    %v1044 = vpop.xlane.xlu0 %1043
    %1045 = vadd.xlane.f32.xlu0 %v956
    %v1046 = vpop.xlane.xlu0 %1045
    %1047 = vadd.xlane.f32.xlu0 %v957
    %v1048 = vpop.xlane.xlu0 %1047
    %1049 = vadd.xlane.f32.xlu0 %v958
    %v1050 = vpop.xlane.xlu0 %1049
    %1051 = vadd.xlane.f32.xlu0 %v959
    %v1052 = vpop.xlane.xlu0 %1051
    %1053 = vadd.xlane.f32.xlu0 %v960
    %v1054 = vpop.xlane.xlu0 %1053
    %1055 = vadd.xlane.f32.xlu0 %v961
    %v1056 = vpop.xlane.xlu0 %1055
    %1057 = vadd.xlane.f32.xlu0 %v962
    %v1058 = vpop.xlane.xlu0 %1057
    %1059 = vadd.xlane.f32.xlu0 %v963
    %v1060 = vpop.xlane.xlu0 %1059
    %1061 = vadd.xlane.f32.xlu0 %v964
    %v1062 = vpop.xlane.xlu0 %1061
    %1063 = vadd.xlane.f32.xlu0 %v965
    %v1064 = vpop.xlane.xlu0 %1063
    %1065 = vadd.xlane.f32.xlu0 %v966
    %v1066 = vpop.xlane.xlu0 %1065
    %1067 = vadd.xlane.f32.xlu0 %v967
    %v1068 = vpop.xlane.xlu0 %1067
    %1069 = vadd.xlane.f32.xlu0 %v968
    %v1070 = vpop.xlane.xlu0 %1069
    %1071 = vadd.xlane.f32.xlu0 %v969
    %v1072 = vpop.xlane.xlu0 %1071
    %1073 = vadd.xlane.f32.xlu0 %v970
    %v1074 = vpop.xlane.xlu0 %1073
    %1075 = vadd.xlane.f32.xlu0 %v971
    %v1076 = vpop.xlane.xlu0 %1075
    %1077 = vadd.xlane.f32.xlu0 %v972
    %v1078 = vpop.xlane.xlu0 %1077
    %1079 = vadd.xlane.f32.xlu0 %v973
    %v1080 = vpop.xlane.xlu0 %1079
    %1081 = vadd.xlane.f32.xlu0 %v974
    %v1082 = vpop.xlane.xlu0 %1081
    %1083 = vadd.xlane.f32.xlu0 %v975
    %v1084 = vpop.xlane.xlu0 %1083
    %1085 = vadd.xlane.f32.xlu0 %v976
    %v1086 = vpop.xlane.xlu0 %1085
    %1087 = vadd.xlane.f32.xlu0 %v977
    %v1088 = vpop.xlane.xlu0 %1087
    %1089 = vadd.xlane.f32.xlu0 %v978
    %v1090 = vpop.xlane.xlu0 %1089
    %1091 = vadd.xlane.f32.xlu0 %v979
    %v1092 = vpop.xlane.xlu0 %1091
    %1093 = vadd.xlane.f32.xlu0 %v980
    %v1094 = vpop.xlane.xlu0 %1093
    %1095 = vadd.xlane.f32.xlu0 %v981
    %v1096 = vpop.xlane.xlu0 %1095
    %1097 = vadd.xlane.f32.xlu0 %v982
    %v1098 = vpop.xlane.xlu0 %1097
    %1099 = vadd.xlane.f32.xlu0 %v983
    %v1100 = vpop.xlane.xlu0 %1099
    %1101 = vadd.xlane.f32.xlu0 %v984
    %v1102 = vpop.xlane.xlu0 %1101
    %1103 = vadd.xlane.f32.xlu0 %v985
    %v1104 = vpop.xlane.xlu0 %1103
    %1105 = vadd.xlane.f32.xlu0 %v986
    %v1106 = vpop.xlane.xlu0 %1105
    %1107 = vadd.xlane.f32.xlu0 %v987
    %v1108 = vpop.xlane.xlu0 %1107
    %1109 = vadd.xlane.f32.xlu0 %v988
    %v1110 = vpop.xlane.xlu0 %1109
    %1111 = vadd.xlane.f32.xlu0 %v989
    %v1112 = vpop.xlane.xlu0 %1111
    %1113 = vadd.xlane.f32.xlu0 %v990
    %v1114 = vpop.xlane.xlu0 %1113
    %1115 = vadd.xlane.f32.xlu0 %v991
    %v1116 = vpop.xlane.xlu0 %1115
    %1117 = vadd.xlane.f32.xlu0 %v992
    %v1118 = vpop.xlane.xlu0 %1117
    %1119 = vadd.xlane.f32.xlu0 %v993
    %v1120 = vpop.xlane.xlu0 %1119
    %1121 = vadd.xlane.f32.xlu0 %v994
    %v1122 = vpop.xlane.xlu0 %1121
    %v1123 = vmul.f32 %v996, %v802
    %v1124 = vmul.f32 %v998, %v802
    %v1125 = vmul.f32 %v1000, %v802
    %v1126 = vmul.f32 %v1002, %v802
    %v1127 = vmul.f32 %v1004, %v802
    %v1128 = vmul.f32 %v1006, %v802
    %v1129 = vmul.f32 %v1008, %v802
    %v1130 = vmul.f32 %v1010, %v802
    %v1131 = vmul.f32 %v1012, %v802
    %v1132 = vmul.f32 %v1014, %v802
    %v1133 = vmul.f32 %v1016, %v802
    %v1134 = vmul.f32 %v1018, %v802
    %v1135 = vmul.f32 %v1020, %v802
    %v1136 = vmul.f32 %v1022, %v802
    %v1137 = vmul.f32 %v1024, %v802
    %v1138 = vmul.f32 %v1026, %v802
    %v1139 = vmul.f32 %v1028, %v802
    %v1140 = vmul.f32 %v1030, %v802
    %v1141 = vmul.f32 %v1032, %v802
    %v1142 = vmul.f32 %v1034, %v802
    %v1143 = vmul.f32 %v1036, %v802
    %v1144 = vmul.f32 %v1038, %v802
    %v1145 = vmul.f32 %v1040, %v802
    %v1146 = vmul.f32 %v1042, %v802
    %v1147 = vmul.f32 %v1044, %v802
    %v1148 = vmul.f32 %v1046, %v802
    %v1149 = vmul.f32 %v1048, %v802
    %v1150 = vmul.f32 %v1050, %v802
    %v1151 = vmul.f32 %v1052, %v802
    %v1152 = vmul.f32 %v1054, %v802
    %v1153 = vmul.f32 %v1056, %v802
    %v1154 = vmul.f32 %v1058, %v802
    %v1155 = vmul.f32 %v1060, %v802
    %v1156 = vmul.f32 %v1062, %v802
    %v1157 = vmul.f32 %v1064, %v802
    %v1158 = vmul.f32 %v1066, %v802
    %v1159 = vmul.f32 %v1068, %v802
    %v1160 = vmul.f32 %v1070, %v802
    %v1161 = vmul.f32 %v1072, %v802
    %v1162 = vmul.f32 %v1074, %v802
    %v1163 = vmul.f32 %v1076, %v802
    %v1164 = vmul.f32 %v1078, %v802
    %v1165 = vmul.f32 %v1080, %v802
    %v1166 = vmul.f32 %v1082, %v802
    %v1167 = vmul.f32 %v1084, %v802
    %v1168 = vmul.f32 %v1086, %v802
    %v1169 = vmul.f32 %v1088, %v802
    %v1170 = vmul.f32 %v1090, %v802
    %v1171 = vmul.f32 %v1092, %v802
    %v1172 = vmul.f32 %v1094, %v802
    %v1173 = vmul.f32 %v1096, %v802
    %v1174 = vmul.f32 %v1098, %v802
    %v1175 = vmul.f32 %v1100, %v802
    %v1176 = vmul.f32 %v1102, %v802
    %v1177 = vmul.f32 %v1104, %v802
    %v1178 = vmul.f32 %v1106, %v802
    %v1179 = vmul.f32 %v1108, %v802
    %v1180 = vmul.f32 %v1110, %v802
    %v1181 = vmul.f32 %v1112, %v802
    %v1182 = vmul.f32 %v1114, %v802
    %v1183 = vmul.f32 %v1116, %v802
    %v1184 = vmul.f32 %v1118, %v802
    %v1185 = vmul.f32 %v1120, %v802
    %v1186 = vmul.f32 %v1122, %v802
    %v1187 = vadd.f32 %v1123, 1e-05
    %v1188 = vadd.f32 %v1124, 1e-05
    %v1189 = vadd.f32 %v1125, 1e-05
    %v1190 = vadd.f32 %v1126, 1e-05
    %v1191 = vadd.f32 %v1127, 1e-05
    %v1192 = vadd.f32 %v1128, 1e-05
    %v1193 = vadd.f32 %v1129, 1e-05
    %v1194 = vadd.f32 %v1130, 1e-05
    %v1195 = vadd.f32 %v1131, 1e-05
    %v1196 = vadd.f32 %v1132, 1e-05
    %v1197 = vadd.f32 %v1133, 1e-05
    %v1198 = vadd.f32 %v1134, 1e-05
    %v1199 = vadd.f32 %v1135, 1e-05
    %v1200 = vadd.f32 %v1136, 1e-05
    %v1201 = vadd.f32 %v1137, 1e-05
    %v1202 = vadd.f32 %v1138, 1e-05
    %v1203 = vadd.f32 %v1139, 1e-05
    %v1204 = vadd.f32 %v1140, 1e-05
    %v1205 = vadd.f32 %v1141, 1e-05
    %v1206 = vadd.f32 %v1142, 1e-05
    %v1207 = vadd.f32 %v1143, 1e-05
    %v1208 = vadd.f32 %v1144, 1e-05
    %v1209 = vadd.f32 %v1145, 1e-05
    %v1210 = vadd.f32 %v1146, 1e-05
    %v1211 = vadd.f32 %v1147, 1e-05
    %v1212 = vadd.f32 %v1148, 1e-05
    %v1213 = vadd.f32 %v1149, 1e-05
    %v1214 = vadd.f32 %v1150, 1e-05
    %v1215 = vadd.f32 %v1151, 1e-05
    %v1216 = vadd.f32 %v1152, 1e-05
    %v1217 = vadd.f32 %v1153, 1e-05
    %v1218 = vadd.f32 %v1154, 1e-05
    %v1219 = vadd.f32 %v1155, 1e-05
    %v1220 = vadd.f32 %v1156, 1e-05
    %v1221 = vadd.f32 %v1157, 1e-05
    %v1222 = vadd.f32 %v1158, 1e-05
    %v1223 = vadd.f32 %v1159, 1e-05
    %v1224 = vadd.f32 %v1160, 1e-05
    %v1225 = vadd.f32 %v1161, 1e-05
    %v1226 = vadd.f32 %v1162, 1e-05
    %v1227 = vadd.f32 %v1163, 1e-05
    %v1228 = vadd.f32 %v1164, 1e-05
    %v1229 = vadd.f32 %v1165, 1e-05
    %v1230 = vadd.f32 %v1166, 1e-05
    %v1231 = vadd.f32 %v1167, 1e-05
    %v1232 = vadd.f32 %v1168, 1e-05
    %v1233 = vadd.f32 %v1169, 1e-05
    %v1234 = vadd.f32 %v1170, 1e-05
    %v1235 = vadd.f32 %v1171, 1e-05
    %v1236 = vadd.f32 %v1172, 1e-05
    %v1237 = vadd.f32 %v1173, 1e-05
    %v1238 = vadd.f32 %v1174, 1e-05
    %v1239 = vadd.f32 %v1175, 1e-05
    %v1240 = vadd.f32 %v1176, 1e-05
    %v1241 = vadd.f32 %v1177, 1e-05
    %v1242 = vadd.f32 %v1178, 1e-05
    %v1243 = vadd.f32 %v1179, 1e-05
    %v1244 = vadd.f32 %v1180, 1e-05
    %v1245 = vadd.f32 %v1181, 1e-05
    %v1246 = vadd.f32 %v1182, 1e-05
    %v1247 = vadd.f32 %v1183, 1e-05
    %v1248 = vadd.f32 %v1184, 1e-05
    %v1249 = vadd.f32 %v1185, 1e-05
    %v1250 = vadd.f32 %v1186, 1e-05
    %v1251 = vrsqrt.pop %v1187
    %v1252 = vrsqrt.pop %v1188
    %v1253 = vrsqrt.pop %v1189
    %v1254 = vrsqrt.pop %v1190
    %v1255 = vrsqrt.pop %v1191
    %v1256 = vrsqrt.pop %v1192
    %v1257 = vrsqrt.pop %v1193
    %v1258 = vrsqrt.pop %v1194
    %v1259 = vrsqrt.pop %v1195
    %v1260 = vrsqrt.pop %v1196
    %v1261 = vrsqrt.pop %v1197
    %v1262 = vrsqrt.pop %v1198
    %v1263 = vrsqrt.pop %v1199
    %v1264 = vrsqrt.pop %v1200
    %v1265 = vrsqrt.pop %v1201
    %v1266 = vrsqrt.pop %v1202
    %v1267 = vrsqrt.pop %v1203
    %v1268 = vrsqrt.pop %v1204
    %v1269 = vrsqrt.pop %v1205
    %v1270 = vrsqrt.pop %v1206
    %v1271 = vrsqrt.pop %v1207
    %v1272 = vrsqrt.pop %v1208
    %v1273 = vrsqrt.pop %v1209
    %v1274 = vrsqrt.pop %v1210
    %v1275 = vrsqrt.pop %v1211
    %v1276 = vrsqrt.pop %v1212
    %v1277 = vrsqrt.pop %v1213
    %v1278 = vrsqrt.pop %v1214
    %v1279 = vrsqrt.pop %v1215
    %v1280 = vrsqrt.pop %v1216
    %v1281 = vrsqrt.pop %v1217
    %v1282 = vrsqrt.pop %v1218
    %v1283 = vrsqrt.pop %v1219
    %v1284 = vrsqrt.pop %v1220
    %v1285 = vrsqrt.pop %v1221
    %v1286 = vrsqrt.pop %v1222
    %v1287 = vrsqrt.pop %v1223
    %v1288 = vrsqrt.pop %v1224
    %v1289 = vrsqrt.pop %v1225
    %v1290 = vrsqrt.pop %v1226
    %v1291 = vrsqrt.pop %v1227
    %v1292 = vrsqrt.pop %v1228
    %v1293 = vrsqrt.pop %v1229
    %v1294 = vrsqrt.pop %v1230
    %v1295 = vrsqrt.pop %v1231
    %v1296 = vrsqrt.pop %v1232
    %v1297 = vrsqrt.pop %v1233
    %v1298 = vrsqrt.pop %v1234
    %v1299 = vrsqrt.pop %v1235
    %v1300 = vrsqrt.pop %v1236
    %v1301 = vrsqrt.pop %v1237
    %v1302 = vrsqrt.pop %v1238
    %v1303 = vrsqrt.pop %v1239
    %v1304 = vrsqrt.pop %v1240
    %v1305 = vrsqrt.pop %v1241
    %v1306 = vrsqrt.pop %v1242
    %v1307 = vrsqrt.pop %v1243
    %v1308 = vrsqrt.pop %v1244
    %v1309 = vrsqrt.pop %v1245
    %v1310 = vrsqrt.pop %v1246
    %v1311 = vrsqrt.pop %v1247
    %v1312 = vrsqrt.pop %v1248
    %v1313 = vrsqrt.pop %v1249
    %v1314 = vrsqrt.pop %v1250
    %v1315 = vmul.f32 %v867, %v1251
    %v1316 = vmul.f32 %v868, %v1252
    %v1317 = vmul.f32 %v869, %v1253
    %v1318 = vmul.f32 %v870, %v1254
    %v1319 = vmul.f32 %v871, %v1255
    %v1320 = vmul.f32 %v872, %v1256
    %v1321 = vmul.f32 %v873, %v1257
    %v1322 = vmul.f32 %v874, %v1258
    %v1323 = vmul.f32 %v875, %v1259
    %v1324 = vmul.f32 %v876, %v1260
    %v1325 = vmul.f32 %v877, %v1261
    %v1326 = vmul.f32 %v878, %v1262
    %v1327 = vmul.f32 %v879, %v1263
    %v1328 = vmul.f32 %v880, %v1264
    %v1329 = vmul.f32 %v881, %v1265
    %v1330 = vmul.f32 %v882, %v1266
    %v1331 = vmul.f32 %v883, %v1267
    %v1332 = vmul.f32 %v884, %v1268
    %v1333 = vmul.f32 %v885, %v1269
    %v1334 = vmul.f32 %v886, %v1270
    %v1335 = vmul.f32 %v887, %v1271
    %v1336 = vmul.f32 %v888, %v1272
    %v1337 = vmul.f32 %v889, %v1273
    %v1338 = vmul.f32 %v890, %v1274
    %v1339 = vmul.f32 %v891, %v1275
    %v1340 = vmul.f32 %v892, %v1276
    %v1341 = vmul.f32 %v893, %v1277
    %v1342 = vmul.f32 %v894, %v1278
    %v1343 = vmul.f32 %v895, %v1279
    %v1344 = vmul.f32 %v896, %v1280
    %v1345 = vmul.f32 %v897, %v1281
    %v1346 = vmul.f32 %v898, %v1282
    %v1347 = vmul.f32 %v899, %v1283
    %v1348 = vmul.f32 %v900, %v1284
    %v1349 = vmul.f32 %v901, %v1285
    %v1350 = vmul.f32 %v902, %v1286
    %v1351 = vmul.f32 %v903, %v1287
    %v1352 = vmul.f32 %v904, %v1288
    %v1353 = vmul.f32 %v905, %v1289
    %v1354 = vmul.f32 %v906, %v1290
    %v1355 = vmul.f32 %v907, %v1291
    %v1356 = vmul.f32 %v908, %v1292
    %v1357 = vmul.f32 %v909, %v1293
    %v1358 = vmul.f32 %v910, %v1294
    %v1359 = vmul.f32 %v911, %v1295
    %v1360 = vmul.f32 %v912, %v1296
    %v1361 = vmul.f32 %v913, %v1297
    %v1362 = vmul.f32 %v914, %v1298
    %v1363 = vmul.f32 %v915, %v1299
    %v1364 = vmul.f32 %v916, %v1300
    %v1365 = vmul.f32 %v917, %v1301
    %v1366 = vmul.f32 %v918, %v1302
    %v1367 = vmul.f32 %v919, %v1303
    %v1368 = vmul.f32 %v920, %v1304
    %v1369 = vmul.f32 %v921, %v1305
    %v1370 = vmul.f32 %v922, %v1306
    %v1371 = vmul.f32 %v923, %v1307
    %v1372 = vmul.f32 %v924, %v1308
    %v1373 = vmul.f32 %v925, %v1309
    %v1374 = vmul.f32 %v926, %v1310
    %v1375 = vmul.f32 %v927, %v1311
    %v1376 = vmul.f32 %v928, %v1312
    %v1377 = vmul.f32 %v929, %v1313
    %v1378 = vmul.f32 %v930, %v1314
    %v1380 = vlaneseq
    %v1381 = vshrl.u32 %v1380, 7
    %v1382 = vsub.s32 0, %v1381
    %v1383 = vrot.slane %v672, %v1382
    %v1385 = vmul.f32 %v1315, %v1383
    %v1386 = vmul.f32 %v1316, %v1383
    %v1387 = vmul.f32 %v1317, %v1383
    %v1388 = vmul.f32 %v1318, %v1383
    %v1389 = vmul.f32 %v1319, %v1383
    %v1390 = vmul.f32 %v1320, %v1383
    %v1391 = vmul.f32 %v1321, %v1383
    %v1392 = vmul.f32 %v1322, %v1383
    %v1393 = vmul.f32 %v1323, %v1383
    %v1394 = vmul.f32 %v1324, %v1383
    %v1395 = vmul.f32 %v1325, %v1383
    %v1396 = vmul.f32 %v1326, %v1383
    %v1397 = vmul.f32 %v1327, %v1383
    %v1398 = vmul.f32 %v1328, %v1383
    %v1399 = vmul.f32 %v1329, %v1383
    %v1400 = vmul.f32 %v1330, %v1383
    %v1401 = vmul.f32 %v1331, %v1383
    %v1402 = vmul.f32 %v1332, %v1383
    %v1403 = vmul.f32 %v1333, %v1383
    %v1404 = vmul.f32 %v1334, %v1383
    %v1405 = vmul.f32 %v1335, %v1383
    %v1406 = vmul.f32 %v1336, %v1383
    %v1407 = vmul.f32 %v1337, %v1383
    %v1408 = vmul.f32 %v1338, %v1383
    %v1409 = vmul.f32 %v1339, %v1383
    %v1410 = vmul.f32 %v1340, %v1383
    %v1411 = vmul.f32 %v1341, %v1383
    %v1412 = vmul.f32 %v1342, %v1383
    %v1413 = vmul.f32 %v1343, %v1383
    %v1414 = vmul.f32 %v1344, %v1383
    %v1415 = vmul.f32 %v1345, %v1383
    %v1416 = vmul.f32 %v1346, %v1383
    %v1417 = vmul.f32 %v1347, %v1383
    %v1418 = vmul.f32 %v1348, %v1383
    %v1419 = vmul.f32 %v1349, %v1383
    %v1420 = vmul.f32 %v1350, %v1383
    %v1421 = vmul.f32 %v1351, %v1383
    %v1422 = vmul.f32 %v1352, %v1383
    %v1423 = vmul.f32 %v1353, %v1383
    %v1424 = vmul.f32 %v1354, %v1383
    %v1425 = vmul.f32 %v1355, %v1383
    %v1426 = vmul.f32 %v1356, %v1383
    %v1427 = vmul.f32 %v1357, %v1383
    %v1428 = vmul.f32 %v1358, %v1383
    %v1429 = vmul.f32 %v1359, %v1383
    %v1430 = vmul.f32 %v1360, %v1383
    %v1431 = vmul.f32 %v1361, %v1383
    %v1432 = vmul.f32 %v1362, %v1383
    %v1433 = vmul.f32 %v1363, %v1383
    %v1434 = vmul.f32 %v1364, %v1383
    %v1435 = vmul.f32 %v1365, %v1383
    %v1436 = vmul.f32 %v1366, %v1383
    %v1437 = vmul.f32 %v1367, %v1383
    %v1438 = vmul.f32 %v1368, %v1383
    %v1439 = vmul.f32 %v1369, %v1383
    %v1440 = vmul.f32 %v1370, %v1383
    %v1441 = vmul.f32 %v1371, %v1383
    %v1442 = vmul.f32 %v1372, %v1383
    %v1443 = vmul.f32 %v1373, %v1383
    %v1444 = vmul.f32 %v1374, %v1383
    %v1445 = vmul.f32 %v1375, %v1383
    %v1446 = vmul.f32 %v1376, %v1383
    %v1447 = vmul.f32 %v1377, %v1383
    %v1448 = vmul.f32 %v1378, %v1383
    %v1450 = vlaneseq
    %v1451 = vshrl.u32 %v1450, 7
    %v1452 = vsub.s32 0, %v1451
    %v1453 = vrot.slane %v673, %v1452
    %v1455 = vadd.f32 %v1385, %v1453
    %v1456 = vadd.f32 %v1386, %v1453
    %v1457 = vadd.f32 %v1387, %v1453
    %v1458 = vadd.f32 %v1388, %v1453
    %v1459 = vadd.f32 %v1389, %v1453
    %v1460 = vadd.f32 %v1390, %v1453
    %v1461 = vadd.f32 %v1391, %v1453
    %v1462 = vadd.f32 %v1392, %v1453
    %v1463 = vadd.f32 %v1393, %v1453
    %v1464 = vadd.f32 %v1394, %v1453
    %v1465 = vadd.f32 %v1395, %v1453
    %v1466 = vadd.f32 %v1396, %v1453
    %v1467 = vadd.f32 %v1397, %v1453
    %v1468 = vadd.f32 %v1398, %v1453
    %v1469 = vadd.f32 %v1399, %v1453
    %v1470 = vadd.f32 %v1400, %v1453
    %v1471 = vadd.f32 %v1401, %v1453
    %v1472 = vadd.f32 %v1402, %v1453
    %v1473 = vadd.f32 %v1403, %v1453
    %v1474 = vadd.f32 %v1404, %v1453
    %v1475 = vadd.f32 %v1405, %v1453
    %v1476 = vadd.f32 %v1406, %v1453
    %v1477 = vadd.f32 %v1407, %v1453
    %v1478 = vadd.f32 %v1408, %v1453
    %v1479 = vadd.f32 %v1409, %v1453
    %v1480 = vadd.f32 %v1410, %v1453
    %v1481 = vadd.f32 %v1411, %v1453
    %v1482 = vadd.f32 %v1412, %v1453
    %v1483 = vadd.f32 %v1413, %v1453
    %v1484 = vadd.f32 %v1414, %v1453
    %v1485 = vadd.f32 %v1415, %v1453
    %v1486 = vadd.f32 %v1416, %v1453
    %v1487 = vadd.f32 %v1417, %v1453
    %v1488 = vadd.f32 %v1418, %v1453
    %v1489 = vadd.f32 %v1419, %v1453
    %v1490 = vadd.f32 %v1420, %v1453
    %v1491 = vadd.f32 %v1421, %v1453
    %v1492 = vadd.f32 %v1422, %v1453
    %v1493 = vadd.f32 %v1423, %v1453
    %v1494 = vadd.f32 %v1424, %v1453
    %v1495 = vadd.f32 %v1425, %v1453
    %v1496 = vadd.f32 %v1426, %v1453
    %v1497 = vadd.f32 %v1427, %v1453
    %v1498 = vadd.f32 %v1428, %v1453
    %v1499 = vadd.f32 %v1429, %v1453
    %v1500 = vadd.f32 %v1430, %v1453
    %v1501 = vadd.f32 %v1431, %v1453
    %v1502 = vadd.f32 %v1432, %v1453
    %v1503 = vadd.f32 %v1433, %v1453
    %v1504 = vadd.f32 %v1434, %v1453
    %v1505 = vadd.f32 %v1435, %v1453
    %v1506 = vadd.f32 %v1436, %v1453
    %v1507 = vadd.f32 %v1437, %v1453
    %v1508 = vadd.f32 %v1438, %v1453
    %v1509 = vadd.f32 %v1439, %v1453
    %v1510 = vadd.f32 %v1440, %v1453
    %v1511 = vadd.f32 %v1441, %v1453
    %v1512 = vadd.f32 %v1442, %v1453
    %v1513 = vadd.f32 %v1443, %v1453
    %v1514 = vadd.f32 %v1444, %v1453
    %v1515 = vadd.f32 %v1445, %v1453
    %v1516 = vadd.f32 %v1446, %v1453
    %v1517 = vadd.f32 %v1447, %v1453
    %v1518 = vadd.f32 %v1448, %v1453
    %v1519 = vpack.c.bf16 %v1456, %v1455
    %v1520 = vpack.c.bf16 %v1458, %v1457
    %v1521 = vpack.c.bf16 %v1460, %v1459
    %v1522 = vpack.c.bf16 %v1462, %v1461
    %v1523 = vpack.c.bf16 %v1464, %v1463
    %v1524 = vpack.c.bf16 %v1466, %v1465
    %v1525 = vpack.c.bf16 %v1468, %v1467
    %v1526 = vpack.c.bf16 %v1470, %v1469
    %v1527 = vpack.c.bf16 %v1472, %v1471
    %v1528 = vpack.c.bf16 %v1474, %v1473
    %v1529 = vpack.c.bf16 %v1476, %v1475
    %v1530 = vpack.c.bf16 %v1478, %v1477
    %v1531 = vpack.c.bf16 %v1480, %v1479
    %v1532 = vpack.c.bf16 %v1482, %v1481
    %v1533 = vpack.c.bf16 %v1484, %v1483
    %v1534 = vpack.c.bf16 %v1486, %v1485
    %v1535 = vpack.c.bf16 %v1488, %v1487
    %v1536 = vpack.c.bf16 %v1490, %v1489
    %v1537 = vpack.c.bf16 %v1492, %v1491
    %v1538 = vpack.c.bf16 %v1494, %v1493
    %v1539 = vpack.c.bf16 %v1496, %v1495
    %v1540 = vpack.c.bf16 %v1498, %v1497
    %v1541 = vpack.c.bf16 %v1500, %v1499
    %v1542 = vpack.c.bf16 %v1502, %v1501
    %v1543 = vpack.c.bf16 %v1504, %v1503
    %v1544 = vpack.c.bf16 %v1506, %v1505
    %v1545 = vpack.c.bf16 %v1508, %v1507
    %v1546 = vpack.c.bf16 %v1510, %v1509
    %v1547 = vpack.c.bf16 %v1512, %v1511
    %v1548 = vpack.c.bf16 %v1514, %v1513
    %v1549 = vpack.c.bf16 %v1516, %v1515
    %v1550 = vpack.c.bf16 %v1518, %v1517
    %v1551 = vld [vmem:[%s8] sm:$0xf]
    %v1552 = vld [vmem:[%s8 + $0x4] sm:$0xf]
    %v1553 = vld [vmem:[%s8 + $0x8] sm:$0xf]
    %v1554 = vld [vmem:[%s8 + $0xc] sm:$0xf]
    %v1555 = vld [vmem:[%s8 + $0x10] sm:$0xf]
    %v1556 = vld [vmem:[%s8 + $0x14] sm:$0xf]
    %v1557 = vld [vmem:[%s8 + $0x18] sm:$0xf]
    %v1558 = vld [vmem:[%s8 + $0x1c] sm:$0xf]
    %v1559 = vld [vmem:[%s8 + $0x20] sm:$0xf]
    %v1560 = vld [vmem:[%s8 + $0x24] sm:$0xf]
    %v1561 = vld [vmem:[%s8 + $0x28] sm:$0xf]
    %v1562 = vld [vmem:[%s8 + $0x2c] sm:$0xf]
    %v1563 = vld [vmem:[%s8 + $0x30] sm:$0xf]
    %v1564 = vld [vmem:[%s8 + $0x34] sm:$0xf]
    %v1565 = vld [vmem:[%s8 + $0x38] sm:$0xf]
    %v1566 = vld [vmem:[%s8 + $0x3c] sm:$0xf]
    %v1567 = vld [vmem:[%s9] sm:$0x1]
    %v1569 = vlaneseq
    %v1570 = vshrl.u32 %v1569, 7
    %v1571 = vsub.s32 0, %v1570
    %v1572 = vrot.slane %v1567, %v1571
    %v1590 = vunpack.c.l.b16 %v1551
    %v1591 = vunpack.c.l.b16 %v1552
    %v1592 = vunpack.c.l.b16 %v1553
    %v1593 = vunpack.c.l.b16 %v1554
    %v1594 = vunpack.c.l.b16 %v1555
    %v1595 = vunpack.c.l.b16 %v1556
    %v1596 = vunpack.c.l.b16 %v1557
    %v1597 = vunpack.c.l.b16 %v1558
    %v1598 = vunpack.c.l.b16 %v1559
    %v1599 = vunpack.c.l.b16 %v1560
    %v1600 = vunpack.c.l.b16 %v1561
    %v1601 = vunpack.c.l.b16 %v1562
    %v1602 = vunpack.c.l.b16 %v1563
    %v1603 = vunpack.c.l.b16 %v1564
    %v1604 = vunpack.c.l.b16 %v1565
    %v1605 = vunpack.c.l.b16 %v1566
    %v1606 = vpack.c.b16 %v1591, %v1590
    %v1607 = vpack.c.b16 %v1593, %v1592
    %v1608 = vpack.c.b16 %v1595, %v1594
    %v1609 = vpack.c.b16 %v1597, %v1596
    %v1610 = vpack.c.b16 %v1599, %v1598
    %v1611 = vpack.c.b16 %v1601, %v1600
    %v1612 = vpack.c.b16 %v1603, %v1602
    %v1613 = vpack.c.b16 %v1605, %v1604
    %1622 = vmatprep.subr.bf16.mxu0 0
    %1623 = vmatpush1.bf16.msra.mxu0 %v1613
    %1624 = vmatprep.subr.bf16.mxu0 0
    %1625 = vmatpush1.bf16.msra.mxu0 %v1612
    %1626 = vmatprep.subr.bf16.mxu0 0
    %1627 = vmatpush1.bf16.msra.mxu0 %v1611
    %1628 = vmatprep.subr.bf16.mxu0 0
    %1629 = vmatpush1.bf16.msra.mxu0 %v1610
    %1630 = vmatprep.subr.bf16.mxu0 0
    %1631 = vmatpush1.bf16.msra.mxu0 %v1609
    %1632 = vmatprep.subr.bf16.mxu0 0
    %1633 = vmatpush1.bf16.msra.mxu0 %v1608
    %1634 = vmatprep.subr.bf16.mxu0 0
    %1635 = vmatpush1.bf16.msra.mxu0 %v1607
    %1636 = vmatprep.subr.bf16.mxu0 0
    %1637 = vmatpush1.bf16.msra.mxu0 %v1606
    %1638 = vmatprep.subr.bf16.mxu0 0
    %1639 = vmatpush2.bf16.msra.mxu0 0
    %1640 = vmatprep.subr.bf16.mxu0 0
    %1641 = vmatpush2.bf16.msra.mxu0 0
    %1642 = vmatprep.subr.bf16.mxu0 0
    %1643 = vmatpush2.bf16.msra.mxu0 0
    %1644 = vmatprep.subr.bf16.mxu0 0
    %1645 = vmatpush2.bf16.msra.mxu0 0
    %1646 = vmatprep.subr.bf16.mxu0 0
    %1647 = vmatpush2.bf16.msra.mxu0 0
    %1648 = vmatprep.subr.bf16.mxu0 0
    %1649 = vmatpush2.bf16.msra.mxu0 0
    %1650 = vmatprep.subr.bf16.mxu0 0
    %1651 = vmatpush2.bf16.msra.mxu0 0
    %1652 = vmatprep.subr.bf16.mxu0 0
    %1653 = vmatpush2.bf16.msra.mxu0 0
    %1654 = vmatprep.mubr.bf16.mxu0 0
    %1655 = vmatmul.mubr.bf16.gmra.mxu0 %v1519
    %v1656 = vpop.f32.mrf.mxu0
    %v1657 = vadd.f32 %v1572, %v1656
    %v1658 = vpop.f32.mrf.mxu0
    %v1659 = vpop.f32.mrf.mxu0
    %v1660 = vadd.f32 %v1572, %v1659
    %v1661 = vpop.f32.mrf.mxu0
    %1662 = vmatprep.mubr.bf16.mxu0 0
    %1663 = vmatmul.mubr.bf16.gmra.mxu0 %v1520
    %v1664 = vpop.f32.mrf.mxu0
    %v1665 = vadd.f32 %v1572, %v1664
    %v1666 = vpop.f32.mrf.mxu0
    %v1667 = vpop.f32.mrf.mxu0
    %v1668 = vadd.f32 %v1572, %v1667
    %v1669 = vpop.f32.mrf.mxu0
    %1670 = vmatprep.mubr.bf16.mxu0 0
    %1671 = vmatmul.mubr.bf16.gmra.mxu0 %v1521
    %v1672 = vpop.f32.mrf.mxu0
    %v1673 = vadd.f32 %v1572, %v1672
    %v1674 = vpop.f32.mrf.mxu0
    %v1675 = vpop.f32.mrf.mxu0
    %v1676 = vadd.f32 %v1572, %v1675
    %v1677 = vpop.f32.mrf.mxu0
    %1678 = vmatprep.mubr.bf16.mxu0 0
    %1679 = vmatmul.mubr.bf16.gmra.mxu0 %v1522
    %v1680 = vpop.f32.mrf.mxu0
    %v1681 = vadd.f32 %v1572, %v1680
    %v1682 = vpop.f32.mrf.mxu0
    %v1683 = vpop.f32.mrf.mxu0
    %v1684 = vadd.f32 %v1572, %v1683
    %v1685 = vpop.f32.mrf.mxu0
    %1686 = vmatprep.mubr.bf16.mxu0 0
    %1687 = vmatmul.mubr.bf16.gmra.mxu0 %v1523
    %v1688 = vpop.f32.mrf.mxu0
    %v1689 = vadd.f32 %v1572, %v1688
    %v1690 = vpop.f32.mrf.mxu0
    %v1691 = vpop.f32.mrf.mxu0
    %v1692 = vadd.f32 %v1572, %v1691
    %v1693 = vpop.f32.mrf.mxu0
    %1694 = vmatprep.mubr.bf16.mxu0 0
    %1695 = vmatmul.mubr.bf16.gmra.mxu0 %v1524
    %v1696 = vpop.f32.mrf.mxu0
    %v1697 = vadd.f32 %v1572, %v1696
    %v1698 = vpop.f32.mrf.mxu0
    %v1699 = vpop.f32.mrf.mxu0
    %v1700 = vadd.f32 %v1572, %v1699
    %v1701 = vpop.f32.mrf.mxu0
    %1702 = vmatprep.mubr.bf16.mxu0 0
    %1703 = vmatmul.mubr.bf16.gmra.mxu0 %v1525
    %v1704 = vpop.f32.mrf.mxu0
    %v1705 = vadd.f32 %v1572, %v1704
    %v1706 = vpop.f32.mrf.mxu0
    %v1707 = vpop.f32.mrf.mxu0
    %v1708 = vadd.f32 %v1572, %v1707
    %v1709 = vpop.f32.mrf.mxu0
    %1710 = vmatprep.mubr.bf16.mxu0 0
    %1711 = vmatmul.mubr.bf16.gmra.mxu0 %v1526
    %v1712 = vpop.f32.mrf.mxu0
    %v1713 = vadd.f32 %v1572, %v1712
    %v1714 = vpop.f32.mrf.mxu0
    %v1715 = vpop.f32.mrf.mxu0
    %v1716 = vadd.f32 %v1572, %v1715
    %v1717 = vpop.f32.mrf.mxu0
    %1718 = vmatprep.mubr.bf16.mxu0 0
    %1719 = vmatmul.mubr.bf16.gmra.mxu0 %v1527
    %v1720 = vpop.f32.mrf.mxu0
    %v1721 = vadd.f32 %v1572, %v1720
    %v1722 = vpop.f32.mrf.mxu0
    %v1723 = vpop.f32.mrf.mxu0
    %v1724 = vadd.f32 %v1572, %v1723
    %v1725 = vpop.f32.mrf.mxu0
    %1726 = vmatprep.mubr.bf16.mxu0 0
    %1727 = vmatmul.mubr.bf16.gmra.mxu0 %v1528
    %v1728 = vpop.f32.mrf.mxu0
    %v1729 = vadd.f32 %v1572, %v1728
    %v1730 = vpop.f32.mrf.mxu0
    %v1731 = vpop.f32.mrf.mxu0
    %v1732 = vadd.f32 %v1572, %v1731
    %v1733 = vpop.f32.mrf.mxu0
    %1734 = vmatprep.mubr.bf16.mxu0 0
    %1735 = vmatmul.mubr.bf16.gmra.mxu0 %v1529
    %v1736 = vpop.f32.mrf.mxu0
    %v1737 = vadd.f32 %v1572, %v1736
    %v1738 = vpop.f32.mrf.mxu0
    %v1739 = vpop.f32.mrf.mxu0
    %v1740 = vadd.f32 %v1572, %v1739
    %v1741 = vpop.f32.mrf.mxu0
    %1742 = vmatprep.mubr.bf16.mxu0 0
    %1743 = vmatmul.mubr.bf16.gmra.mxu0 %v1530
    %v1744 = vpop.f32.mrf.mxu0
    %v1745 = vadd.f32 %v1572, %v1744
    %v1746 = vpop.f32.mrf.mxu0
    %v1747 = vpop.f32.mrf.mxu0
    %v1748 = vadd.f32 %v1572, %v1747
    %v1749 = vpop.f32.mrf.mxu0
    %1750 = vmatprep.mubr.bf16.mxu0 0
    %1751 = vmatmul.mubr.bf16.gmra.mxu0 %v1531
    %v1752 = vpop.f32.mrf.mxu0
    %v1753 = vadd.f32 %v1572, %v1752
    %v1754 = vpop.f32.mrf.mxu0
    %v1755 = vpop.f32.mrf.mxu0
    %v1756 = vadd.f32 %v1572, %v1755
    %v1757 = vpop.f32.mrf.mxu0
    %1758 = vmatprep.mubr.bf16.mxu0 0
    %1759 = vmatmul.mubr.bf16.gmra.mxu0 %v1532
    %v1760 = vpop.f32.mrf.mxu0
    %v1761 = vadd.f32 %v1572, %v1760
    %v1762 = vpop.f32.mrf.mxu0
    %v1763 = vpop.f32.mrf.mxu0
    %v1764 = vadd.f32 %v1572, %v1763
    %v1765 = vpop.f32.mrf.mxu0
    %1766 = vmatprep.mubr.bf16.mxu0 0
    %1767 = vmatmul.mubr.bf16.gmra.mxu0 %v1533
    %v1768 = vpop.f32.mrf.mxu0
    %v1769 = vadd.f32 %v1572, %v1768
    %v1770 = vpop.f32.mrf.mxu0
    %v1771 = vpop.f32.mrf.mxu0
    %v1772 = vadd.f32 %v1572, %v1771
    %v1773 = vpop.f32.mrf.mxu0
    %1774 = vmatprep.mubr.bf16.mxu0 0
    %1775 = vmatmul.mubr.bf16.gmra.mxu0 %v1534
    %v1776 = vpop.f32.mrf.mxu0
    %v1777 = vadd.f32 %v1572, %v1776
    %v1778 = vpop.f32.mrf.mxu0
    %v1779 = vpop.f32.mrf.mxu0
    %v1780 = vadd.f32 %v1572, %v1779
    %v1781 = vpop.f32.mrf.mxu0
    %1782 = vmatprep.mubr.bf16.mxu0 0
    %1783 = vmatmul.mubr.bf16.gmra.mxu0 %v1535
    %v1784 = vpop.f32.mrf.mxu0
    %v1785 = vadd.f32 %v1572, %v1784
    %v1786 = vpop.f32.mrf.mxu0
    %v1787 = vpop.f32.mrf.mxu0
    %v1788 = vadd.f32 %v1572, %v1787
    %v1789 = vpop.f32.mrf.mxu0
    %1790 = vmatprep.mubr.bf16.mxu0 0
    %1791 = vmatmul.mubr.bf16.gmra.mxu0 %v1536
    %v1792 = vpop.f32.mrf.mxu0
    %v1793 = vadd.f32 %v1572, %v1792
    %v1794 = vpop.f32.mrf.mxu0
    %v1795 = vpop.f32.mrf.mxu0
    %v1796 = vadd.f32 %v1572, %v1795
    %v1797 = vpop.f32.mrf.mxu0
    %1798 = vmatprep.mubr.bf16.mxu0 0
    %1799 = vmatmul.mubr.bf16.gmra.mxu0 %v1537
    %v1800 = vpop.f32.mrf.mxu0
    %v1801 = vadd.f32 %v1572, %v1800
    %v1802 = vpop.f32.mrf.mxu0
    %v1803 = vpop.f32.mrf.mxu0
    %v1804 = vadd.f32 %v1572, %v1803
    %v1805 = vpop.f32.mrf.mxu0
    %1806 = vmatprep.mubr.bf16.mxu0 0
    %1807 = vmatmul.mubr.bf16.gmra.mxu0 %v1538
    %v1808 = vpop.f32.mrf.mxu0
    %v1809 = vadd.f32 %v1572, %v1808
    %v1810 = vpop.f32.mrf.mxu0
    %v1811 = vpop.f32.mrf.mxu0
    %v1812 = vadd.f32 %v1572, %v1811
    %v1813 = vpop.f32.mrf.mxu0
    %1814 = vmatprep.mubr.bf16.mxu0 0
    %1815 = vmatmul.mubr.bf16.gmra.mxu0 %v1539
    %v1816 = vpop.f32.mrf.mxu0
    %v1817 = vadd.f32 %v1572, %v1816
    %v1818 = vpop.f32.mrf.mxu0
    %v1819 = vpop.f32.mrf.mxu0
    %v1820 = vadd.f32 %v1572, %v1819
    %v1821 = vpop.f32.mrf.mxu0
    %1822 = vmatprep.mubr.bf16.mxu0 0
    %1823 = vmatmul.mubr.bf16.gmra.mxu0 %v1540
    %v1824 = vpop.f32.mrf.mxu0
    %v1825 = vadd.f32 %v1572, %v1824
    %v1826 = vpop.f32.mrf.mxu0
    %v1827 = vpop.f32.mrf.mxu0
    %v1828 = vadd.f32 %v1572, %v1827
    %v1829 = vpop.f32.mrf.mxu0
    %1830 = vmatprep.mubr.bf16.mxu0 0
    %1831 = vmatmul.mubr.bf16.gmra.mxu0 %v1541
    %v1832 = vpop.f32.mrf.mxu0
    %v1833 = vadd.f32 %v1572, %v1832
    %v1834 = vpop.f32.mrf.mxu0
    %v1835 = vpop.f32.mrf.mxu0
    %v1836 = vadd.f32 %v1572, %v1835
    %v1837 = vpop.f32.mrf.mxu0
    %1838 = vmatprep.mubr.bf16.mxu0 0
    %1839 = vmatmul.mubr.bf16.gmra.mxu0 %v1542
    %v1840 = vpop.f32.mrf.mxu0
    %v1841 = vadd.f32 %v1572, %v1840
    %v1842 = vpop.f32.mrf.mxu0
    %v1843 = vpop.f32.mrf.mxu0
    %v1844 = vadd.f32 %v1572, %v1843
    %v1845 = vpop.f32.mrf.mxu0
    %1846 = vmatprep.mubr.bf16.mxu0 0
    %1847 = vmatmul.mubr.bf16.gmra.mxu0 %v1543
    %v1848 = vpop.f32.mrf.mxu0
    %v1849 = vadd.f32 %v1572, %v1848
    %v1850 = vpop.f32.mrf.mxu0
    %v1851 = vpop.f32.mrf.mxu0
    %v1852 = vadd.f32 %v1572, %v1851
    %v1853 = vpop.f32.mrf.mxu0
    %1854 = vmatprep.mubr.bf16.mxu0 0
    %1855 = vmatmul.mubr.bf16.gmra.mxu0 %v1544
    %v1856 = vpop.f32.mrf.mxu0
    %v1857 = vadd.f32 %v1572, %v1856
    %v1858 = vpop.f32.mrf.mxu0
    %v1859 = vpop.f32.mrf.mxu0
    %v1860 = vadd.f32 %v1572, %v1859
    %v1861 = vpop.f32.mrf.mxu0
    %1862 = vmatprep.mubr.bf16.mxu0 0
    %1863 = vmatmul.mubr.bf16.gmra.mxu0 %v1545
    %v1864 = vpop.f32.mrf.mxu0
    %v1865 = vadd.f32 %v1572, %v1864
    %v1866 = vpop.f32.mrf.mxu0
    %v1867 = vpop.f32.mrf.mxu0
    %v1868 = vadd.f32 %v1572, %v1867
    %v1869 = vpop.f32.mrf.mxu0
    %1870 = vmatprep.mubr.bf16.mxu0 0
    %1871 = vmatmul.mubr.bf16.gmra.mxu0 %v1546
    %v1872 = vpop.f32.mrf.mxu0
    %v1873 = vadd.f32 %v1572, %v1872
    %v1874 = vpop.f32.mrf.mxu0
    %v1875 = vpop.f32.mrf.mxu0
    %v1876 = vadd.f32 %v1572, %v1875
    %v1877 = vpop.f32.mrf.mxu0
    %1878 = vmatprep.mubr.bf16.mxu0 0
    %1879 = vmatmul.mubr.bf16.gmra.mxu0 %v1547
    %v1880 = vpop.f32.mrf.mxu0
    %v1881 = vadd.f32 %v1572, %v1880
    %v1882 = vpop.f32.mrf.mxu0
    %v1883 = vpop.f32.mrf.mxu0
    %v1884 = vadd.f32 %v1572, %v1883
    %v1885 = vpop.f32.mrf.mxu0
    %1886 = vmatprep.mubr.bf16.mxu0 0
    %1887 = vmatmul.mubr.bf16.gmra.mxu0 %v1548
    %v1888 = vpop.f32.mrf.mxu0
    %v1889 = vadd.f32 %v1572, %v1888
    %v1890 = vpop.f32.mrf.mxu0
    %v1891 = vpop.f32.mrf.mxu0
    %v1892 = vadd.f32 %v1572, %v1891
    %v1893 = vpop.f32.mrf.mxu0
    %1894 = vmatprep.mubr.bf16.mxu0 0
    %1895 = vmatmul.mubr.bf16.gmra.mxu0 %v1549
    %v1896 = vpop.f32.mrf.mxu0
    %v1897 = vadd.f32 %v1572, %v1896
    %v1898 = vpop.f32.mrf.mxu0
    %v1899 = vpop.f32.mrf.mxu0
    %v1900 = vadd.f32 %v1572, %v1899
    %v1901 = vpop.f32.mrf.mxu0
    %1902 = vmatprep.mubr.bf16.mxu0 0
    %1903 = vmatmul.mubr.bf16.gmra.mxu0 %v1550
    %v1904 = vpop.f32.mrf.mxu0
    %v1905 = vadd.f32 %v1572, %v1904
    %v1906 = vpop.f32.mrf.mxu0
    %v1907 = vpop.f32.mrf.mxu0
    %v1908 = vadd.f32 %v1572, %v1907
    %v1909 = vpop.f32.mrf.mxu0
    %1910 = vdwg.mxu0
    %v1911 = vpack.c.bf16 %v1660, %v1657
    %v1912 = vpack.c.bf16 %v1668, %v1665
    %v1913 = vpack.c.bf16 %v1676, %v1673
    %v1914 = vpack.c.bf16 %v1684, %v1681
    %v1915 = vpack.c.bf16 %v1692, %v1689
    %v1916 = vpack.c.bf16 %v1700, %v1697
    %v1917 = vpack.c.bf16 %v1708, %v1705
    %v1918 = vpack.c.bf16 %v1716, %v1713
    %v1919 = vpack.c.bf16 %v1724, %v1721
    %v1920 = vpack.c.bf16 %v1732, %v1729
    %v1921 = vpack.c.bf16 %v1740, %v1737
    %v1922 = vpack.c.bf16 %v1748, %v1745
    %v1923 = vpack.c.bf16 %v1756, %v1753
    %v1924 = vpack.c.bf16 %v1764, %v1761
    %v1925 = vpack.c.bf16 %v1772, %v1769
    %v1926 = vpack.c.bf16 %v1780, %v1777
    %v1927 = vpack.c.bf16 %v1788, %v1785
    %v1928 = vpack.c.bf16 %v1796, %v1793
    %v1929 = vpack.c.bf16 %v1804, %v1801
    %v1930 = vpack.c.bf16 %v1812, %v1809
    %v1931 = vpack.c.bf16 %v1820, %v1817
    %v1932 = vpack.c.bf16 %v1828, %v1825
    %v1933 = vpack.c.bf16 %v1836, %v1833
    %v1934 = vpack.c.bf16 %v1844, %v1841
    %v1935 = vpack.c.bf16 %v1852, %v1849
    %v1936 = vpack.c.bf16 %v1860, %v1857
    %v1937 = vpack.c.bf16 %v1868, %v1865
    %v1938 = vpack.c.bf16 %v1876, %v1873
    %v1939 = vpack.c.bf16 %v1884, %v1881
    %v1940 = vpack.c.bf16 %v1892, %v1889
    %v1941 = vpack.c.bf16 %v1900, %v1897
    %v1942 = vpack.c.bf16 %v1908, %v1905
    %v1943 = vmul.bf16 %v1911, %v1911
    %v1944 = vmul.bf16 %v1912, %v1912
    %v1945 = vmul.bf16 %v1913, %v1913
    %v1946 = vmul.bf16 %v1914, %v1914
    %v1947 = vmul.bf16 %v1915, %v1915
    %v1948 = vmul.bf16 %v1916, %v1916
    %v1949 = vmul.bf16 %v1917, %v1917
    %v1950 = vmul.bf16 %v1918, %v1918
    %v1951 = vmul.bf16 %v1919, %v1919
    %v1952 = vmul.bf16 %v1920, %v1920
    %v1953 = vmul.bf16 %v1921, %v1921
    %v1954 = vmul.bf16 %v1922, %v1922
    %v1955 = vmul.bf16 %v1923, %v1923
    %v1956 = vmul.bf16 %v1924, %v1924
    %v1957 = vmul.bf16 %v1925, %v1925
    %v1958 = vmul.bf16 %v1926, %v1926
    %v1959 = vmul.bf16 %v1927, %v1927
    %v1960 = vmul.bf16 %v1928, %v1928
    %v1961 = vmul.bf16 %v1929, %v1929
    %v1962 = vmul.bf16 %v1930, %v1930
    %v1963 = vmul.bf16 %v1931, %v1931
    %v1964 = vmul.bf16 %v1932, %v1932
    %v1965 = vmul.bf16 %v1933, %v1933
    %v1966 = vmul.bf16 %v1934, %v1934
    %v1967 = vmul.bf16 %v1935, %v1935
    %v1968 = vmul.bf16 %v1936, %v1936
    %v1969 = vmul.bf16 %v1937, %v1937
    %v1970 = vmul.bf16 %v1938, %v1938
    %v1971 = vmul.bf16 %v1939, %v1939
    %v1972 = vmul.bf16 %v1940, %v1940
    %v1973 = vmul.bf16 %v1941, %v1941
    %v1974 = vmul.bf16 %v1942, %v1942
    %v1975 = vmul.bf16 %v1911, %v1943
    %v1976 = vmul.bf16 %v1912, %v1944
    %v1977 = vmul.bf16 %v1913, %v1945
    %v1978 = vmul.bf16 %v1914, %v1946
    %v1979 = vmul.bf16 %v1915, %v1947
    %v1980 = vmul.bf16 %v1916, %v1948
    %v1981 = vmul.bf16 %v1917, %v1949
    %v1982 = vmul.bf16 %v1918, %v1950
    %v1983 = vmul.bf16 %v1919, %v1951
    %v1984 = vmul.bf16 %v1920, %v1952
    %v1985 = vmul.bf16 %v1921, %v1953
    %v1986 = vmul.bf16 %v1922, %v1954
    %v1987 = vmul.bf16 %v1923, %v1955
    %v1988 = vmul.bf16 %v1924, %v1956
    %v1989 = vmul.bf16 %v1925, %v1957
    %v1990 = vmul.bf16 %v1926, %v1958
    %v1991 = vmul.bf16 %v1927, %v1959
    %v1992 = vmul.bf16 %v1928, %v1960
    %v1993 = vmul.bf16 %v1929, %v1961
    %v1994 = vmul.bf16 %v1930, %v1962
    %v1995 = vmul.bf16 %v1931, %v1963
    %v1996 = vmul.bf16 %v1932, %v1964
    %v1997 = vmul.bf16 %v1933, %v1965
    %v1998 = vmul.bf16 %v1934, %v1966
    %v1999 = vmul.bf16 %v1935, %v1967
    %v2000 = vmul.bf16 %v1936, %v1968
    %v2001 = vmul.bf16 %v1937, %v1969
    %v2002 = vmul.bf16 %v1938, %v1970
    %v2003 = vmul.bf16 %v1939, %v1971
    %v2004 = vmul.bf16 %v1940, %v1972
    %v2005 = vmul.bf16 %v1941, %v1973
    %v2006 = vmul.bf16 %v1942, %v1974
    %v2007 = vmul.bf16 %v1975, 1027030327
    %v2008 = vmul.bf16 %v1976, 1027030327
    %v2009 = vmul.bf16 %v1977, 1027030327
    %v2010 = vmul.bf16 %v1978, 1027030327
    %v2011 = vmul.bf16 %v1979, 1027030327
    %v2012 = vmul.bf16 %v1980, 1027030327
    %v2013 = vmul.bf16 %v1981, 1027030327
    %v2014 = vmul.bf16 %v1982, 1027030327
    %v2015 = vmul.bf16 %v1983, 1027030327
    %v2016 = vmul.bf16 %v1984, 1027030327
    %v2017 = vmul.bf16 %v1985, 1027030327
    %v2018 = vmul.bf16 %v1986, 1027030327
    %v2019 = vmul.bf16 %v1987, 1027030327
    %v2020 = vmul.bf16 %v1988, 1027030327
    %v2021 = vmul.bf16 %v1989, 1027030327
    %v2022 = vmul.bf16 %v1990, 1027030327
    %v2023 = vmul.bf16 %v1991, 1027030327
    %v2024 = vmul.bf16 %v1992, 1027030327
    %v2025 = vmul.bf16 %v1993, 1027030327
    %v2026 = vmul.bf16 %v1994, 1027030327
    %v2027 = vmul.bf16 %v1995, 1027030327
    %v2028 = vmul.bf16 %v1996, 1027030327
    %v2029 = vmul.bf16 %v1997, 1027030327
    %v2030 = vmul.bf16 %v1998, 1027030327
    %v2031 = vmul.bf16 %v1999, 1027030327
    %v2032 = vmul.bf16 %v2000, 1027030327
    %v2033 = vmul.bf16 %v2001, 1027030327
    %v2034 = vmul.bf16 %v2002, 1027030327
    %v2035 = vmul.bf16 %v2003, 1027030327
    %v2036 = vmul.bf16 %v2004, 1027030327
    %v2037 = vmul.bf16 %v2005, 1027030327
    %v2038 = vmul.bf16 %v2006, 1027030327
    %v2039 = vadd.bf16 %v1911, %v2007
    %v2040 = vadd.bf16 %v1912, %v2008
    %v2041 = vadd.bf16 %v1913, %v2009
    %v2042 = vadd.bf16 %v1914, %v2010
    %v2043 = vadd.bf16 %v1915, %v2011
    %v2044 = vadd.bf16 %v1916, %v2012
    %v2045 = vadd.bf16 %v1917, %v2013
    %v2046 = vadd.bf16 %v1918, %v2014
    %v2047 = vadd.bf16 %v1919, %v2015
    %v2048 = vadd.bf16 %v1920, %v2016
    %v2049 = vadd.bf16 %v1921, %v2017
    %v2050 = vadd.bf16 %v1922, %v2018
    %v2051 = vadd.bf16 %v1923, %v2019
    %v2052 = vadd.bf16 %v1924, %v2020
    %v2053 = vadd.bf16 %v1925, %v2021
    %v2054 = vadd.bf16 %v1926, %v2022
    %v2055 = vadd.bf16 %v1927, %v2023
    %v2056 = vadd.bf16 %v1928, %v2024
    %v2057 = vadd.bf16 %v1929, %v2025
    %v2058 = vadd.bf16 %v1930, %v2026
    %v2059 = vadd.bf16 %v1931, %v2027
    %v2060 = vadd.bf16 %v1932, %v2028
    %v2061 = vadd.bf16 %v1933, %v2029
    %v2062 = vadd.bf16 %v1934, %v2030
    %v2063 = vadd.bf16 %v1935, %v2031
    %v2064 = vadd.bf16 %v1936, %v2032
    %v2065 = vadd.bf16 %v1937, %v2033
    %v2066 = vadd.bf16 %v1938, %v2034
    %v2067 = vadd.bf16 %v1939, %v2035
    %v2068 = vadd.bf16 %v1940, %v2036
    %v2069 = vadd.bf16 %v1941, %v2037
    %v2070 = vadd.bf16 %v1942, %v2038
    %v2071 = vmul.bf16 %v2039, 1061961548
    %v2072 = vmul.bf16 %v2040, 1061961548
    %v2073 = vmul.bf16 %v2041, 1061961548
    %v2074 = vmul.bf16 %v2042, 1061961548
    %v2075 = vmul.bf16 %v2043, 1061961548
    %v2076 = vmul.bf16 %v2044, 1061961548
    %v2077 = vmul.bf16 %v2045, 1061961548
    %v2078 = vmul.bf16 %v2046, 1061961548
    %v2079 = vmul.bf16 %v2047, 1061961548
    %v2080 = vmul.bf16 %v2048, 1061961548
    %v2081 = vmul.bf16 %v2049, 1061961548
    %v2082 = vmul.bf16 %v2050, 1061961548
    %v2083 = vmul.bf16 %v2051, 1061961548
    %v2084 = vmul.bf16 %v2052, 1061961548
    %v2085 = vmul.bf16 %v2053, 1061961548
    %v2086 = vmul.bf16 %v2054, 1061961548
    %v2087 = vmul.bf16 %v2055, 1061961548
    %v2088 = vmul.bf16 %v2056, 1061961548
    %v2089 = vmul.bf16 %v2057, 1061961548
    %v2090 = vmul.bf16 %v2058, 1061961548
    %v2091 = vmul.bf16 %v2059, 1061961548
    %v2092 = vmul.bf16 %v2060, 1061961548
    %v2093 = vmul.bf16 %v2061, 1061961548
    %v2094 = vmul.bf16 %v2062, 1061961548
    %v2095 = vmul.bf16 %v2063, 1061961548
    %v2096 = vmul.bf16 %v2064, 1061961548
    %v2097 = vmul.bf16 %v2065, 1061961548
    %v2098 = vmul.bf16 %v2066, 1061961548
    %v2099 = vmul.bf16 %v2067, 1061961548
    %v2100 = vmul.bf16 %v2068, 1061961548
    %v2101 = vmul.bf16 %v2069, 1061961548
    %v2102 = vmul.bf16 %v2070, 1061961548
    %v2103 = vtanh.bf16.pop %v2071
    %v2104 = vtanh.bf16.pop %v2072
    %v2105 = vtanh.bf16.pop %v2073
    %v2106 = vtanh.bf16.pop %v2074
    %v2107 = vtanh.bf16.pop %v2075
    %v2108 = vtanh.bf16.pop %v2076
    %v2109 = vtanh.bf16.pop %v2077
    %v2110 = vtanh.bf16.pop %v2078
    %v2111 = vtanh.bf16.pop %v2079
    %v2112 = vtanh.bf16.pop %v2080
    %v2113 = vtanh.bf16.pop %v2081
    %v2114 = vtanh.bf16.pop %v2082
    %v2115 = vtanh.bf16.pop %v2083
    %v2116 = vtanh.bf16.pop %v2084
    %v2117 = vtanh.bf16.pop %v2085
    %v2118 = vtanh.bf16.pop %v2086
    %v2119 = vtanh.bf16.pop %v2087
    %v2120 = vtanh.bf16.pop %v2088
    %v2121 = vtanh.bf16.pop %v2089
    %v2122 = vtanh.bf16.pop %v2090
    %v2123 = vtanh.bf16.pop %v2091
    %v2124 = vtanh.bf16.pop %v2092
    %v2125 = vtanh.bf16.pop %v2093
    %v2126 = vtanh.bf16.pop %v2094
    %v2127 = vtanh.bf16.pop %v2095
    %v2128 = vtanh.bf16.pop %v2096
    %v2129 = vtanh.bf16.pop %v2097
    %v2130 = vtanh.bf16.pop %v2098
    %v2131 = vtanh.bf16.pop %v2099
    %v2132 = vtanh.bf16.pop %v2100
    %v2133 = vtanh.bf16.pop %v2101
    %v2134 = vtanh.bf16.pop %v2102
    %v2135 = vadd.bf16 %v2103, 1065369472
    %v2136 = vadd.bf16 %v2104, 1065369472
    %v2137 = vadd.bf16 %v2105, 1065369472
    %v2138 = vadd.bf16 %v2106, 1065369472
    %v2139 = vadd.bf16 %v2107, 1065369472
    %v2140 = vadd.bf16 %v2108, 1065369472
    %v2141 = vadd.bf16 %v2109, 1065369472
    %v2142 = vadd.bf16 %v2110, 1065369472
    %v2143 = vadd.bf16 %v2111, 1065369472
    %v2144 = vadd.bf16 %v2112, 1065369472
    %v2145 = vadd.bf16 %v2113, 1065369472
    %v2146 = vadd.bf16 %v2114, 1065369472
    %v2147 = vadd.bf16 %v2115, 1065369472
    %v2148 = vadd.bf16 %v2116, 1065369472
    %v2149 = vadd.bf16 %v2117, 1065369472
    %v2150 = vadd.bf16 %v2118, 1065369472
    %v2151 = vadd.bf16 %v2119, 1065369472
    %v2152 = vadd.bf16 %v2120, 1065369472
    %v2153 = vadd.bf16 %v2121, 1065369472
    %v2154 = vadd.bf16 %v2122, 1065369472
    %v2155 = vadd.bf16 %v2123, 1065369472
    %v2156 = vadd.bf16 %v2124, 1065369472
    %v2157 = vadd.bf16 %v2125, 1065369472
    %v2158 = vadd.bf16 %v2126, 1065369472
    %v2159 = vadd.bf16 %v2127, 1065369472
    %v2160 = vadd.bf16 %v2128, 1065369472
    %v2161 = vadd.bf16 %v2129, 1065369472
    %v2162 = vadd.bf16 %v2130, 1065369472
    %v2163 = vadd.bf16 %v2131, 1065369472
    %v2164 = vadd.bf16 %v2132, 1065369472
    %v2165 = vadd.bf16 %v2133, 1065369472
    %v2166 = vadd.bf16 %v2134, 1065369472
    %v2167 = vmul.bf16 %v2135, 1056980736
    %v2168 = vmul.bf16 %v2136, 1056980736
    %v2169 = vmul.bf16 %v2137, 1056980736
    %v2170 = vmul.bf16 %v2138, 1056980736
    %v2171 = vmul.bf16 %v2139, 1056980736
    %v2172 = vmul.bf16 %v2140, 1056980736
    %v2173 = vmul.bf16 %v2141, 1056980736
    %v2174 = vmul.bf16 %v2142, 1056980736
    %v2175 = vmul.bf16 %v2143, 1056980736
    %v2176 = vmul.bf16 %v2144, 1056980736
    %v2177 = vmul.bf16 %v2145, 1056980736
    %v2178 = vmul.bf16 %v2146, 1056980736
    %v2179 = vmul.bf16 %v2147, 1056980736
    %v2180 = vmul.bf16 %v2148, 1056980736
    %v2181 = vmul.bf16 %v2149, 1056980736
    %v2182 = vmul.bf16 %v2150, 1056980736
    %v2183 = vmul.bf16 %v2151, 1056980736
    %v2184 = vmul.bf16 %v2152, 1056980736
    %v2185 = vmul.bf16 %v2153, 1056980736
    %v2186 = vmul.bf16 %v2154, 1056980736
    %v2187 = vmul.bf16 %v2155, 1056980736
    %v2188 = vmul.bf16 %v2156, 1056980736
    %v2189 = vmul.bf16 %v2157, 1056980736
    %v2190 = vmul.bf16 %v2158, 1056980736
    %v2191 = vmul.bf16 %v2159, 1056980736
    %v2192 = vmul.bf16 %v2160, 1056980736
    %v2193 = vmul.bf16 %v2161, 1056980736
    %v2194 = vmul.bf16 %v2162, 1056980736
    %v2195 = vmul.bf16 %v2163, 1056980736
    %v2196 = vmul.bf16 %v2164, 1056980736
    %v2197 = vmul.bf16 %v2165, 1056980736
    %v2198 = vmul.bf16 %v2166, 1056980736
    %v2199 = vmul.bf16 %v1911, %v2167
    %v2200 = vmul.bf16 %v1912, %v2168
    %v2201 = vmul.bf16 %v1913, %v2169
    %v2202 = vmul.bf16 %v1914, %v2170
    %v2203 = vmul.bf16 %v1915, %v2171
    %v2204 = vmul.bf16 %v1916, %v2172
    %v2205 = vmul.bf16 %v1917, %v2173
    %v2206 = vmul.bf16 %v1918, %v2174
    %v2207 = vmul.bf16 %v1919, %v2175
    %v2208 = vmul.bf16 %v1920, %v2176
    %v2209 = vmul.bf16 %v1921, %v2177
    %v2210 = vmul.bf16 %v1922, %v2178
    %v2211 = vmul.bf16 %v1923, %v2179
    %v2212 = vmul.bf16 %v1924, %v2180
    %v2213 = vmul.bf16 %v1925, %v2181
    %v2214 = vmul.bf16 %v1926, %v2182
    %v2215 = vmul.bf16 %v1927, %v2183
    %v2216 = vmul.bf16 %v1928, %v2184
    %v2217 = vmul.bf16 %v1929, %v2185
    %v2218 = vmul.bf16 %v1930, %v2186
    %v2219 = vmul.bf16 %v1931, %v2187
    %v2220 = vmul.bf16 %v1932, %v2188
    %v2221 = vmul.bf16 %v1933, %v2189
    %v2222 = vmul.bf16 %v1934, %v2190
    %v2223 = vmul.bf16 %v1935, %v2191
    %v2224 = vmul.bf16 %v1936, %v2192
    %v2225 = vmul.bf16 %v1937, %v2193
    %v2226 = vmul.bf16 %v1938, %v2194
    %v2227 = vmul.bf16 %v1939, %v2195
    %v2228 = vmul.bf16 %v1940, %v2196
    %v2229 = vmul.bf16 %v1941, %v2197
    %v2230 = vmul.bf16 %v1942, %v2198
    %v2231 = vld [vmem:[%s10] sm:$0xf]
    %v2232 = vld [vmem:[%s10 + $0x4] sm:$0xf]
    %v2233 = vld [vmem:[%s10 + $0x8] sm:$0xf]
    %v2234 = vld [vmem:[%s10 + $0xc] sm:$0xf]
    %v2235 = vld [vmem:[%s10 + $0x10] sm:$0xf]
    %v2236 = vld [vmem:[%s10 + $0x14] sm:$0xf]
    %v2237 = vld [vmem:[%s10 + $0x18] sm:$0xf]
    %v2238 = vld [vmem:[%s10 + $0x1c] sm:$0xf]
    %v2239 = vld [vmem:[%s10 + $0x20] sm:$0xf]
    %v2240 = vld [vmem:[%s10 + $0x24] sm:$0xf]
    %v2241 = vld [vmem:[%s10 + $0x28] sm:$0xf]
    %v2242 = vld [vmem:[%s10 + $0x2c] sm:$0xf]
    %v2243 = vld [vmem:[%s10 + $0x30] sm:$0xf]
    %v2244 = vld [vmem:[%s10 + $0x34] sm:$0xf]
    %v2245 = vld [vmem:[%s10 + $0x38] sm:$0xf]
    %v2246 = vld [vmem:[%s10 + $0x3c] sm:$0xf]
    %v2247 = vld [vmem:[%s11] sm:$0x1]
    %v2249 = vlaneseq
    %v2250 = vshrl.u32 %v2249, 7
    %v2251 = vsub.s32 0, %v2250
    %v2252 = vrot.slane %v2247, %v2251
    %v2270 = vunpack.c.l.b16 %v2231
    %v2271 = vunpack.c.l.b16 %v2232
    %v2272 = vunpack.c.l.b16 %v2233
    %v2273 = vunpack.c.l.b16 %v2234
    %v2274 = vunpack.c.l.b16 %v2235
    %v2275 = vunpack.c.l.b16 %v2236
    %v2276 = vunpack.c.l.b16 %v2237
    %v2277 = vunpack.c.l.b16 %v2238
    %v2278 = vunpack.c.l.b16 %v2239
    %v2279 = vunpack.c.l.b16 %v2240
    %v2280 = vunpack.c.l.b16 %v2241
    %v2281 = vunpack.c.l.b16 %v2242
    %v2282 = vunpack.c.l.b16 %v2243
    %v2283 = vunpack.c.l.b16 %v2244
    %v2284 = vunpack.c.l.b16 %v2245
    %v2285 = vunpack.c.l.b16 %v2246
    %v2286 = vpack.c.b16 %v2271, %v2270
    %v2287 = vpack.c.b16 %v2273, %v2272
    %v2288 = vpack.c.b16 %v2275, %v2274
    %v2289 = vpack.c.b16 %v2277, %v2276
    %v2290 = vpack.c.b16 %v2279, %v2278
    %v2291 = vpack.c.b16 %v2281, %v2280
    %v2292 = vpack.c.b16 %v2283, %v2282
    %v2293 = vpack.c.b16 %v2285, %v2284
    %2302 = vmatprep.subr.bf16.mxu0 0
    %2303 = vmatpush1.bf16.msra.mxu0 %v2293
    %2304 = vmatprep.subr.bf16.mxu0 0
    %2305 = vmatpush1.bf16.msra.mxu0 %v2292
    %2306 = vmatprep.subr.bf16.mxu0 0
    %2307 = vmatpush1.bf16.msra.mxu0 %v2291
    %2308 = vmatprep.subr.bf16.mxu0 0
    %2309 = vmatpush1.bf16.msra.mxu0 %v2290
    %2310 = vmatprep.subr.bf16.mxu0 0
    %2311 = vmatpush1.bf16.msra.mxu0 %v2289
    %2312 = vmatprep.subr.bf16.mxu0 0
    %2313 = vmatpush1.bf16.msra.mxu0 %v2288
    %2314 = vmatprep.subr.bf16.mxu0 0
    %2315 = vmatpush1.bf16.msra.mxu0 %v2287
    %2316 = vmatprep.subr.bf16.mxu0 0
    %2317 = vmatpush1.bf16.msra.mxu0 %v2286
    %2318 = vmatprep.subr.bf16.mxu0 0
    %2319 = vmatpush2.bf16.msra.mxu0 0
    %2320 = vmatprep.subr.bf16.mxu0 0
    %2321 = vmatpush2.bf16.msra.mxu0 0
    %2322 = vmatprep.subr.bf16.mxu0 0
    %2323 = vmatpush2.bf16.msra.mxu0 0
    %2324 = vmatprep.subr.bf16.mxu0 0
    %2325 = vmatpush2.bf16.msra.mxu0 0
    %2326 = vmatprep.subr.bf16.mxu0 0
    %2327 = vmatpush2.bf16.msra.mxu0 0
    %2328 = vmatprep.subr.bf16.mxu0 0
    %2329 = vmatpush2.bf16.msra.mxu0 0
    %2330 = vmatprep.subr.bf16.mxu0 0
    %2331 = vmatpush2.bf16.msra.mxu0 0
    %2332 = vmatprep.subr.bf16.mxu0 0
    %2333 = vmatpush2.bf16.msra.mxu0 0
    %2334 = vmatprep.mubr.bf16.mxu0 0
    %2335 = vmatmul.mubr.bf16.gmra.mxu0 %v2199
    %v2336 = vpop.f32.mrf.mxu0
    %v2337 = vadd.f32 %v2252, %v2336
    %v2338 = vpop.f32.mrf.mxu0
    %v2339 = vpop.f32.mrf.mxu0
    %v2340 = vadd.f32 %v2252, %v2339
    %v2341 = vpop.f32.mrf.mxu0
    %2342 = vmatprep.mubr.bf16.mxu0 0
    %2343 = vmatmul.mubr.bf16.gmra.mxu0 %v2200
    %v2344 = vpop.f32.mrf.mxu0
    %v2345 = vadd.f32 %v2252, %v2344
    %v2346 = vpop.f32.mrf.mxu0
    %v2347 = vpop.f32.mrf.mxu0
    %v2348 = vadd.f32 %v2252, %v2347
    %v2349 = vpop.f32.mrf.mxu0
    %2350 = vmatprep.mubr.bf16.mxu0 0
    %2351 = vmatmul.mubr.bf16.gmra.mxu0 %v2201
    %v2352 = vpop.f32.mrf.mxu0
    %v2353 = vadd.f32 %v2252, %v2352
    %v2354 = vpop.f32.mrf.mxu0
    %v2355 = vpop.f32.mrf.mxu0
    %v2356 = vadd.f32 %v2252, %v2355
    %v2357 = vpop.f32.mrf.mxu0
    %2358 = vmatprep.mubr.bf16.mxu0 0
    %2359 = vmatmul.mubr.bf16.gmra.mxu0 %v2202
    %v2360 = vpop.f32.mrf.mxu0
    %v2361 = vadd.f32 %v2252, %v2360
    %v2362 = vpop.f32.mrf.mxu0
    %v2363 = vpop.f32.mrf.mxu0
    %v2364 = vadd.f32 %v2252, %v2363
    %v2365 = vpop.f32.mrf.mxu0
    %2366 = vmatprep.mubr.bf16.mxu0 0
    %2367 = vmatmul.mubr.bf16.gmra.mxu0 %v2203
    %v2368 = vpop.f32.mrf.mxu0
    %v2369 = vadd.f32 %v2252, %v2368
    %v2370 = vpop.f32.mrf.mxu0
    %v2371 = vpop.f32.mrf.mxu0
    %v2372 = vadd.f32 %v2252, %v2371
    %v2373 = vpop.f32.mrf.mxu0
    %2374 = vmatprep.mubr.bf16.mxu0 0
    %2375 = vmatmul.mubr.bf16.gmra.mxu0 %v2204
    %v2376 = vpop.f32.mrf.mxu0
    %v2377 = vadd.f32 %v2252, %v2376
    %v2378 = vpop.f32.mrf.mxu0
    %v2379 = vpop.f32.mrf.mxu0
    %v2380 = vadd.f32 %v2252, %v2379
    %v2381 = vpop.f32.mrf.mxu0
    %2382 = vmatprep.mubr.bf16.mxu0 0
    %2383 = vmatmul.mubr.bf16.gmra.mxu0 %v2205
    %v2384 = vpop.f32.mrf.mxu0
    %v2385 = vadd.f32 %v2252, %v2384
    %v2386 = vpop.f32.mrf.mxu0
    %v2387 = vpop.f32.mrf.mxu0
    %v2388 = vadd.f32 %v2252, %v2387
    %v2389 = vpop.f32.mrf.mxu0
    %2390 = vmatprep.mubr.bf16.mxu0 0
    %2391 = vmatmul.mubr.bf16.gmra.mxu0 %v2206
    %v2392 = vpop.f32.mrf.mxu0
    %v2393 = vadd.f32 %v2252, %v2392
    %v2394 = vpop.f32.mrf.mxu0
    %v2395 = vpop.f32.mrf.mxu0
    %v2396 = vadd.f32 %v2252, %v2395
    %v2397 = vpop.f32.mrf.mxu0
    %2398 = vmatprep.mubr.bf16.mxu0 0
    %2399 = vmatmul.mubr.bf16.gmra.mxu0 %v2207
    %v2400 = vpop.f32.mrf.mxu0
    %v2401 = vadd.f32 %v2252, %v2400
    %v2402 = vpop.f32.mrf.mxu0
    %v2403 = vpop.f32.mrf.mxu0
    %v2404 = vadd.f32 %v2252, %v2403
    %v2405 = vpop.f32.mrf.mxu0
    %2406 = vmatprep.mubr.bf16.mxu0 0
    %2407 = vmatmul.mubr.bf16.gmra.mxu0 %v2208
    %v2408 = vpop.f32.mrf.mxu0
    %v2409 = vadd.f32 %v2252, %v2408
    %v2410 = vpop.f32.mrf.mxu0
    %v2411 = vpop.f32.mrf.mxu0
    %v2412 = vadd.f32 %v2252, %v2411
    %v2413 = vpop.f32.mrf.mxu0
    %2414 = vmatprep.mubr.bf16.mxu0 0
    %2415 = vmatmul.mubr.bf16.gmra.mxu0 %v2209
    %v2416 = vpop.f32.mrf.mxu0
    %v2417 = vadd.f32 %v2252, %v2416
    %v2418 = vpop.f32.mrf.mxu0
    %v2419 = vpop.f32.mrf.mxu0
    %v2420 = vadd.f32 %v2252, %v2419
    %v2421 = vpop.f32.mrf.mxu0
    %2422 = vmatprep.mubr.bf16.mxu0 0
    %2423 = vmatmul.mubr.bf16.gmra.mxu0 %v2210
    %v2424 = vpop.f32.mrf.mxu0
    %v2425 = vadd.f32 %v2252, %v2424
    %v2426 = vpop.f32.mrf.mxu0
    %v2427 = vpop.f32.mrf.mxu0
    %v2428 = vadd.f32 %v2252, %v2427
    %v2429 = vpop.f32.mrf.mxu0
    %2430 = vmatprep.mubr.bf16.mxu0 0
    %2431 = vmatmul.mubr.bf16.gmra.mxu0 %v2211
    %v2432 = vpop.f32.mrf.mxu0
    %v2433 = vadd.f32 %v2252, %v2432
    %v2434 = vpop.f32.mrf.mxu0
    %v2435 = vpop.f32.mrf.mxu0
    %v2436 = vadd.f32 %v2252, %v2435
    %v2437 = vpop.f32.mrf.mxu0
    %2438 = vmatprep.mubr.bf16.mxu0 0
    %2439 = vmatmul.mubr.bf16.gmra.mxu0 %v2212
    %v2440 = vpop.f32.mrf.mxu0
    %v2441 = vadd.f32 %v2252, %v2440
    %v2442 = vpop.f32.mrf.mxu0
    %v2443 = vpop.f32.mrf.mxu0
    %v2444 = vadd.f32 %v2252, %v2443
    %v2445 = vpop.f32.mrf.mxu0
    %2446 = vmatprep.mubr.bf16.mxu0 0
    %2447 = vmatmul.mubr.bf16.gmra.mxu0 %v2213
    %v2448 = vpop.f32.mrf.mxu0
    %v2449 = vadd.f32 %v2252, %v2448
    %v2450 = vpop.f32.mrf.mxu0
    %v2451 = vpop.f32.mrf.mxu0
    %v2452 = vadd.f32 %v2252, %v2451
    %v2453 = vpop.f32.mrf.mxu0
    %2454 = vmatprep.mubr.bf16.mxu0 0
    %2455 = vmatmul.mubr.bf16.gmra.mxu0 %v2214
    %v2456 = vpop.f32.mrf.mxu0
    %v2457 = vadd.f32 %v2252, %v2456
    %v2458 = vpop.f32.mrf.mxu0
    %v2459 = vpop.f32.mrf.mxu0
    %v2460 = vadd.f32 %v2252, %v2459
    %v2461 = vpop.f32.mrf.mxu0
    %2462 = vmatprep.mubr.bf16.mxu0 0
    %2463 = vmatmul.mubr.bf16.gmra.mxu0 %v2215
    %v2464 = vpop.f32.mrf.mxu0
    %v2465 = vadd.f32 %v2252, %v2464
    %v2466 = vpop.f32.mrf.mxu0
    %v2467 = vpop.f32.mrf.mxu0
    %v2468 = vadd.f32 %v2252, %v2467
    %v2469 = vpop.f32.mrf.mxu0
    %2470 = vmatprep.mubr.bf16.mxu0 0
    %2471 = vmatmul.mubr.bf16.gmra.mxu0 %v2216
    %v2472 = vpop.f32.mrf.mxu0
    %v2473 = vadd.f32 %v2252, %v2472
    %v2474 = vpop.f32.mrf.mxu0
    %v2475 = vpop.f32.mrf.mxu0
    %v2476 = vadd.f32 %v2252, %v2475
    %v2477 = vpop.f32.mrf.mxu0
    %2478 = vmatprep.mubr.bf16.mxu0 0
    %2479 = vmatmul.mubr.bf16.gmra.mxu0 %v2217
    %v2480 = vpop.f32.mrf.mxu0
    %v2481 = vadd.f32 %v2252, %v2480
    %v2482 = vpop.f32.mrf.mxu0
    %v2483 = vpop.f32.mrf.mxu0
    %v2484 = vadd.f32 %v2252, %v2483
    %v2485 = vpop.f32.mrf.mxu0
    %2486 = vmatprep.mubr.bf16.mxu0 0
    %2487 = vmatmul.mubr.bf16.gmra.mxu0 %v2218
    %v2488 = vpop.f32.mrf.mxu0
    %v2489 = vadd.f32 %v2252, %v2488
    %v2490 = vpop.f32.mrf.mxu0
    %v2491 = vpop.f32.mrf.mxu0
    %v2492 = vadd.f32 %v2252, %v2491
    %v2493 = vpop.f32.mrf.mxu0
    %2494 = vmatprep.mubr.bf16.mxu0 0
    %2495 = vmatmul.mubr.bf16.gmra.mxu0 %v2219
    %v2496 = vpop.f32.mrf.mxu0
    %v2497 = vadd.f32 %v2252, %v2496
    %v2498 = vpop.f32.mrf.mxu0
    %v2499 = vpop.f32.mrf.mxu0
    %v2500 = vadd.f32 %v2252, %v2499
    %v2501 = vpop.f32.mrf.mxu0
    %2502 = vmatprep.mubr.bf16.mxu0 0
    %2503 = vmatmul.mubr.bf16.gmra.mxu0 %v2220
    %v2504 = vpop.f32.mrf.mxu0
    %v2505 = vadd.f32 %v2252, %v2504
    %v2506 = vpop.f32.mrf.mxu0
    %v2507 = vpop.f32.mrf.mxu0
    %v2508 = vadd.f32 %v2252, %v2507
    %v2509 = vpop.f32.mrf.mxu0
    %2510 = vmatprep.mubr.bf16.mxu0 0
    %2511 = vmatmul.mubr.bf16.gmra.mxu0 %v2221
    %v2512 = vpop.f32.mrf.mxu0
    %v2513 = vadd.f32 %v2252, %v2512
    %v2514 = vpop.f32.mrf.mxu0
    %v2515 = vpop.f32.mrf.mxu0
    %v2516 = vadd.f32 %v2252, %v2515
    %v2517 = vpop.f32.mrf.mxu0
    %2518 = vmatprep.mubr.bf16.mxu0 0
    %2519 = vmatmul.mubr.bf16.gmra.mxu0 %v2222
    %v2520 = vpop.f32.mrf.mxu0
    %v2521 = vadd.f32 %v2252, %v2520
    %v2522 = vpop.f32.mrf.mxu0
    %v2523 = vpop.f32.mrf.mxu0
    %v2524 = vadd.f32 %v2252, %v2523
    %v2525 = vpop.f32.mrf.mxu0
    %2526 = vmatprep.mubr.bf16.mxu0 0
    %2527 = vmatmul.mubr.bf16.gmra.mxu0 %v2223
    %v2528 = vpop.f32.mrf.mxu0
    %v2529 = vadd.f32 %v2252, %v2528
    %v2530 = vpop.f32.mrf.mxu0
    %v2531 = vpop.f32.mrf.mxu0
    %v2532 = vadd.f32 %v2252, %v2531
    %v2533 = vpop.f32.mrf.mxu0
    %2534 = vmatprep.mubr.bf16.mxu0 0
    %2535 = vmatmul.mubr.bf16.gmra.mxu0 %v2224
    %v2536 = vpop.f32.mrf.mxu0
    %v2537 = vadd.f32 %v2252, %v2536
    %v2538 = vpop.f32.mrf.mxu0
    %v2539 = vpop.f32.mrf.mxu0
    %v2540 = vadd.f32 %v2252, %v2539
    %v2541 = vpop.f32.mrf.mxu0
    %2542 = vmatprep.mubr.bf16.mxu0 0
    %2543 = vmatmul.mubr.bf16.gmra.mxu0 %v2225
    %v2544 = vpop.f32.mrf.mxu0
    %v2545 = vadd.f32 %v2252, %v2544
    %v2546 = vpop.f32.mrf.mxu0
    %v2547 = vpop.f32.mrf.mxu0
    %v2548 = vadd.f32 %v2252, %v2547
    %v2549 = vpop.f32.mrf.mxu0
    %2550 = vmatprep.mubr.bf16.mxu0 0
    %2551 = vmatmul.mubr.bf16.gmra.mxu0 %v2226
    %v2552 = vpop.f32.mrf.mxu0
    %v2553 = vadd.f32 %v2252, %v2552
    %v2554 = vpop.f32.mrf.mxu0
    %v2555 = vpop.f32.mrf.mxu0
    %v2556 = vadd.f32 %v2252, %v2555
    %v2557 = vpop.f32.mrf.mxu0
    %2558 = vmatprep.mubr.bf16.mxu0 0
    %2559 = vmatmul.mubr.bf16.gmra.mxu0 %v2227
    %v2560 = vpop.f32.mrf.mxu0
    %v2561 = vadd.f32 %v2252, %v2560
    %v2562 = vpop.f32.mrf.mxu0
    %v2563 = vpop.f32.mrf.mxu0
    %v2564 = vadd.f32 %v2252, %v2563
    %v2565 = vpop.f32.mrf.mxu0
    %2566 = vmatprep.mubr.bf16.mxu0 0
    %2567 = vmatmul.mubr.bf16.gmra.mxu0 %v2228
    %v2568 = vpop.f32.mrf.mxu0
    %v2569 = vadd.f32 %v2252, %v2568
    %v2570 = vpop.f32.mrf.mxu0
    %v2571 = vpop.f32.mrf.mxu0
    %v2572 = vadd.f32 %v2252, %v2571
    %v2573 = vpop.f32.mrf.mxu0
    %2574 = vmatprep.mubr.bf16.mxu0 0
    %2575 = vmatmul.mubr.bf16.gmra.mxu0 %v2229
    %v2576 = vpop.f32.mrf.mxu0
    %v2577 = vadd.f32 %v2252, %v2576
    %v2578 = vpop.f32.mrf.mxu0
    %v2579 = vpop.f32.mrf.mxu0
    %v2580 = vadd.f32 %v2252, %v2579
    %v2581 = vpop.f32.mrf.mxu0
    %2582 = vmatprep.mubr.bf16.mxu0 0
    %2583 = vmatmul.mubr.bf16.gmra.mxu0 %v2230
    %v2584 = vpop.f32.mrf.mxu0
    %v2585 = vadd.f32 %v2252, %v2584
    %v2586 = vpop.f32.mrf.mxu0
    %v2587 = vpop.f32.mrf.mxu0
    %v2588 = vadd.f32 %v2252, %v2587
    %v2589 = vpop.f32.mrf.mxu0
    %2590 = vdwg.mxu0
    %v2591 = vadd.f32 %v418, %v2337
    %v2592 = vadd.f32 %v421, %v2340
    %v2593 = vadd.f32 %v426, %v2345
    %v2594 = vadd.f32 %v429, %v2348
    %v2595 = vadd.f32 %v434, %v2353
    %v2596 = vadd.f32 %v437, %v2356
    %v2597 = vadd.f32 %v442, %v2361
    %v2598 = vadd.f32 %v445, %v2364
    %v2599 = vadd.f32 %v450, %v2369
    %v2600 = vadd.f32 %v453, %v2372
    %v2601 = vadd.f32 %v458, %v2377
    %v2602 = vadd.f32 %v461, %v2380
    %v2603 = vadd.f32 %v466, %v2385
    %v2604 = vadd.f32 %v469, %v2388
    %v2605 = vadd.f32 %v474, %v2393
    %v2606 = vadd.f32 %v477, %v2396
    %v2607 = vadd.f32 %v482, %v2401
    %v2608 = vadd.f32 %v485, %v2404
    %v2609 = vadd.f32 %v490, %v2409
    %v2610 = vadd.f32 %v493, %v2412
    %v2611 = vadd.f32 %v498, %v2417
    %v2612 = vadd.f32 %v501, %v2420
    %v2613 = vadd.f32 %v506, %v2425
    %v2614 = vadd.f32 %v509, %v2428
    %v2615 = vadd.f32 %v514, %v2433
    %v2616 = vadd.f32 %v517, %v2436
    %v2617 = vadd.f32 %v522, %v2441
    %v2618 = vadd.f32 %v525, %v2444
    %v2619 = vadd.f32 %v530, %v2449
    %v2620 = vadd.f32 %v533, %v2452
    %v2621 = vadd.f32 %v538, %v2457
    %v2622 = vadd.f32 %v541, %v2460
    %v2623 = vadd.f32 %v546, %v2465
    %v2624 = vadd.f32 %v549, %v2468
    %v2625 = vadd.f32 %v554, %v2473
    %v2626 = vadd.f32 %v557, %v2476
    %v2627 = vadd.f32 %v562, %v2481
    %v2628 = vadd.f32 %v565, %v2484
    %v2629 = vadd.f32 %v570, %v2489
    %v2630 = vadd.f32 %v573, %v2492
    %v2631 = vadd.f32 %v578, %v2497
    %v2632 = vadd.f32 %v581, %v2500
    %v2633 = vadd.f32 %v586, %v2505
    %v2634 = vadd.f32 %v589, %v2508
    %v2635 = vadd.f32 %v594, %v2513
    %v2636 = vadd.f32 %v597, %v2516
    %v2637 = vadd.f32 %v602, %v2521
    %v2638 = vadd.f32 %v605, %v2524
    %v2639 = vadd.f32 %v610, %v2529
    %v2640 = vadd.f32 %v613, %v2532
    %v2641 = vadd.f32 %v618, %v2537
    %v2642 = vadd.f32 %v621, %v2540
    %v2643 = vadd.f32 %v626, %v2545
    %v2644 = vadd.f32 %v629, %v2548
    %v2645 = vadd.f32 %v634, %v2553
    %v2646 = vadd.f32 %v637, %v2556
    %v2647 = vadd.f32 %v642, %v2561
    %v2648 = vadd.f32 %v645, %v2564
    %v2649 = vadd.f32 %v650, %v2569
    %v2650 = vadd.f32 %v653, %v2572
    %v2651 = vadd.f32 %v658, %v2577
    %v2652 = vadd.f32 %v661, %v2580
    %v2653 = vadd.f32 %v666, %v2585
    %v2654 = vadd.f32 %v669, %v2588
    %v2655 = vld [vmem:[%s2] sm:$0xff]
    %v2656 = vld [vmem:[%s2 + $0x8] sm:$0xff]
    %v2657 = vld [vmem:[%s2 + $0x10] sm:$0xff]
    %v2658 = vld [vmem:[%s2 + $0x18] sm:$0xff]
    %v2659 = vld [vmem:[%s2 + $0x20] sm:$0xff]
    %v2660 = vld [vmem:[%s2 + $0x28] sm:$0xff]
    %v2661 = vld [vmem:[%s2 + $0x30] sm:$0xff]
    %v2662 = vld [vmem:[%s2 + $0x38] sm:$0xff]
    %v2663 = vld [vmem:[%s2 + $0x40] sm:$0xff]
    %v2664 = vld [vmem:[%s2 + $0x48] sm:$0xff]
    %v2665 = vld [vmem:[%s2 + $0x50] sm:$0xff]
    %v2666 = vld [vmem:[%s2 + $0x58] sm:$0xff]
    %v2667 = vld [vmem:[%s2 + $0x60] sm:$0xff]
    %v2668 = vld [vmem:[%s2 + $0x68] sm:$0xff]
    %v2669 = vld [vmem:[%s2 + $0x70] sm:$0xff]
    %v2670 = vld [vmem:[%s2 + $0x78] sm:$0xff]
    %v2671 = vld [vmem:[%s2 + $0x80] sm:$0xff]
    %v2672 = vld [vmem:[%s2 + $0x88] sm:$0xff]
    %v2673 = vld [vmem:[%s2 + $0x90] sm:$0xff]
    %v2674 = vld [vmem:[%s2 + $0x98] sm:$0xff]
    %v2675 = vld [vmem:[%s2 + $0xa0] sm:$0xff]
    %v2676 = vld [vmem:[%s2 + $0xa8] sm:$0xff]
    %v2677 = vld [vmem:[%s2 + $0xb0] sm:$0xff]
    %v2678 = vld [vmem:[%s2 + $0xb8] sm:$0xff]
    %v2679 = vld [vmem:[%s2 + $0xc0] sm:$0xff]
    %v2680 = vld [vmem:[%s2 + $0xc8] sm:$0xff]
    %v2681 = vld [vmem:[%s2 + $0xd0] sm:$0xff]
    %v2682 = vld [vmem:[%s2 + $0xd8] sm:$0xff]
    %v2683 = vld [vmem:[%s2 + $0xe0] sm:$0xff]
    %v2684 = vld [vmem:[%s2 + $0xe8] sm:$0xff]
    %v2685 = vld [vmem:[%s2 + $0xf0] sm:$0xff]
    %v2686 = vld [vmem:[%s2 + $0xf8] sm:$0xff]
    %v2687 = vld [vmem:[%s2 + $0x100] sm:$0xff]
    %v2688 = vld [vmem:[%s2 + $0x108] sm:$0xff]
    %v2689 = vld [vmem:[%s2 + $0x110] sm:$0xff]
    %v2690 = vld [vmem:[%s2 + $0x118] sm:$0xff]
    %v2691 = vld [vmem:[%s2 + $0x120] sm:$0xff]
    %v2692 = vld [vmem:[%s2 + $0x128] sm:$0xff]
    %v2693 = vld [vmem:[%s2 + $0x130] sm:$0xff]
    %v2694 = vld [vmem:[%s2 + $0x138] sm:$0xff]
    %v2695 = vld [vmem:[%s2 + $0x140] sm:$0xff]
    %v2696 = vld [vmem:[%s2 + $0x148] sm:$0xff]
    %v2697 = vld [vmem:[%s2 + $0x150] sm:$0xff]
    %v2698 = vld [vmem:[%s2 + $0x158] sm:$0xff]
    %v2699 = vld [vmem:[%s2 + $0x160] sm:$0xff]
    %v2700 = vld [vmem:[%s2 + $0x168] sm:$0xff]
    %v2701 = vld [vmem:[%s2 + $0x170] sm:$0xff]
    %v2702 = vld [vmem:[%s2 + $0x178] sm:$0xff]
    %v2703 = vld [vmem:[%s2 + $0x180] sm:$0xff]
    %v2704 = vld [vmem:[%s2 + $0x188] sm:$0xff]
    %v2705 = vld [vmem:[%s2 + $0x190] sm:$0xff]
    %v2706 = vld [vmem:[%s2 + $0x198] sm:$0xff]
    %v2707 = vld [vmem:[%s2 + $0x1a0] sm:$0xff]
    %v2708 = vld [vmem:[%s2 + $0x1a8] sm:$0xff]
    %v2709 = vld [vmem:[%s2 + $0x1b0] sm:$0xff]
    %v2710 = vld [vmem:[%s2 + $0x1b8] sm:$0xff]
    %v2711 = vld [vmem:[%s2 + $0x1c0] sm:$0xff]
    %v2712 = vld [vmem:[%s2 + $0x1c8] sm:$0xff]
    %v2713 = vld [vmem:[%s2 + $0x1d0] sm:$0xff]
    %v2714 = vld [vmem:[%s2 + $0x1d8] sm:$0xff]
    %v2715 = vld [vmem:[%s2 + $0x1e0] sm:$0xff]
    %v2716 = vld [vmem:[%s2 + $0x1e8] sm:$0xff]
    %v2717 = vld [vmem:[%s2 + $0x1f0] sm:$0xff]
    %v2718 = vld [vmem:[%s2 + $0x1f8] sm:$0xff]
    %2720 = vset.pattern.permute.xlu0 0
    %2721 = vperm.xlu0 %2720, %v2655
    %v2722 = vpop.permute.xlu0 %2721
    %2725 = vset.pattern.permute.xlu0 0
    %2726 = vperm.xlu0 %2725, %v2656
    %v2727 = vpop.permute.xlu0 %2726
    %2730 = vset.pattern.permute.xlu0 0
    %2731 = vperm.xlu0 %2730, %v2657
    %v2732 = vpop.permute.xlu0 %2731
    %2735 = vset.pattern.permute.xlu0 0
    %2736 = vperm.xlu0 %2735, %v2658
    %v2737 = vpop.permute.xlu0 %2736
    %2740 = vset.pattern.permute.xlu0 0
    %2741 = vperm.xlu0 %2740, %v2659
    %v2742 = vpop.permute.xlu0 %2741
    %2745 = vset.pattern.permute.xlu0 0
    %2746 = vperm.xlu0 %2745, %v2660
    %v2747 = vpop.permute.xlu0 %2746
    %2750 = vset.pattern.permute.xlu0 0
    %2751 = vperm.xlu0 %2750, %v2661
    %v2752 = vpop.permute.xlu0 %2751
    %2755 = vset.pattern.permute.xlu0 0
    %2756 = vperm.xlu0 %2755, %v2662
    %v2757 = vpop.permute.xlu0 %2756
    %2760 = vset.pattern.permute.xlu0 0
    %2761 = vperm.xlu0 %2760, %v2663
    %v2762 = vpop.permute.xlu0 %2761
    %2765 = vset.pattern.permute.xlu0 0
    %2766 = vperm.xlu0 %2765, %v2664
    %v2767 = vpop.permute.xlu0 %2766
    %2770 = vset.pattern.permute.xlu0 0
    %2771 = vperm.xlu0 %2770, %v2665
    %v2772 = vpop.permute.xlu0 %2771
    %2775 = vset.pattern.permute.xlu0 0
    %2776 = vperm.xlu0 %2775, %v2666
    %v2777 = vpop.permute.xlu0 %2776
    %2780 = vset.pattern.permute.xlu0 0
    %2781 = vperm.xlu0 %2780, %v2667
    %v2782 = vpop.permute.xlu0 %2781
    %2785 = vset.pattern.permute.xlu0 0
    %2786 = vperm.xlu0 %2785, %v2668
    %v2787 = vpop.permute.xlu0 %2786
    %2790 = vset.pattern.permute.xlu0 0
    %2791 = vperm.xlu0 %2790, %v2669
    %v2792 = vpop.permute.xlu0 %2791
    %2795 = vset.pattern.permute.xlu0 0
    %2796 = vperm.xlu0 %2795, %v2670
    %v2797 = vpop.permute.xlu0 %2796
    %2800 = vset.pattern.permute.xlu0 0
    %2801 = vperm.xlu0 %2800, %v2671
    %v2802 = vpop.permute.xlu0 %2801
    %2805 = vset.pattern.permute.xlu0 0
    %2806 = vperm.xlu0 %2805, %v2672
    %v2807 = vpop.permute.xlu0 %2806
    %2810 = vset.pattern.permute.xlu0 0
    %2811 = vperm.xlu0 %2810, %v2673
    %v2812 = vpop.permute.xlu0 %2811
    %2815 = vset.pattern.permute.xlu0 0
    %2816 = vperm.xlu0 %2815, %v2674
    %v2817 = vpop.permute.xlu0 %2816
    %2820 = vset.pattern.permute.xlu0 0
    %2821 = vperm.xlu0 %2820, %v2675
    %v2822 = vpop.permute.xlu0 %2821
    %2825 = vset.pattern.permute.xlu0 0
    %2826 = vperm.xlu0 %2825, %v2676
    %v2827 = vpop.permute.xlu0 %2826
    %2830 = vset.pattern.permute.xlu0 0
    %2831 = vperm.xlu0 %2830, %v2677
    %v2832 = vpop.permute.xlu0 %2831
    %2835 = vset.pattern.permute.xlu0 0
    %2836 = vperm.xlu0 %2835, %v2678
    %v2837 = vpop.permute.xlu0 %2836
    %2840 = vset.pattern.permute.xlu0 0
    %2841 = vperm.xlu0 %2840, %v2679
    %v2842 = vpop.permute.xlu0 %2841
    %2845 = vset.pattern.permute.xlu0 0
    %2846 = vperm.xlu0 %2845, %v2680
    %v2847 = vpop.permute.xlu0 %2846
    %2850 = vset.pattern.permute.xlu0 0
    %2851 = vperm.xlu0 %2850, %v2681
    %v2852 = vpop.permute.xlu0 %2851
    %2855 = vset.pattern.permute.xlu0 0
    %2856 = vperm.xlu0 %2855, %v2682
    %v2857 = vpop.permute.xlu0 %2856
    %2860 = vset.pattern.permute.xlu0 0
    %2861 = vperm.xlu0 %2860, %v2683
    %v2862 = vpop.permute.xlu0 %2861
    %2865 = vset.pattern.permute.xlu0 0
    %2866 = vperm.xlu0 %2865, %v2684
    %v2867 = vpop.permute.xlu0 %2866
    %2870 = vset.pattern.permute.xlu0 0
    %2871 = vperm.xlu0 %2870, %v2685
    %v2872 = vpop.permute.xlu0 %2871
    %2875 = vset.pattern.permute.xlu0 0
    %2876 = vperm.xlu0 %2875, %v2686
    %v2877 = vpop.permute.xlu0 %2876
    %2880 = vset.pattern.permute.xlu0 0
    %2881 = vperm.xlu0 %2880, %v2687
    %v2882 = vpop.permute.xlu0 %2881
    %2885 = vset.pattern.permute.xlu0 0
    %2886 = vperm.xlu0 %2885, %v2688
    %v2887 = vpop.permute.xlu0 %2886
    %2890 = vset.pattern.permute.xlu0 0
    %2891 = vperm.xlu0 %2890, %v2689
    %v2892 = vpop.permute.xlu0 %2891
    %2895 = vset.pattern.permute.xlu0 0
    %2896 = vperm.xlu0 %2895, %v2690
    %v2897 = vpop.permute.xlu0 %2896
    %2900 = vset.pattern.permute.xlu0 0
    %2901 = vperm.xlu0 %2900, %v2691
    %v2902 = vpop.permute.xlu0 %2901
    %2905 = vset.pattern.permute.xlu0 0
    %2906 = vperm.xlu0 %2905, %v2692
    %v2907 = vpop.permute.xlu0 %2906
    %2910 = vset.pattern.permute.xlu0 0
    %2911 = vperm.xlu0 %2910, %v2693
    %v2912 = vpop.permute.xlu0 %2911
    %2915 = vset.pattern.permute.xlu0 0
    %2916 = vperm.xlu0 %2915, %v2694
    %v2917 = vpop.permute.xlu0 %2916
    %2920 = vset.pattern.permute.xlu0 0
    %2921 = vperm.xlu0 %2920, %v2695
    %v2922 = vpop.permute.xlu0 %2921
    %2925 = vset.pattern.permute.xlu0 0
    %2926 = vperm.xlu0 %2925, %v2696
    %v2927 = vpop.permute.xlu0 %2926
    %2930 = vset.pattern.permute.xlu0 0
    %2931 = vperm.xlu0 %2930, %v2697
    %v2932 = vpop.permute.xlu0 %2931
    %2935 = vset.pattern.permute.xlu0 0
    %2936 = vperm.xlu0 %2935, %v2698
    %v2937 = vpop.permute.xlu0 %2936
    %2940 = vset.pattern.permute.xlu0 0
    %2941 = vperm.xlu0 %2940, %v2699
    %v2942 = vpop.permute.xlu0 %2941
    %2945 = vset.pattern.permute.xlu0 0
    %2946 = vperm.xlu0 %2945, %v2700
    %v2947 = vpop.permute.xlu0 %2946
    %2950 = vset.pattern.permute.xlu0 0
    %2951 = vperm.xlu0 %2950, %v2701
    %v2952 = vpop.permute.xlu0 %2951
    %2955 = vset.pattern.permute.xlu0 0
    %2956 = vperm.xlu0 %2955, %v2702
    %v2957 = vpop.permute.xlu0 %2956
    %2960 = vset.pattern.permute.xlu0 0
    %2961 = vperm.xlu0 %2960, %v2703
    %v2962 = vpop.permute.xlu0 %2961
    %2965 = vset.pattern.permute.xlu0 0
    %2966 = vperm.xlu0 %2965, %v2704
    %v2967 = vpop.permute.xlu0 %2966
    %2970 = vset.pattern.permute.xlu0 0
    %2971 = vperm.xlu0 %2970, %v2705
    %v2972 = vpop.permute.xlu0 %2971
    %2975 = vset.pattern.permute.xlu0 0
    %2976 = vperm.xlu0 %2975, %v2706
    %v2977 = vpop.permute.xlu0 %2976
    %2980 = vset.pattern.permute.xlu0 0
    %2981 = vperm.xlu0 %2980, %v2707
    %v2982 = vpop.permute.xlu0 %2981
    %2985 = vset.pattern.permute.xlu0 0
    %2986 = vperm.xlu0 %2985, %v2708
    %v2987 = vpop.permute.xlu0 %2986
    %2990 = vset.pattern.permute.xlu0 0
    %2991 = vperm.xlu0 %2990, %v2709
    %v2992 = vpop.permute.xlu0 %2991
    %2995 = vset.pattern.permute.xlu0 0
    %2996 = vperm.xlu0 %2995, %v2710
    %v2997 = vpop.permute.xlu0 %2996
    %3000 = vset.pattern.permute.xlu0 0
    %3001 = vperm.xlu0 %3000, %v2711
    %v3002 = vpop.permute.xlu0 %3001
    %3005 = vset.pattern.permute.xlu0 0
    %3006 = vperm.xlu0 %3005, %v2712
    %v3007 = vpop.permute.xlu0 %3006
    %3010 = vset.pattern.permute.xlu0 0
    %3011 = vperm.xlu0 %3010, %v2713
    %v3012 = vpop.permute.xlu0 %3011
    %3015 = vset.pattern.permute.xlu0 0
    %3016 = vperm.xlu0 %3015, %v2714
    %v3017 = vpop.permute.xlu0 %3016
    %3020 = vset.pattern.permute.xlu0 0
    %3021 = vperm.xlu0 %3020, %v2715
    %v3022 = vpop.permute.xlu0 %3021
    %3025 = vset.pattern.permute.xlu0 0
    %3026 = vperm.xlu0 %3025, %v2716
    %v3027 = vpop.permute.xlu0 %3026
    %3030 = vset.pattern.permute.xlu0 0
    %3031 = vperm.xlu0 %3030, %v2717
    %v3032 = vpop.permute.xlu0 %3031
    %3035 = vset.pattern.permute.xlu0 0
    %3036 = vperm.xlu0 %3035, %v2718
    %v3037 = vpop.permute.xlu0 %3036
    %v3039 = vmul.f32 %v2591, %v2722
    %v3040 = vmul.f32 %v2592, %v2727
    %v3041 = vmul.f32 %v2593, %v2732
    %v3042 = vmul.f32 %v2594, %v2737
    %v3043 = vmul.f32 %v2595, %v2742
    %v3044 = vmul.f32 %v2596, %v2747
    %v3045 = vmul.f32 %v2597, %v2752
    %v3046 = vmul.f32 %v2598, %v2757
    %v3047 = vmul.f32 %v2599, %v2762
    %v3048 = vmul.f32 %v2600, %v2767
    %v3049 = vmul.f32 %v2601, %v2772
    %v3050 = vmul.f32 %v2602, %v2777
    %v3051 = vmul.f32 %v2603, %v2782
    %v3052 = vmul.f32 %v2604, %v2787
    %v3053 = vmul.f32 %v2605, %v2792
    %v3054 = vmul.f32 %v2606, %v2797
    %v3055 = vmul.f32 %v2607, %v2802
    %v3056 = vmul.f32 %v2608, %v2807
    %v3057 = vmul.f32 %v2609, %v2812
    %v3058 = vmul.f32 %v2610, %v2817
    %v3059 = vmul.f32 %v2611, %v2822
    %v3060 = vmul.f32 %v2612, %v2827
    %v3061 = vmul.f32 %v2613, %v2832
    %v3062 = vmul.f32 %v2614, %v2837
    %v3063 = vmul.f32 %v2615, %v2842
    %v3064 = vmul.f32 %v2616, %v2847
    %v3065 = vmul.f32 %v2617, %v2852
    %v3066 = vmul.f32 %v2618, %v2857
    %v3067 = vmul.f32 %v2619, %v2862
    %v3068 = vmul.f32 %v2620, %v2867
    %v3069 = vmul.f32 %v2621, %v2872
    %v3070 = vmul.f32 %v2622, %v2877
    %v3071 = vmul.f32 %v2623, %v2882
    %v3072 = vmul.f32 %v2624, %v2887
    %v3073 = vmul.f32 %v2625, %v2892
    %v3074 = vmul.f32 %v2626, %v2897
    %v3075 = vmul.f32 %v2627, %v2902
    %v3076 = vmul.f32 %v2628, %v2907
    %v3077 = vmul.f32 %v2629, %v2912
    %v3078 = vmul.f32 %v2630, %v2917
    %v3079 = vmul.f32 %v2631, %v2922
    %v3080 = vmul.f32 %v2632, %v2927
    %v3081 = vmul.f32 %v2633, %v2932
    %v3082 = vmul.f32 %v2634, %v2937
    %v3083 = vmul.f32 %v2635, %v2942
    %v3084 = vmul.f32 %v2636, %v2947
    %v3085 = vmul.f32 %v2637, %v2952
    %v3086 = vmul.f32 %v2638, %v2957
    %v3087 = vmul.f32 %v2639, %v2962
    %v3088 = vmul.f32 %v2640, %v2967
    %v3089 = vmul.f32 %v2641, %v2972
    %v3090 = vmul.f32 %v2642, %v2977
    %v3091 = vmul.f32 %v2643, %v2982
    %v3092 = vmul.f32 %v2644, %v2987
    %v3093 = vmul.f32 %v2645, %v2992
    %v3094 = vmul.f32 %v2646, %v2997
    %v3095 = vmul.f32 %v2647, %v3002
    %v3096 = vmul.f32 %v2648, %v3007
    %v3097 = vmul.f32 %v2649, %v3012
    %v3098 = vmul.f32 %v2650, %v3017
    %v3099 = vmul.f32 %v2651, %v3022
    %v3100 = vmul.f32 %v2652, %v3027
    %v3101 = vmul.f32 %v2653, %v3032
    %v3102 = vmul.f32 %v2654, %v3037
    %v3103 = vrot.slane %v3039, 4
    %v3104 = vadd.f32 %v3039, %v3103
    %v3105 = vrot.slane %v3104, 2
    %v3106 = vadd.f32 %v3104, %v3105
    %v3107 = vrot.slane %v3106, 1
    %v3108 = vadd.f32 %v3106, %v3107
    %v3109 = vrot.slane %v3040, 4
    %v3110 = vadd.f32 %v3040, %v3109
    %v3111 = vrot.slane %v3110, 2
    %v3112 = vadd.f32 %v3110, %v3111
    %v3113 = vrot.slane %v3112, 1
    %v3114 = vadd.f32 %v3112, %v3113
    %v3115 = vrot.slane %v3041, 4
    %v3116 = vadd.f32 %v3041, %v3115
    %v3117 = vrot.slane %v3116, 2
    %v3118 = vadd.f32 %v3116, %v3117
    %v3119 = vrot.slane %v3118, 1
    %v3120 = vadd.f32 %v3118, %v3119
    %v3121 = vrot.slane %v3042, 4
    %v3122 = vadd.f32 %v3042, %v3121
    %v3123 = vrot.slane %v3122, 2
    %v3124 = vadd.f32 %v3122, %v3123
    %v3125 = vrot.slane %v3124, 1
    %v3126 = vadd.f32 %v3124, %v3125
    %v3127 = vrot.slane %v3043, 4
    %v3128 = vadd.f32 %v3043, %v3127
    %v3129 = vrot.slane %v3128, 2
    %v3130 = vadd.f32 %v3128, %v3129
    %v3131 = vrot.slane %v3130, 1
    %v3132 = vadd.f32 %v3130, %v3131
    %v3133 = vrot.slane %v3044, 4
    %v3134 = vadd.f32 %v3044, %v3133
    %v3135 = vrot.slane %v3134, 2
    %v3136 = vadd.f32 %v3134, %v3135
    %v3137 = vrot.slane %v3136, 1
    %v3138 = vadd.f32 %v3136, %v3137
    %v3139 = vrot.slane %v3045, 4
    %v3140 = vadd.f32 %v3045, %v3139
    %v3141 = vrot.slane %v3140, 2
    %v3142 = vadd.f32 %v3140, %v3141
    %v3143 = vrot.slane %v3142, 1
    %v3144 = vadd.f32 %v3142, %v3143
    %v3145 = vrot.slane %v3046, 4
    %v3146 = vadd.f32 %v3046, %v3145
    %v3147 = vrot.slane %v3146, 2
    %v3148 = vadd.f32 %v3146, %v3147
    %v3149 = vrot.slane %v3148, 1
    %v3150 = vadd.f32 %v3148, %v3149
    %v3151 = vrot.slane %v3047, 4
    %v3152 = vadd.f32 %v3047, %v3151
    %v3153 = vrot.slane %v3152, 2
    %v3154 = vadd.f32 %v3152, %v3153
    %v3155 = vrot.slane %v3154, 1
    %v3156 = vadd.f32 %v3154, %v3155
    %v3157 = vrot.slane %v3048, 4
    %v3158 = vadd.f32 %v3048, %v3157
    %v3159 = vrot.slane %v3158, 2
    %v3160 = vadd.f32 %v3158, %v3159
    %v3161 = vrot.slane %v3160, 1
    %v3162 = vadd.f32 %v3160, %v3161
    %v3163 = vrot.slane %v3049, 4
    %v3164 = vadd.f32 %v3049, %v3163
    %v3165 = vrot.slane %v3164, 2
    %v3166 = vadd.f32 %v3164, %v3165
    %v3167 = vrot.slane %v3166, 1
    %v3168 = vadd.f32 %v3166, %v3167
    %v3169 = vrot.slane %v3050, 4
    %v3170 = vadd.f32 %v3050, %v3169
    %v3171 = vrot.slane %v3170, 2
    %v3172 = vadd.f32 %v3170, %v3171
    %v3173 = vrot.slane %v3172, 1
    %v3174 = vadd.f32 %v3172, %v3173
    %v3175 = vrot.slane %v3051, 4
    %v3176 = vadd.f32 %v3051, %v3175
    %v3177 = vrot.slane %v3176, 2
    %v3178 = vadd.f32 %v3176, %v3177
    %v3179 = vrot.slane %v3178, 1
    %v3180 = vadd.f32 %v3178, %v3179
    %v3181 = vrot.slane %v3052, 4
    %v3182 = vadd.f32 %v3052, %v3181
    %v3183 = vrot.slane %v3182, 2
    %v3184 = vadd.f32 %v3182, %v3183
    %v3185 = vrot.slane %v3184, 1
    %v3186 = vadd.f32 %v3184, %v3185
    %v3187 = vrot.slane %v3053, 4
    %v3188 = vadd.f32 %v3053, %v3187
    %v3189 = vrot.slane %v3188, 2
    %v3190 = vadd.f32 %v3188, %v3189
    %v3191 = vrot.slane %v3190, 1
    %v3192 = vadd.f32 %v3190, %v3191
    %v3193 = vrot.slane %v3054, 4
    %v3194 = vadd.f32 %v3054, %v3193
    %v3195 = vrot.slane %v3194, 2
    %v3196 = vadd.f32 %v3194, %v3195
    %v3197 = vrot.slane %v3196, 1
    %v3198 = vadd.f32 %v3196, %v3197
    %v3199 = vrot.slane %v3055, 4
    %v3200 = vadd.f32 %v3055, %v3199
    %v3201 = vrot.slane %v3200, 2
    %v3202 = vadd.f32 %v3200, %v3201
    %v3203 = vrot.slane %v3202, 1
    %v3204 = vadd.f32 %v3202, %v3203
    %v3205 = vrot.slane %v3056, 4
    %v3206 = vadd.f32 %v3056, %v3205
    %v3207 = vrot.slane %v3206, 2
    %v3208 = vadd.f32 %v3206, %v3207
    %v3209 = vrot.slane %v3208, 1
    %v3210 = vadd.f32 %v3208, %v3209
    %v3211 = vrot.slane %v3057, 4
    %v3212 = vadd.f32 %v3057, %v3211
    %v3213 = vrot.slane %v3212, 2
    %v3214 = vadd.f32 %v3212, %v3213
    %v3215 = vrot.slane %v3214, 1
    %v3216 = vadd.f32 %v3214, %v3215
    %v3217 = vrot.slane %v3058, 4
    %v3218 = vadd.f32 %v3058, %v3217
    %v3219 = vrot.slane %v3218, 2
    %v3220 = vadd.f32 %v3218, %v3219
    %v3221 = vrot.slane %v3220, 1
    %v3222 = vadd.f32 %v3220, %v3221
    %v3223 = vrot.slane %v3059, 4
    %v3224 = vadd.f32 %v3059, %v3223
    %v3225 = vrot.slane %v3224, 2
    %v3226 = vadd.f32 %v3224, %v3225
    %v3227 = vrot.slane %v3226, 1
    %v3228 = vadd.f32 %v3226, %v3227
    %v3229 = vrot.slane %v3060, 4
    %v3230 = vadd.f32 %v3060, %v3229
    %v3231 = vrot.slane %v3230, 2
    %v3232 = vadd.f32 %v3230, %v3231
    %v3233 = vrot.slane %v3232, 1
    %v3234 = vadd.f32 %v3232, %v3233
    %v3235 = vrot.slane %v3061, 4
    %v3236 = vadd.f32 %v3061, %v3235
    %v3237 = vrot.slane %v3236, 2
    %v3238 = vadd.f32 %v3236, %v3237
    %v3239 = vrot.slane %v3238, 1
    %v3240 = vadd.f32 %v3238, %v3239
    %v3241 = vrot.slane %v3062, 4
    %v3242 = vadd.f32 %v3062, %v3241
    %v3243 = vrot.slane %v3242, 2
    %v3244 = vadd.f32 %v3242, %v3243
    %v3245 = vrot.slane %v3244, 1
    %v3246 = vadd.f32 %v3244, %v3245
    %v3247 = vrot.slane %v3063, 4
    %v3248 = vadd.f32 %v3063, %v3247
    %v3249 = vrot.slane %v3248, 2
    %v3250 = vadd.f32 %v3248, %v3249
    %v3251 = vrot.slane %v3250, 1
    %v3252 = vadd.f32 %v3250, %v3251
    %v3253 = vrot.slane %v3064, 4
    %v3254 = vadd.f32 %v3064, %v3253
    %v3255 = vrot.slane %v3254, 2
    %v3256 = vadd.f32 %v3254, %v3255
    %v3257 = vrot.slane %v3256, 1
    %v3258 = vadd.f32 %v3256, %v3257
    %v3259 = vrot.slane %v3065, 4
    %v3260 = vadd.f32 %v3065, %v3259
    %v3261 = vrot.slane %v3260, 2
    %v3262 = vadd.f32 %v3260, %v3261
    %v3263 = vrot.slane %v3262, 1
    %v3264 = vadd.f32 %v3262, %v3263
    %v3265 = vrot.slane %v3066, 4
    %v3266 = vadd.f32 %v3066, %v3265
    %v3267 = vrot.slane %v3266, 2
    %v3268 = vadd.f32 %v3266, %v3267
    %v3269 = vrot.slane %v3268, 1
    %v3270 = vadd.f32 %v3268, %v3269
    %v3271 = vrot.slane %v3067, 4
    %v3272 = vadd.f32 %v3067, %v3271
    %v3273 = vrot.slane %v3272, 2
    %v3274 = vadd.f32 %v3272, %v3273
    %v3275 = vrot.slane %v3274, 1
    %v3276 = vadd.f32 %v3274, %v3275
    %v3277 = vrot.slane %v3068, 4
    %v3278 = vadd.f32 %v3068, %v3277
    %v3279 = vrot.slane %v3278, 2
    %v3280 = vadd.f32 %v3278, %v3279
    %v3281 = vrot.slane %v3280, 1
    %v3282 = vadd.f32 %v3280, %v3281
    %v3283 = vrot.slane %v3069, 4
    %v3284 = vadd.f32 %v3069, %v3283
    %v3285 = vrot.slane %v3284, 2
    %v3286 = vadd.f32 %v3284, %v3285
    %v3287 = vrot.slane %v3286, 1
    %v3288 = vadd.f32 %v3286, %v3287
    %v3289 = vrot.slane %v3070, 4
    %v3290 = vadd.f32 %v3070, %v3289
    %v3291 = vrot.slane %v3290, 2
    %v3292 = vadd.f32 %v3290, %v3291
    %v3293 = vrot.slane %v3292, 1
    %v3294 = vadd.f32 %v3292, %v3293
    %v3295 = vrot.slane %v3071, 4
    %v3296 = vadd.f32 %v3071, %v3295
    %v3297 = vrot.slane %v3296, 2
    %v3298 = vadd.f32 %v3296, %v3297
    %v3299 = vrot.slane %v3298, 1
    %v3300 = vadd.f32 %v3298, %v3299
    %v3301 = vrot.slane %v3072, 4
    %v3302 = vadd.f32 %v3072, %v3301
    %v3303 = vrot.slane %v3302, 2
    %v3304 = vadd.f32 %v3302, %v3303
    %v3305 = vrot.slane %v3304, 1
    %v3306 = vadd.f32 %v3304, %v3305
    %v3307 = vrot.slane %v3073, 4
    %v3308 = vadd.f32 %v3073, %v3307
    %v3309 = vrot.slane %v3308, 2
    %v3310 = vadd.f32 %v3308, %v3309
    %v3311 = vrot.slane %v3310, 1
    %v3312 = vadd.f32 %v3310, %v3311
    %v3313 = vrot.slane %v3074, 4
    %v3314 = vadd.f32 %v3074, %v3313
    %v3315 = vrot.slane %v3314, 2
    %v3316 = vadd.f32 %v3314, %v3315
    %v3317 = vrot.slane %v3316, 1
    %v3318 = vadd.f32 %v3316, %v3317
    %v3319 = vrot.slane %v3075, 4
    %v3320 = vadd.f32 %v3075, %v3319
    %v3321 = vrot.slane %v3320, 2
    %v3322 = vadd.f32 %v3320, %v3321
    %v3323 = vrot.slane %v3322, 1
    %v3324 = vadd.f32 %v3322, %v3323
    %v3325 = vrot.slane %v3076, 4
    %v3326 = vadd.f32 %v3076, %v3325
    %v3327 = vrot.slane %v3326, 2
    %v3328 = vadd.f32 %v3326, %v3327
    %v3329 = vrot.slane %v3328, 1
    %v3330 = vadd.f32 %v3328, %v3329
    %v3331 = vrot.slane %v3077, 4
    %v3332 = vadd.f32 %v3077, %v3331
    %v3333 = vrot.slane %v3332, 2
    %v3334 = vadd.f32 %v3332, %v3333
    %v3335 = vrot.slane %v3334, 1
    %v3336 = vadd.f32 %v3334, %v3335
    %v3337 = vrot.slane %v3078, 4
    %v3338 = vadd.f32 %v3078, %v3337
    %v3339 = vrot.slane %v3338, 2
    %v3340 = vadd.f32 %v3338, %v3339
    %v3341 = vrot.slane %v3340, 1
    %v3342 = vadd.f32 %v3340, %v3341
    %v3343 = vrot.slane %v3079, 4
    %v3344 = vadd.f32 %v3079, %v3343
    %v3345 = vrot.slane %v3344, 2
    %v3346 = vadd.f32 %v3344, %v3345
    %v3347 = vrot.slane %v3346, 1
    %v3348 = vadd.f32 %v3346, %v3347
    %v3349 = vrot.slane %v3080, 4
    %v3350 = vadd.f32 %v3080, %v3349
    %v3351 = vrot.slane %v3350, 2
    %v3352 = vadd.f32 %v3350, %v3351
    %v3353 = vrot.slane %v3352, 1
    %v3354 = vadd.f32 %v3352, %v3353
    %v3355 = vrot.slane %v3081, 4
    %v3356 = vadd.f32 %v3081, %v3355
    %v3357 = vrot.slane %v3356, 2
    %v3358 = vadd.f32 %v3356, %v3357
    %v3359 = vrot.slane %v3358, 1
    %v3360 = vadd.f32 %v3358, %v3359
    %v3361 = vrot.slane %v3082, 4
    %v3362 = vadd.f32 %v3082, %v3361
    %v3363 = vrot.slane %v3362, 2
    %v3364 = vadd.f32 %v3362, %v3363
    %v3365 = vrot.slane %v3364, 1
    %v3366 = vadd.f32 %v3364, %v3365
    %v3367 = vrot.slane %v3083, 4
    %v3368 = vadd.f32 %v3083, %v3367
    %v3369 = vrot.slane %v3368, 2
    %v3370 = vadd.f32 %v3368, %v3369
    %v3371 = vrot.slane %v3370, 1
    %v3372 = vadd.f32 %v3370, %v3371
    %v3373 = vrot.slane %v3084, 4
    %v3374 = vadd.f32 %v3084, %v3373
    %v3375 = vrot.slane %v3374, 2
    %v3376 = vadd.f32 %v3374, %v3375
    %v3377 = vrot.slane %v3376, 1
    %v3378 = vadd.f32 %v3376, %v3377
    %v3379 = vrot.slane %v3085, 4
    %v3380 = vadd.f32 %v3085, %v3379
    %v3381 = vrot.slane %v3380, 2
    %v3382 = vadd.f32 %v3380, %v3381
    %v3383 = vrot.slane %v3382, 1
    %v3384 = vadd.f32 %v3382, %v3383
    %v3385 = vrot.slane %v3086, 4
    %v3386 = vadd.f32 %v3086, %v3385
    %v3387 = vrot.slane %v3386, 2
    %v3388 = vadd.f32 %v3386, %v3387
    %v3389 = vrot.slane %v3388, 1
    %v3390 = vadd.f32 %v3388, %v3389
    %v3391 = vrot.slane %v3087, 4
    %v3392 = vadd.f32 %v3087, %v3391
    %v3393 = vrot.slane %v3392, 2
    %v3394 = vadd.f32 %v3392, %v3393
    %v3395 = vrot.slane %v3394, 1
    %v3396 = vadd.f32 %v3394, %v3395
    %v3397 = vrot.slane %v3088, 4
    %v3398 = vadd.f32 %v3088, %v3397
    %v3399 = vrot.slane %v3398, 2
    %v3400 = vadd.f32 %v3398, %v3399
    %v3401 = vrot.slane %v3400, 1
    %v3402 = vadd.f32 %v3400, %v3401
    %v3403 = vrot.slane %v3089, 4
    %v3404 = vadd.f32 %v3089, %v3403
    %v3405 = vrot.slane %v3404, 2
    %v3406 = vadd.f32 %v3404, %v3405
    %v3407 = vrot.slane %v3406, 1
    %v3408 = vadd.f32 %v3406, %v3407
    %v3409 = vrot.slane %v3090, 4
    %v3410 = vadd.f32 %v3090, %v3409
    %v3411 = vrot.slane %v3410, 2
    %v3412 = vadd.f32 %v3410, %v3411
    %v3413 = vrot.slane %v3412, 1
    %v3414 = vadd.f32 %v3412, %v3413
    %v3415 = vrot.slane %v3091, 4
    %v3416 = vadd.f32 %v3091, %v3415
    %v3417 = vrot.slane %v3416, 2
    %v3418 = vadd.f32 %v3416, %v3417
    %v3419 = vrot.slane %v3418, 1
    %v3420 = vadd.f32 %v3418, %v3419
    %v3421 = vrot.slane %v3092, 4
    %v3422 = vadd.f32 %v3092, %v3421
    %v3423 = vrot.slane %v3422, 2
    %v3424 = vadd.f32 %v3422, %v3423
    %v3425 = vrot.slane %v3424, 1
    %v3426 = vadd.f32 %v3424, %v3425
    %v3427 = vrot.slane %v3093, 4
    %v3428 = vadd.f32 %v3093, %v3427
    %v3429 = vrot.slane %v3428, 2
    %v3430 = vadd.f32 %v3428, %v3429
    %v3431 = vrot.slane %v3430, 1
    %v3432 = vadd.f32 %v3430, %v3431
    %v3433 = vrot.slane %v3094, 4
    %v3434 = vadd.f32 %v3094, %v3433
    %v3435 = vrot.slane %v3434, 2
    %v3436 = vadd.f32 %v3434, %v3435
    %v3437 = vrot.slane %v3436, 1
    %v3438 = vadd.f32 %v3436, %v3437
    %v3439 = vrot.slane %v3095, 4
    %v3440 = vadd.f32 %v3095, %v3439
    %v3441 = vrot.slane %v3440, 2
    %v3442 = vadd.f32 %v3440, %v3441
    %v3443 = vrot.slane %v3442, 1
    %v3444 = vadd.f32 %v3442, %v3443
    %v3445 = vrot.slane %v3096, 4
    %v3446 = vadd.f32 %v3096, %v3445
    %v3447 = vrot.slane %v3446, 2
    %v3448 = vadd.f32 %v3446, %v3447
    %v3449 = vrot.slane %v3448, 1
    %v3450 = vadd.f32 %v3448, %v3449
    %v3451 = vrot.slane %v3097, 4
    %v3452 = vadd.f32 %v3097, %v3451
    %v3453 = vrot.slane %v3452, 2
    %v3454 = vadd.f32 %v3452, %v3453
    %v3455 = vrot.slane %v3454, 1
    %v3456 = vadd.f32 %v3454, %v3455
    %v3457 = vrot.slane %v3098, 4
    %v3458 = vadd.f32 %v3098, %v3457
    %v3459 = vrot.slane %v3458, 2
    %v3460 = vadd.f32 %v3458, %v3459
    %v3461 = vrot.slane %v3460, 1
    %v3462 = vadd.f32 %v3460, %v3461
    %v3463 = vrot.slane %v3099, 4
    %v3464 = vadd.f32 %v3099, %v3463
    %v3465 = vrot.slane %v3464, 2
    %v3466 = vadd.f32 %v3464, %v3465
    %v3467 = vrot.slane %v3466, 1
    %v3468 = vadd.f32 %v3466, %v3467
    %v3469 = vrot.slane %v3100, 4
    %v3470 = vadd.f32 %v3100, %v3469
    %v3471 = vrot.slane %v3470, 2
    %v3472 = vadd.f32 %v3470, %v3471
    %v3473 = vrot.slane %v3472, 1
    %v3474 = vadd.f32 %v3472, %v3473
    %v3475 = vrot.slane %v3101, 4
    %v3476 = vadd.f32 %v3101, %v3475
    %v3477 = vrot.slane %v3476, 2
    %v3478 = vadd.f32 %v3476, %v3477
    %v3479 = vrot.slane %v3478, 1
    %v3480 = vadd.f32 %v3478, %v3479
    %v3481 = vrot.slane %v3102, 4
    %v3482 = vadd.f32 %v3102, %v3481
    %v3483 = vrot.slane %v3482, 2
    %v3484 = vadd.f32 %v3482, %v3483
    %v3485 = vrot.slane %v3484, 1
    %v3486 = vadd.f32 %v3484, %v3485
    %v3487 = vld [vmem:[%s3] sm:$0xff]
    %v3488 = vld [vmem:[%s3 + $0x8] sm:$0xff]
    %v3489 = vld [vmem:[%s3 + $0x10] sm:$0xff]
    %v3490 = vld [vmem:[%s3 + $0x18] sm:$0xff]
    %v3491 = vld [vmem:[%s3 + $0x20] sm:$0xff]
    %v3492 = vld [vmem:[%s3 + $0x28] sm:$0xff]
    %v3493 = vld [vmem:[%s3 + $0x30] sm:$0xff]
    %v3494 = vld [vmem:[%s3 + $0x38] sm:$0xff]
    %v3495 = vadd.f32 %v3487, 1e-05
    %v3496 = vadd.f32 %v3488, 1e-05
    %v3497 = vadd.f32 %v3489, 1e-05
    %v3498 = vadd.f32 %v3490, 1e-05
    %v3499 = vadd.f32 %v3491, 1e-05
    %v3500 = vadd.f32 %v3492, 1e-05
    %v3501 = vadd.f32 %v3493, 1e-05
    %v3502 = vadd.f32 %v3494, 1e-05
    %v3503 = vrcp.pop %v3495
    %v3504 = vrcp.pop %v3496
    %v3505 = vrcp.pop %v3497
    %v3506 = vrcp.pop %v3498
    %v3507 = vrcp.pop %v3499
    %v3508 = vrcp.pop %v3500
    %v3509 = vrcp.pop %v3501
    %v3510 = vrcp.pop %v3502
    %3512 = vset.pattern.permute.xlu0 0
    %3513 = vperm.xlu0 %3512, %v3503
    %v3514 = vpop.permute.xlu0 %3513
    %3516 = vset.pattern.permute.xlu0 0
    %3517 = vperm.xlu0 %3516, %v3504
    %v3518 = vpop.permute.xlu0 %3517
    %3520 = vset.pattern.permute.xlu0 0
    %3521 = vperm.xlu0 %3520, %v3505
    %v3522 = vpop.permute.xlu0 %3521
    %3524 = vset.pattern.permute.xlu0 0
    %3525 = vperm.xlu0 %3524, %v3506
    %v3526 = vpop.permute.xlu0 %3525
    %3528 = vset.pattern.permute.xlu0 0
    %3529 = vperm.xlu0 %3528, %v3507
    %v3530 = vpop.permute.xlu0 %3529
    %3532 = vset.pattern.permute.xlu0 0
    %3533 = vperm.xlu0 %3532, %v3508
    %v3534 = vpop.permute.xlu0 %3533
    %3536 = vset.pattern.permute.xlu0 0
    %3537 = vperm.xlu0 %3536, %v3509
    %v3538 = vpop.permute.xlu0 %3537
    %3540 = vset.pattern.permute.xlu0 0
    %3541 = vperm.xlu0 %3540, %v3510
    %v3542 = vpop.permute.xlu0 %3541
    %v3543 = vrot.slane %v3514, 1
    %v3544 = vrot.slane %v3514, 2
    %v3545 = vrot.slane %v3514, 3
    %v3546 = vrot.slane %v3514, 4
    %v3547 = vrot.slane %v3514, 5
    %v3548 = vrot.slane %v3514, 6
    %v3549 = vrot.slane %v3514, 7
    %v3550 = vrot.slane %v3518, 1
    %v3551 = vrot.slane %v3518, 2
    %v3552 = vrot.slane %v3518, 3
    %v3553 = vrot.slane %v3518, 4
    %v3554 = vrot.slane %v3518, 5
    %v3555 = vrot.slane %v3518, 6
    %v3556 = vrot.slane %v3518, 7
    %v3557 = vrot.slane %v3522, 1
    %v3558 = vrot.slane %v3522, 2
    %v3559 = vrot.slane %v3522, 3
    %v3560 = vrot.slane %v3522, 4
    %v3561 = vrot.slane %v3522, 5
    %v3562 = vrot.slane %v3522, 6
    %v3563 = vrot.slane %v3522, 7
    %v3564 = vrot.slane %v3526, 1
    %v3565 = vrot.slane %v3526, 2
    %v3566 = vrot.slane %v3526, 3
    %v3567 = vrot.slane %v3526, 4
    %v3568 = vrot.slane %v3526, 5
    %v3569 = vrot.slane %v3526, 6
    %v3570 = vrot.slane %v3526, 7
    %v3571 = vrot.slane %v3530, 1
    %v3572 = vrot.slane %v3530, 2
    %v3573 = vrot.slane %v3530, 3
    %v3574 = vrot.slane %v3530, 4
    %v3575 = vrot.slane %v3530, 5
    %v3576 = vrot.slane %v3530, 6
    %v3577 = vrot.slane %v3530, 7
    %v3578 = vrot.slane %v3534, 1
    %v3579 = vrot.slane %v3534, 2
    %v3580 = vrot.slane %v3534, 3
    %v3581 = vrot.slane %v3534, 4
    %v3582 = vrot.slane %v3534, 5
    %v3583 = vrot.slane %v3534, 6
    %v3584 = vrot.slane %v3534, 7
    %v3585 = vrot.slane %v3538, 1
    %v3586 = vrot.slane %v3538, 2
    %v3587 = vrot.slane %v3538, 3
    %v3588 = vrot.slane %v3538, 4
    %v3589 = vrot.slane %v3538, 5
    %v3590 = vrot.slane %v3538, 6
    %v3591 = vrot.slane %v3538, 7
    %v3592 = vrot.slane %v3542, 1
    %v3593 = vrot.slane %v3542, 2
    %v3594 = vrot.slane %v3542, 3
    %v3595 = vrot.slane %v3542, 4
    %v3596 = vrot.slane %v3542, 5
    %v3597 = vrot.slane %v3542, 6
    %v3598 = vrot.slane %v3542, 7
    %v3663 = vmul.f32 %v3108, %v3514
    %v3664 = vmul.f32 %v3114, %v3543
    %v3665 = vmul.f32 %v3120, %v3544
    %v3666 = vmul.f32 %v3126, %v3545
    %v3667 = vmul.f32 %v3132, %v3546
    %v3668 = vmul.f32 %v3138, %v3547
    %v3669 = vmul.f32 %v3144, %v3548
    %v3670 = vmul.f32 %v3150, %v3549
    %v3671 = vmul.f32 %v3156, %v3518
    %v3672 = vmul.f32 %v3162, %v3550
    %v3673 = vmul.f32 %v3168, %v3551
    %v3674 = vmul.f32 %v3174, %v3552
    %v3675 = vmul.f32 %v3180, %v3553
    %v3676 = vmul.f32 %v3186, %v3554
    %v3677 = vmul.f32 %v3192, %v3555
    %v3678 = vmul.f32 %v3198, %v3556
    %v3679 = vmul.f32 %v3204, %v3522
    %v3680 = vmul.f32 %v3210, %v3557
    %v3681 = vmul.f32 %v3216, %v3558
    %v3682 = vmul.f32 %v3222, %v3559
    %v3683 = vmul.f32 %v3228, %v3560
    %v3684 = vmul.f32 %v3234, %v3561
    %v3685 = vmul.f32 %v3240, %v3562
    %v3686 = vmul.f32 %v3246, %v3563
    %v3687 = vmul.f32 %v3252, %v3526
    %v3688 = vmul.f32 %v3258, %v3564
    %v3689 = vmul.f32 %v3264, %v3565
    %v3690 = vmul.f32 %v3270, %v3566
    %v3691 = vmul.f32 %v3276, %v3567
    %v3692 = vmul.f32 %v3282, %v3568
    %v3693 = vmul.f32 %v3288, %v3569
    %v3694 = vmul.f32 %v3294, %v3570
    %v3695 = vmul.f32 %v3300, %v3530
    %v3696 = vmul.f32 %v3306, %v3571
    %v3697 = vmul.f32 %v3312, %v3572
    %v3698 = vmul.f32 %v3318, %v3573
    %v3699 = vmul.f32 %v3324, %v3574
    %v3700 = vmul.f32 %v3330, %v3575
    %v3701 = vmul.f32 %v3336, %v3576
    %v3702 = vmul.f32 %v3342, %v3577
    %v3703 = vmul.f32 %v3348, %v3534
    %v3704 = vmul.f32 %v3354, %v3578
    %v3705 = vmul.f32 %v3360, %v3579
    %v3706 = vmul.f32 %v3366, %v3580
    %v3707 = vmul.f32 %v3372, %v3581
    %v3708 = vmul.f32 %v3378, %v3582
    %v3709 = vmul.f32 %v3384, %v3583
    %v3710 = vmul.f32 %v3390, %v3584
    %v3711 = vmul.f32 %v3396, %v3538
    %v3712 = vmul.f32 %v3402, %v3585
    %v3713 = vmul.f32 %v3408, %v3586
    %v3714 = vmul.f32 %v3414, %v3587
    %v3715 = vmul.f32 %v3420, %v3588
    %v3716 = vmul.f32 %v3426, %v3589
    %v3717 = vmul.f32 %v3432, %v3590
    %v3718 = vmul.f32 %v3438, %v3591
    %v3719 = vmul.f32 %v3444, %v3542
    %v3720 = vmul.f32 %v3450, %v3592
    %v3721 = vmul.f32 %v3456, %v3593
    %v3722 = vmul.f32 %v3462, %v3594
    %v3723 = vmul.f32 %v3468, %v3595
    %v3724 = vmul.f32 %v3474, %v3596
    %v3725 = vmul.f32 %v3480, %v3597
    %v3726 = vmul.f32 %v3486, %v3598
    %v3727 = vld [vmem:[%s12] sm:$0x1]
    %v3728 = vld [vmem:[%s13] sm:$0x1]
    %v3793 = vrot.slane %v3664, 7
    %vm3794 = vcmask 1041409
    %v3795 = vsel %vm3794, %v3793, %v3663
    %v3796 = vrot.slane %v3665, 6
    %vm3797 = vcmask 1042434
    %v3798 = vsel %vm3797, %v3796, %v3795
    %v3799 = vrot.slane %v3666, 5
    %vm3800 = vcmask 1043459
    %v3801 = vsel %vm3800, %v3799, %v3798
    %v3802 = vrot.slane %v3667, 4
    %vm3803 = vcmask 1044484
    %v3804 = vsel %vm3803, %v3802, %v3801
    %v3805 = vrot.slane %v3668, 3
    %vm3806 = vcmask 1045509
    %v3807 = vsel %vm3806, %v3805, %v3804
    %v3808 = vrot.slane %v3669, 2
    %vm3809 = vcmask 1046534
    %v3810 = vsel %vm3809, %v3808, %v3807
    %v3811 = vrot.slane %v3670, 1
    %vm3812 = vcmask 1047559
    %v3813 = vsel %vm3812, %v3811, %v3810
    %v3814 = vrot.slane %v3672, 7
    %v3815 = vsel %vm3794, %v3814, %v3671
    %v3816 = vrot.slane %v3673, 6
    %v3817 = vsel %vm3797, %v3816, %v3815
    %v3818 = vrot.slane %v3674, 5
    %v3819 = vsel %vm3800, %v3818, %v3817
    %v3820 = vrot.slane %v3675, 4
    %v3821 = vsel %vm3803, %v3820, %v3819
    %v3822 = vrot.slane %v3676, 3
    %v3823 = vsel %vm3806, %v3822, %v3821
    %v3824 = vrot.slane %v3677, 2
    %v3825 = vsel %vm3809, %v3824, %v3823
    %v3826 = vrot.slane %v3678, 1
    %v3827 = vsel %vm3812, %v3826, %v3825
    %v3828 = vrot.slane %v3680, 7
    %v3829 = vsel %vm3794, %v3828, %v3679
    %v3830 = vrot.slane %v3681, 6
    %v3831 = vsel %vm3797, %v3830, %v3829
    %v3832 = vrot.slane %v3682, 5
    %v3833 = vsel %vm3800, %v3832, %v3831
    %v3834 = vrot.slane %v3683, 4
    %v3835 = vsel %vm3803, %v3834, %v3833
    %v3836 = vrot.slane %v3684, 3
    %v3837 = vsel %vm3806, %v3836, %v3835
    %v3838 = vrot.slane %v3685, 2
    %v3839 = vsel %vm3809, %v3838, %v3837
    %v3840 = vrot.slane %v3686, 1
    %v3841 = vsel %vm3812, %v3840, %v3839
    %v3842 = vrot.slane %v3688, 7
    %v3843 = vsel %vm3794, %v3842, %v3687
    %v3844 = vrot.slane %v3689, 6
    %v3845 = vsel %vm3797, %v3844, %v3843
    %v3846 = vrot.slane %v3690, 5
    %v3847 = vsel %vm3800, %v3846, %v3845
    %v3848 = vrot.slane %v3691, 4
    %v3849 = vsel %vm3803, %v3848, %v3847
    %v3850 = vrot.slane %v3692, 3
    %v3851 = vsel %vm3806, %v3850, %v3849
    %v3852 = vrot.slane %v3693, 2
    %v3853 = vsel %vm3809, %v3852, %v3851
    %v3854 = vrot.slane %v3694, 1
    %v3855 = vsel %vm3812, %v3854, %v3853
    %v3856 = vrot.slane %v3696, 7
    %v3857 = vsel %vm3794, %v3856, %v3695
    %v3858 = vrot.slane %v3697, 6
    %v3859 = vsel %vm3797, %v3858, %v3857
    %v3860 = vrot.slane %v3698, 5
    %v3861 = vsel %vm3800, %v3860, %v3859
    %v3862 = vrot.slane %v3699, 4
    %v3863 = vsel %vm3803, %v3862, %v3861
    %v3864 = vrot.slane %v3700, 3
    %v3865 = vsel %vm3806, %v3864, %v3863
    %v3866 = vrot.slane %v3701, 2
    %v3867 = vsel %vm3809, %v3866, %v3865
    %v3868 = vrot.slane %v3702, 1
    %v3869 = vsel %vm3812, %v3868, %v3867
    %v3870 = vrot.slane %v3704, 7
    %v3871 = vsel %vm3794, %v3870, %v3703
    %v3872 = vrot.slane %v3705, 6
    %v3873 = vsel %vm3797, %v3872, %v3871
    %v3874 = vrot.slane %v3706, 5
    %v3875 = vsel %vm3800, %v3874, %v3873
    %v3876 = vrot.slane %v3707, 4
    %v3877 = vsel %vm3803, %v3876, %v3875
    %v3878 = vrot.slane %v3708, 3
    %v3879 = vsel %vm3806, %v3878, %v3877
    %v3880 = vrot.slane %v3709, 2
    %v3881 = vsel %vm3809, %v3880, %v3879
    %v3882 = vrot.slane %v3710, 1
    %v3883 = vsel %vm3812, %v3882, %v3881
    %v3884 = vrot.slane %v3712, 7
    %v3885 = vsel %vm3794, %v3884, %v3711
    %v3886 = vrot.slane %v3713, 6
    %v3887 = vsel %vm3797, %v3886, %v3885
    %v3888 = vrot.slane %v3714, 5
    %v3889 = vsel %vm3800, %v3888, %v3887
    %v3890 = vrot.slane %v3715, 4
    %v3891 = vsel %vm3803, %v3890, %v3889
    %v3892 = vrot.slane %v3716, 3
    %v3893 = vsel %vm3806, %v3892, %v3891
    %v3894 = vrot.slane %v3717, 2
    %v3895 = vsel %vm3809, %v3894, %v3893
    %v3896 = vrot.slane %v3718, 1
    %v3897 = vsel %vm3812, %v3896, %v3895
    %v3898 = vrot.slane %v3720, 7
    %v3899 = vsel %vm3794, %v3898, %v3719
    %v3900 = vrot.slane %v3721, 6
    %v3901 = vsel %vm3797, %v3900, %v3899
    %v3902 = vrot.slane %v3722, 5
    %v3903 = vsel %vm3800, %v3902, %v3901
    %v3904 = vrot.slane %v3723, 4
    %v3905 = vsel %vm3803, %v3904, %v3903
    %v3906 = vrot.slane %v3724, 3
    %v3907 = vsel %vm3806, %v3906, %v3905
    %v3908 = vrot.slane %v3725, 2
    %v3909 = vsel %vm3809, %v3908, %v3907
    %v3910 = vrot.slane %v3726, 1
    %v3911 = vsel %vm3812, %v3910, %v3909
    %3920 = vadd.xlane.f32.xlu0 %v3813
    %v3921 = vpop.xlane.xlu0 %3920
    %3922 = vadd.xlane.f32.xlu0 %v3827
    %v3923 = vpop.xlane.xlu0 %3922
    %3924 = vadd.xlane.f32.xlu0 %v3841
    %v3925 = vpop.xlane.xlu0 %3924
    %3926 = vadd.xlane.f32.xlu0 %v3855
    %v3927 = vpop.xlane.xlu0 %3926
    %3928 = vadd.xlane.f32.xlu0 %v3869
    %v3929 = vpop.xlane.xlu0 %3928
    %3930 = vadd.xlane.f32.xlu0 %v3883
    %v3931 = vpop.xlane.xlu0 %3930
    %3932 = vadd.xlane.f32.xlu0 %v3897
    %v3933 = vpop.xlane.xlu0 %3932
    %3934 = vadd.xlane.f32.xlu0 %v3911
    %v3935 = vpop.xlane.xlu0 %3934
    %v3936 = vmul.f32 %v3921, %v802
    %v3937 = vmul.f32 %v3923, %v802
    %v3938 = vmul.f32 %v3925, %v802
    %v3939 = vmul.f32 %v3927, %v802
    %v3940 = vmul.f32 %v3929, %v802
    %v3941 = vmul.f32 %v3931, %v802
    %v3942 = vmul.f32 %v3933, %v802
    %v3943 = vmul.f32 %v3935, %v802
    %v3952 = vrot.slane %v3936, 1
    %v3953 = vrot.slane %v3936, 2
    %v3954 = vrot.slane %v3936, 3
    %v3955 = vrot.slane %v3936, 4
    %v3956 = vrot.slane %v3936, 5
    %v3957 = vrot.slane %v3936, 6
    %v3958 = vrot.slane %v3936, 7
    %v3959 = vrot.slane %v3937, 1
    %v3960 = vrot.slane %v3937, 2
    %v3961 = vrot.slane %v3937, 3
    %v3962 = vrot.slane %v3937, 4
    %v3963 = vrot.slane %v3937, 5
    %v3964 = vrot.slane %v3937, 6
    %v3965 = vrot.slane %v3937, 7
    %v3966 = vrot.slane %v3938, 1
    %v3967 = vrot.slane %v3938, 2
    %v3968 = vrot.slane %v3938, 3
    %v3969 = vrot.slane %v3938, 4
    %v3970 = vrot.slane %v3938, 5
    %v3971 = vrot.slane %v3938, 6
    %v3972 = vrot.slane %v3938, 7
    %v3973 = vrot.slane %v3939, 1
    %v3974 = vrot.slane %v3939, 2
    %v3975 = vrot.slane %v3939, 3
    %v3976 = vrot.slane %v3939, 4
    %v3977 = vrot.slane %v3939, 5
    %v3978 = vrot.slane %v3939, 6
    %v3979 = vrot.slane %v3939, 7
    %v3980 = vrot.slane %v3940, 1
    %v3981 = vrot.slane %v3940, 2
    %v3982 = vrot.slane %v3940, 3
    %v3983 = vrot.slane %v3940, 4
    %v3984 = vrot.slane %v3940, 5
    %v3985 = vrot.slane %v3940, 6
    %v3986 = vrot.slane %v3940, 7
    %v3987 = vrot.slane %v3941, 1
    %v3988 = vrot.slane %v3941, 2
    %v3989 = vrot.slane %v3941, 3
    %v3990 = vrot.slane %v3941, 4
    %v3991 = vrot.slane %v3941, 5
    %v3992 = vrot.slane %v3941, 6
    %v3993 = vrot.slane %v3941, 7
    %v3994 = vrot.slane %v3942, 1
    %v3995 = vrot.slane %v3942, 2
    %v3996 = vrot.slane %v3942, 3
    %v3997 = vrot.slane %v3942, 4
    %v3998 = vrot.slane %v3942, 5
    %v3999 = vrot.slane %v3942, 6
    %v4000 = vrot.slane %v3942, 7
    %v4001 = vrot.slane %v3943, 1
    %v4002 = vrot.slane %v3943, 2
    %v4003 = vrot.slane %v3943, 3
    %v4004 = vrot.slane %v3943, 4
    %v4005 = vrot.slane %v3943, 5
    %v4006 = vrot.slane %v3943, 6
    %v4007 = vrot.slane %v3943, 7
    %v4072 = vsub.f32 %v3663, %v3936
    %v4073 = vsub.f32 %v3664, %v3952
    %v4074 = vsub.f32 %v3665, %v3953
    %v4075 = vsub.f32 %v3666, %v3954
    %v4076 = vsub.f32 %v3667, %v3955
    %v4077 = vsub.f32 %v3668, %v3956
    %v4078 = vsub.f32 %v3669, %v3957
    %v4079 = vsub.f32 %v3670, %v3958
    %v4080 = vsub.f32 %v3671, %v3937
    %v4081 = vsub.f32 %v3672, %v3959
    %v4082 = vsub.f32 %v3673, %v3960
    %v4083 = vsub.f32 %v3674, %v3961
    %v4084 = vsub.f32 %v3675, %v3962
    %v4085 = vsub.f32 %v3676, %v3963
    %v4086 = vsub.f32 %v3677, %v3964
    %v4087 = vsub.f32 %v3678, %v3965
    %v4088 = vsub.f32 %v3679, %v3938
    %v4089 = vsub.f32 %v3680, %v3966
    %v4090 = vsub.f32 %v3681, %v3967
    %v4091 = vsub.f32 %v3682, %v3968
    %v4092 = vsub.f32 %v3683, %v3969
    %v4093 = vsub.f32 %v3684, %v3970
    %v4094 = vsub.f32 %v3685, %v3971
    %v4095 = vsub.f32 %v3686, %v3972
    %v4096 = vsub.f32 %v3687, %v3939
    %v4097 = vsub.f32 %v3688, %v3973
    %v4098 = vsub.f32 %v3689, %v3974
    %v4099 = vsub.f32 %v3690, %v3975
    %v4100 = vsub.f32 %v3691, %v3976
    %v4101 = vsub.f32 %v3692, %v3977
    %v4102 = vsub.f32 %v3693, %v3978
    %v4103 = vsub.f32 %v3694, %v3979
    %v4104 = vsub.f32 %v3695, %v3940
    %v4105 = vsub.f32 %v3696, %v3980
    %v4106 = vsub.f32 %v3697, %v3981
    %v4107 = vsub.f32 %v3698, %v3982
    %v4108 = vsub.f32 %v3699, %v3983
    %v4109 = vsub.f32 %v3700, %v3984
    %v4110 = vsub.f32 %v3701, %v3985
    %v4111 = vsub.f32 %v3702, %v3986
    %v4112 = vsub.f32 %v3703, %v3941
    %v4113 = vsub.f32 %v3704, %v3987
    %v4114 = vsub.f32 %v3705, %v3988
    %v4115 = vsub.f32 %v3706, %v3989
    %v4116 = vsub.f32 %v3707, %v3990
    %v4117 = vsub.f32 %v3708, %v3991
    %v4118 = vsub.f32 %v3709, %v3992
    %v4119 = vsub.f32 %v3710, %v3993
    %v4120 = vsub.f32 %v3711, %v3942
    %v4121 = vsub.f32 %v3712, %v3994
    %v4122 = vsub.f32 %v3713, %v3995
    %v4123 = vsub.f32 %v3714, %v3996
    %v4124 = vsub.f32 %v3715, %v3997
    %v4125 = vsub.f32 %v3716, %v3998
    %v4126 = vsub.f32 %v3717, %v3999
    %v4127 = vsub.f32 %v3718, %v4000
    %v4128 = vsub.f32 %v3719, %v3943
    %v4129 = vsub.f32 %v3720, %v4001
    %v4130 = vsub.f32 %v3721, %v4002
    %v4131 = vsub.f32 %v3722, %v4003
    %v4132 = vsub.f32 %v3723, %v4004
    %v4133 = vsub.f32 %v3724, %v4005
    %v4134 = vsub.f32 %v3725, %v4006
    %v4135 = vsub.f32 %v3726, %v4007
    %v4136 = vmul.f32 %v4072, %v4072
    %v4137 = vmul.f32 %v4073, %v4073
    %v4138 = vmul.f32 %v4074, %v4074
    %v4139 = vmul.f32 %v4075, %v4075
    %v4140 = vmul.f32 %v4076, %v4076
    %v4141 = vmul.f32 %v4077, %v4077
    %v4142 = vmul.f32 %v4078, %v4078
    %v4143 = vmul.f32 %v4079, %v4079
    %v4144 = vmul.f32 %v4080, %v4080
    %v4145 = vmul.f32 %v4081, %v4081
    %v4146 = vmul.f32 %v4082, %v4082
    %v4147 = vmul.f32 %v4083, %v4083
    %v4148 = vmul.f32 %v4084, %v4084
    %v4149 = vmul.f32 %v4085, %v4085
    %v4150 = vmul.f32 %v4086, %v4086
    %v4151 = vmul.f32 %v4087, %v4087
    %v4152 = vmul.f32 %v4088, %v4088
    %v4153 = vmul.f32 %v4089, %v4089
    %v4154 = vmul.f32 %v4090, %v4090
    %v4155 = vmul.f32 %v4091, %v4091
    %v4156 = vmul.f32 %v4092, %v4092
    %v4157 = vmul.f32 %v4093, %v4093
    %v4158 = vmul.f32 %v4094, %v4094
    %v4159 = vmul.f32 %v4095, %v4095
    %v4160 = vmul.f32 %v4096, %v4096
    %v4161 = vmul.f32 %v4097, %v4097
    %v4162 = vmul.f32 %v4098, %v4098
    %v4163 = vmul.f32 %v4099, %v4099
    %v4164 = vmul.f32 %v4100, %v4100
    %v4165 = vmul.f32 %v4101, %v4101
    %v4166 = vmul.f32 %v4102, %v4102
    %v4167 = vmul.f32 %v4103, %v4103
    %v4168 = vmul.f32 %v4104, %v4104
    %v4169 = vmul.f32 %v4105, %v4105
    %v4170 = vmul.f32 %v4106, %v4106
    %v4171 = vmul.f32 %v4107, %v4107
    %v4172 = vmul.f32 %v4108, %v4108
    %v4173 = vmul.f32 %v4109, %v4109
    %v4174 = vmul.f32 %v4110, %v4110
    %v4175 = vmul.f32 %v4111, %v4111
    %v4176 = vmul.f32 %v4112, %v4112
    %v4177 = vmul.f32 %v4113, %v4113
    %v4178 = vmul.f32 %v4114, %v4114
    %v4179 = vmul.f32 %v4115, %v4115
    %v4180 = vmul.f32 %v4116, %v4116
    %v4181 = vmul.f32 %v4117, %v4117
    %v4182 = vmul.f32 %v4118, %v4118
    %v4183 = vmul.f32 %v4119, %v4119
    %v4184 = vmul.f32 %v4120, %v4120
    %v4185 = vmul.f32 %v4121, %v4121
    %v4186 = vmul.f32 %v4122, %v4122
    %v4187 = vmul.f32 %v4123, %v4123
    %v4188 = vmul.f32 %v4124, %v4124
    %v4189 = vmul.f32 %v4125, %v4125
    %v4190 = vmul.f32 %v4126, %v4126
    %v4191 = vmul.f32 %v4127, %v4127
    %v4192 = vmul.f32 %v4128, %v4128
    %v4193 = vmul.f32 %v4129, %v4129
    %v4194 = vmul.f32 %v4130, %v4130
    %v4195 = vmul.f32 %v4131, %v4131
    %v4196 = vmul.f32 %v4132, %v4132
    %v4197 = vmul.f32 %v4133, %v4133
    %v4198 = vmul.f32 %v4134, %v4134
    %v4199 = vmul.f32 %v4135, %v4135
    %v4264 = vrot.slane %v4137, 7
    %v4265 = vsel %vm3794, %v4264, %v4136
    %v4266 = vrot.slane %v4138, 6
    %v4267 = vsel %vm3797, %v4266, %v4265
    %v4268 = vrot.slane %v4139, 5
    %v4269 = vsel %vm3800, %v4268, %v4267
    %v4270 = vrot.slane %v4140, 4
    %v4271 = vsel %vm3803, %v4270, %v4269
    %v4272 = vrot.slane %v4141, 3
    %v4273 = vsel %vm3806, %v4272, %v4271
    %v4274 = vrot.slane %v4142, 2
    %v4275 = vsel %vm3809, %v4274, %v4273
    %v4276 = vrot.slane %v4143, 1
    %v4277 = vsel %vm3812, %v4276, %v4275
    %v4278 = vrot.slane %v4145, 7
    %v4279 = vsel %vm3794, %v4278, %v4144
    %v4280 = vrot.slane %v4146, 6
    %v4281 = vsel %vm3797, %v4280, %v4279
    %v4282 = vrot.slane %v4147, 5
    %v4283 = vsel %vm3800, %v4282, %v4281
    %v4284 = vrot.slane %v4148, 4
    %v4285 = vsel %vm3803, %v4284, %v4283
    %v4286 = vrot.slane %v4149, 3
    %v4287 = vsel %vm3806, %v4286, %v4285
    %v4288 = vrot.slane %v4150, 2
    %v4289 = vsel %vm3809, %v4288, %v4287
    %v4290 = vrot.slane %v4151, 1
    %v4291 = vsel %vm3812, %v4290, %v4289
    %v4292 = vrot.slane %v4153, 7
    %v4293 = vsel %vm3794, %v4292, %v4152
    %v4294 = vrot.slane %v4154, 6
    %v4295 = vsel %vm3797, %v4294, %v4293
    %v4296 = vrot.slane %v4155, 5
    %v4297 = vsel %vm3800, %v4296, %v4295
    %v4298 = vrot.slane %v4156, 4
    %v4299 = vsel %vm3803, %v4298, %v4297
    %v4300 = vrot.slane %v4157, 3
    %v4301 = vsel %vm3806, %v4300, %v4299
    %v4302 = vrot.slane %v4158, 2
    %v4303 = vsel %vm3809, %v4302, %v4301
    %v4304 = vrot.slane %v4159, 1
    %v4305 = vsel %vm3812, %v4304, %v4303
    %v4306 = vrot.slane %v4161, 7
    %v4307 = vsel %vm3794, %v4306, %v4160
    %v4308 = vrot.slane %v4162, 6
    %v4309 = vsel %vm3797, %v4308, %v4307
    %v4310 = vrot.slane %v4163, 5
    %v4311 = vsel %vm3800, %v4310, %v4309
    %v4312 = vrot.slane %v4164, 4
    %v4313 = vsel %vm3803, %v4312, %v4311
    %v4314 = vrot.slane %v4165, 3
    %v4315 = vsel %vm3806, %v4314, %v4313
    %v4316 = vrot.slane %v4166, 2
    %v4317 = vsel %vm3809, %v4316, %v4315
    %v4318 = vrot.slane %v4167, 1
    %v4319 = vsel %vm3812, %v4318, %v4317
    %v4320 = vrot.slane %v4169, 7
    %v4321 = vsel %vm3794, %v4320, %v4168
    %v4322 = vrot.slane %v4170, 6
    %v4323 = vsel %vm3797, %v4322, %v4321
    %v4324 = vrot.slane %v4171, 5
    %v4325 = vsel %vm3800, %v4324, %v4323
    %v4326 = vrot.slane %v4172, 4
    %v4327 = vsel %vm3803, %v4326, %v4325
    %v4328 = vrot.slane %v4173, 3
    %v4329 = vsel %vm3806, %v4328, %v4327
    %v4330 = vrot.slane %v4174, 2
    %v4331 = vsel %vm3809, %v4330, %v4329
    %v4332 = vrot.slane %v4175, 1
    %v4333 = vsel %vm3812, %v4332, %v4331
    %v4334 = vrot.slane %v4177, 7
    %v4335 = vsel %vm3794, %v4334, %v4176
    %v4336 = vrot.slane %v4178, 6
    %v4337 = vsel %vm3797, %v4336, %v4335
    %v4338 = vrot.slane %v4179, 5
    %v4339 = vsel %vm3800, %v4338, %v4337
    %v4340 = vrot.slane %v4180, 4
    %v4341 = vsel %vm3803, %v4340, %v4339
    %v4342 = vrot.slane %v4181, 3
    %v4343 = vsel %vm3806, %v4342, %v4341
    %v4344 = vrot.slane %v4182, 2
    %v4345 = vsel %vm3809, %v4344, %v4343
    %v4346 = vrot.slane %v4183, 1
    %v4347 = vsel %vm3812, %v4346, %v4345
    %v4348 = vrot.slane %v4185, 7
    %v4349 = vsel %vm3794, %v4348, %v4184
    %v4350 = vrot.slane %v4186, 6
    %v4351 = vsel %vm3797, %v4350, %v4349
    %v4352 = vrot.slane %v4187, 5
    %v4353 = vsel %vm3800, %v4352, %v4351
    %v4354 = vrot.slane %v4188, 4
    %v4355 = vsel %vm3803, %v4354, %v4353
    %v4356 = vrot.slane %v4189, 3
    %v4357 = vsel %vm3806, %v4356, %v4355
    %v4358 = vrot.slane %v4190, 2
    %v4359 = vsel %vm3809, %v4358, %v4357
    %v4360 = vrot.slane %v4191, 1
    %v4361 = vsel %vm3812, %v4360, %v4359
    %v4362 = vrot.slane %v4193, 7
    %v4363 = vsel %vm3794, %v4362, %v4192
    %v4364 = vrot.slane %v4194, 6
    %v4365 = vsel %vm3797, %v4364, %v4363
    %v4366 = vrot.slane %v4195, 5
    %v4367 = vsel %vm3800, %v4366, %v4365
    %v4368 = vrot.slane %v4196, 4
    %v4369 = vsel %vm3803, %v4368, %v4367
    %v4370 = vrot.slane %v4197, 3
    %v4371 = vsel %vm3806, %v4370, %v4369
    %v4372 = vrot.slane %v4198, 2
    %v4373 = vsel %vm3809, %v4372, %v4371
    %v4374 = vrot.slane %v4199, 1
    %v4375 = vsel %vm3812, %v4374, %v4373
    %4384 = vadd.xlane.f32.xlu0 %v4277
    %v4385 = vpop.xlane.xlu0 %4384
    %4386 = vadd.xlane.f32.xlu0 %v4291
    %v4387 = vpop.xlane.xlu0 %4386
    %4388 = vadd.xlane.f32.xlu0 %v4305
    %v4389 = vpop.xlane.xlu0 %4388
    %4390 = vadd.xlane.f32.xlu0 %v4319
    %v4391 = vpop.xlane.xlu0 %4390
    %4392 = vadd.xlane.f32.xlu0 %v4333
    %v4393 = vpop.xlane.xlu0 %4392
    %4394 = vadd.xlane.f32.xlu0 %v4347
    %v4395 = vpop.xlane.xlu0 %4394
    %4396 = vadd.xlane.f32.xlu0 %v4361
    %v4397 = vpop.xlane.xlu0 %4396
    %4398 = vadd.xlane.f32.xlu0 %v4375
    %v4399 = vpop.xlane.xlu0 %4398
    %v4400 = vmul.f32 %v4385, %v802
    %v4401 = vmul.f32 %v4387, %v802
    %v4402 = vmul.f32 %v4389, %v802
    %v4403 = vmul.f32 %v4391, %v802
    %v4404 = vmul.f32 %v4393, %v802
    %v4405 = vmul.f32 %v4395, %v802
    %v4406 = vmul.f32 %v4397, %v802
    %v4407 = vmul.f32 %v4399, %v802
    %v4408 = vadd.f32 %v4400, 1e-05
    %v4409 = vadd.f32 %v4401, 1e-05
    %v4410 = vadd.f32 %v4402, 1e-05
    %v4411 = vadd.f32 %v4403, 1e-05
    %v4412 = vadd.f32 %v4404, 1e-05
    %v4413 = vadd.f32 %v4405, 1e-05
    %v4414 = vadd.f32 %v4406, 1e-05
    %v4415 = vadd.f32 %v4407, 1e-05
    %v4416 = vrsqrt.pop %v4408
    %v4417 = vrsqrt.pop %v4409
    %v4418 = vrsqrt.pop %v4410
    %v4419 = vrsqrt.pop %v4411
    %v4420 = vrsqrt.pop %v4412
    %v4421 = vrsqrt.pop %v4413
    %v4422 = vrsqrt.pop %v4414
    %v4423 = vrsqrt.pop %v4415
    %v4432 = vrot.slane %v4416, 1
    %v4433 = vrot.slane %v4416, 2
    %v4434 = vrot.slane %v4416, 3
    %v4435 = vrot.slane %v4416, 4
    %v4436 = vrot.slane %v4416, 5
    %v4437 = vrot.slane %v4416, 6
    %v4438 = vrot.slane %v4416, 7
    %v4439 = vrot.slane %v4417, 1
    %v4440 = vrot.slane %v4417, 2
    %v4441 = vrot.slane %v4417, 3
    %v4442 = vrot.slane %v4417, 4
    %v4443 = vrot.slane %v4417, 5
    %v4444 = vrot.slane %v4417, 6
    %v4445 = vrot.slane %v4417, 7
    %v4446 = vrot.slane %v4418, 1
    %v4447 = vrot.slane %v4418, 2
    %v4448 = vrot.slane %v4418, 3
    %v4449 = vrot.slane %v4418, 4
    %v4450 = vrot.slane %v4418, 5
    %v4451 = vrot.slane %v4418, 6
    %v4452 = vrot.slane %v4418, 7
    %v4453 = vrot.slane %v4419, 1
    %v4454 = vrot.slane %v4419, 2
    %v4455 = vrot.slane %v4419, 3
    %v4456 = vrot.slane %v4419, 4
    %v4457 = vrot.slane %v4419, 5
    %v4458 = vrot.slane %v4419, 6
    %v4459 = vrot.slane %v4419, 7
    %v4460 = vrot.slane %v4420, 1
    %v4461 = vrot.slane %v4420, 2
    %v4462 = vrot.slane %v4420, 3
    %v4463 = vrot.slane %v4420, 4
    %v4464 = vrot.slane %v4420, 5
    %v4465 = vrot.slane %v4420, 6
    %v4466 = vrot.slane %v4420, 7
    %v4467 = vrot.slane %v4421, 1
    %v4468 = vrot.slane %v4421, 2
    %v4469 = vrot.slane %v4421, 3
    %v4470 = vrot.slane %v4421, 4
    %v4471 = vrot.slane %v4421, 5
    %v4472 = vrot.slane %v4421, 6
    %v4473 = vrot.slane %v4421, 7
    %v4474 = vrot.slane %v4422, 1
    %v4475 = vrot.slane %v4422, 2
    %v4476 = vrot.slane %v4422, 3
    %v4477 = vrot.slane %v4422, 4
    %v4478 = vrot.slane %v4422, 5
    %v4479 = vrot.slane %v4422, 6
    %v4480 = vrot.slane %v4422, 7
    %v4481 = vrot.slane %v4423, 1
    %v4482 = vrot.slane %v4423, 2
    %v4483 = vrot.slane %v4423, 3
    %v4484 = vrot.slane %v4423, 4
    %v4485 = vrot.slane %v4423, 5
    %v4486 = vrot.slane %v4423, 6
    %v4487 = vrot.slane %v4423, 7
    %v4552 = vmul.f32 %v4072, %v4416
    %v4553 = vmul.f32 %v4073, %v4432
    %v4554 = vmul.f32 %v4074, %v4433
    %v4555 = vmul.f32 %v4075, %v4434
    %v4556 = vmul.f32 %v4076, %v4435
    %v4557 = vmul.f32 %v4077, %v4436
    %v4558 = vmul.f32 %v4078, %v4437
    %v4559 = vmul.f32 %v4079, %v4438
    %v4560 = vmul.f32 %v4080, %v4417
    %v4561 = vmul.f32 %v4081, %v4439
    %v4562 = vmul.f32 %v4082, %v4440
    %v4563 = vmul.f32 %v4083, %v4441
    %v4564 = vmul.f32 %v4084, %v4442
    %v4565 = vmul.f32 %v4085, %v4443
    %v4566 = vmul.f32 %v4086, %v4444
    %v4567 = vmul.f32 %v4087, %v4445
    %v4568 = vmul.f32 %v4088, %v4418
    %v4569 = vmul.f32 %v4089, %v4446
    %v4570 = vmul.f32 %v4090, %v4447
    %v4571 = vmul.f32 %v4091, %v4448
    %v4572 = vmul.f32 %v4092, %v4449
    %v4573 = vmul.f32 %v4093, %v4450
    %v4574 = vmul.f32 %v4094, %v4451
    %v4575 = vmul.f32 %v4095, %v4452
    %v4576 = vmul.f32 %v4096, %v4419
    %v4577 = vmul.f32 %v4097, %v4453
    %v4578 = vmul.f32 %v4098, %v4454
    %v4579 = vmul.f32 %v4099, %v4455
    %v4580 = vmul.f32 %v4100, %v4456
    %v4581 = vmul.f32 %v4101, %v4457
    %v4582 = vmul.f32 %v4102, %v4458
    %v4583 = vmul.f32 %v4103, %v4459
    %v4584 = vmul.f32 %v4104, %v4420
    %v4585 = vmul.f32 %v4105, %v4460
    %v4586 = vmul.f32 %v4106, %v4461
    %v4587 = vmul.f32 %v4107, %v4462
    %v4588 = vmul.f32 %v4108, %v4463
    %v4589 = vmul.f32 %v4109, %v4464
    %v4590 = vmul.f32 %v4110, %v4465
    %v4591 = vmul.f32 %v4111, %v4466
    %v4592 = vmul.f32 %v4112, %v4421
    %v4593 = vmul.f32 %v4113, %v4467
    %v4594 = vmul.f32 %v4114, %v4468
    %v4595 = vmul.f32 %v4115, %v4469
    %v4596 = vmul.f32 %v4116, %v4470
    %v4597 = vmul.f32 %v4117, %v4471
    %v4598 = vmul.f32 %v4118, %v4472
    %v4599 = vmul.f32 %v4119, %v4473
    %v4600 = vmul.f32 %v4120, %v4422
    %v4601 = vmul.f32 %v4121, %v4474
    %v4602 = vmul.f32 %v4122, %v4475
    %v4603 = vmul.f32 %v4123, %v4476
    %v4604 = vmul.f32 %v4124, %v4477
    %v4605 = vmul.f32 %v4125, %v4478
    %v4606 = vmul.f32 %v4126, %v4479
    %v4607 = vmul.f32 %v4127, %v4480
    %v4608 = vmul.f32 %v4128, %v4423
    %v4609 = vmul.f32 %v4129, %v4481
    %v4610 = vmul.f32 %v4130, %v4482
    %v4611 = vmul.f32 %v4131, %v4483
    %v4612 = vmul.f32 %v4132, %v4484
    %v4613 = vmul.f32 %v4133, %v4485
    %v4614 = vmul.f32 %v4134, %v4486
    %v4615 = vmul.f32 %v4135, %v4487
    %v4617 = vlaneseq
    %v4618 = vshrl.u32 %v4617, 7
    %v4619 = vsub.s32 0, %v4618
    %v4620 = vrot.slane %v3727, %v4619
    %v4622 = vmul.f32 %v4552, %v4620
    %v4623 = vmul.f32 %v4553, %v4620
    %v4624 = vmul.f32 %v4554, %v4620
    %v4625 = vmul.f32 %v4555, %v4620
    %v4626 = vmul.f32 %v4556, %v4620
    %v4627 = vmul.f32 %v4557, %v4620
    %v4628 = vmul.f32 %v4558, %v4620
    %v4629 = vmul.f32 %v4559, %v4620
    %v4630 = vmul.f32 %v4560, %v4620
    %v4631 = vmul.f32 %v4561, %v4620
    %v4632 = vmul.f32 %v4562, %v4620
    %v4633 = vmul.f32 %v4563, %v4620
    %v4634 = vmul.f32 %v4564, %v4620
    %v4635 = vmul.f32 %v4565, %v4620
    %v4636 = vmul.f32 %v4566, %v4620
    %v4637 = vmul.f32 %v4567, %v4620
    %v4638 = vmul.f32 %v4568, %v4620
    %v4639 = vmul.f32 %v4569, %v4620
    %v4640 = vmul.f32 %v4570, %v4620
    %v4641 = vmul.f32 %v4571, %v4620
    %v4642 = vmul.f32 %v4572, %v4620
    %v4643 = vmul.f32 %v4573, %v4620
    %v4644 = vmul.f32 %v4574, %v4620
    %v4645 = vmul.f32 %v4575, %v4620
    %v4646 = vmul.f32 %v4576, %v4620
    %v4647 = vmul.f32 %v4577, %v4620
    %v4648 = vmul.f32 %v4578, %v4620
    %v4649 = vmul.f32 %v4579, %v4620
    %v4650 = vmul.f32 %v4580, %v4620
    %v4651 = vmul.f32 %v4581, %v4620
    %v4652 = vmul.f32 %v4582, %v4620
    %v4653 = vmul.f32 %v4583, %v4620
    %v4654 = vmul.f32 %v4584, %v4620
    %v4655 = vmul.f32 %v4585, %v4620
    %v4656 = vmul.f32 %v4586, %v4620
    %v4657 = vmul.f32 %v4587, %v4620
    %v4658 = vmul.f32 %v4588, %v4620
    %v4659 = vmul.f32 %v4589, %v4620
    %v4660 = vmul.f32 %v4590, %v4620
    %v4661 = vmul.f32 %v4591, %v4620
    %v4662 = vmul.f32 %v4592, %v4620
    %v4663 = vmul.f32 %v4593, %v4620
    %v4664 = vmul.f32 %v4594, %v4620
    %v4665 = vmul.f32 %v4595, %v4620
    %v4666 = vmul.f32 %v4596, %v4620
    %v4667 = vmul.f32 %v4597, %v4620
    %v4668 = vmul.f32 %v4598, %v4620
    %v4669 = vmul.f32 %v4599, %v4620
    %v4670 = vmul.f32 %v4600, %v4620
    %v4671 = vmul.f32 %v4601, %v4620
    %v4672 = vmul.f32 %v4602, %v4620
    %v4673 = vmul.f32 %v4603, %v4620
    %v4674 = vmul.f32 %v4604, %v4620
    %v4675 = vmul.f32 %v4605, %v4620
    %v4676 = vmul.f32 %v4606, %v4620
    %v4677 = vmul.f32 %v4607, %v4620
    %v4678 = vmul.f32 %v4608, %v4620
    %v4679 = vmul.f32 %v4609, %v4620
    %v4680 = vmul.f32 %v4610, %v4620
    %v4681 = vmul.f32 %v4611, %v4620
    %v4682 = vmul.f32 %v4612, %v4620
    %v4683 = vmul.f32 %v4613, %v4620
    %v4684 = vmul.f32 %v4614, %v4620
    %v4685 = vmul.f32 %v4615, %v4620
    %v4687 = vlaneseq
    %v4688 = vshrl.u32 %v4687, 7
    %v4689 = vsub.s32 0, %v4688
    %v4690 = vrot.slane %v3728, %v4689
    %v4692 = vadd.f32 %v4622, %v4690
    %v4693 = vadd.f32 %v4623, %v4690
    %v4694 = vadd.f32 %v4624, %v4690
    %v4695 = vadd.f32 %v4625, %v4690
    %v4696 = vadd.f32 %v4626, %v4690
    %v4697 = vadd.f32 %v4627, %v4690
    %v4698 = vadd.f32 %v4628, %v4690
    %v4699 = vadd.f32 %v4629, %v4690
    %v4700 = vadd.f32 %v4630, %v4690
    %v4701 = vadd.f32 %v4631, %v4690
    %v4702 = vadd.f32 %v4632, %v4690
    %v4703 = vadd.f32 %v4633, %v4690
    %v4704 = vadd.f32 %v4634, %v4690
    %v4705 = vadd.f32 %v4635, %v4690
    %v4706 = vadd.f32 %v4636, %v4690
    %v4707 = vadd.f32 %v4637, %v4690
    %v4708 = vadd.f32 %v4638, %v4690
    %v4709 = vadd.f32 %v4639, %v4690
    %v4710 = vadd.f32 %v4640, %v4690
    %v4711 = vadd.f32 %v4641, %v4690
    %v4712 = vadd.f32 %v4642, %v4690
    %v4713 = vadd.f32 %v4643, %v4690
    %v4714 = vadd.f32 %v4644, %v4690
    %v4715 = vadd.f32 %v4645, %v4690
    %v4716 = vadd.f32 %v4646, %v4690
    %v4717 = vadd.f32 %v4647, %v4690
    %v4718 = vadd.f32 %v4648, %v4690
    %v4719 = vadd.f32 %v4649, %v4690
    %v4720 = vadd.f32 %v4650, %v4690
    %v4721 = vadd.f32 %v4651, %v4690
    %v4722 = vadd.f32 %v4652, %v4690
    %v4723 = vadd.f32 %v4653, %v4690
    %v4724 = vadd.f32 %v4654, %v4690
    %v4725 = vadd.f32 %v4655, %v4690
    %v4726 = vadd.f32 %v4656, %v4690
    %v4727 = vadd.f32 %v4657, %v4690
    %v4728 = vadd.f32 %v4658, %v4690
    %v4729 = vadd.f32 %v4659, %v4690
    %v4730 = vadd.f32 %v4660, %v4690
    %v4731 = vadd.f32 %v4661, %v4690
    %v4732 = vadd.f32 %v4662, %v4690
    %v4733 = vadd.f32 %v4663, %v4690
    %v4734 = vadd.f32 %v4664, %v4690
    %v4735 = vadd.f32 %v4665, %v4690
    %v4736 = vadd.f32 %v4666, %v4690
    %v4737 = vadd.f32 %v4667, %v4690
    %v4738 = vadd.f32 %v4668, %v4690
    %v4739 = vadd.f32 %v4669, %v4690
    %v4740 = vadd.f32 %v4670, %v4690
    %v4741 = vadd.f32 %v4671, %v4690
    %v4742 = vadd.f32 %v4672, %v4690
    %v4743 = vadd.f32 %v4673, %v4690
    %v4744 = vadd.f32 %v4674, %v4690
    %v4745 = vadd.f32 %v4675, %v4690
    %v4746 = vadd.f32 %v4676, %v4690
    %v4747 = vadd.f32 %v4677, %v4690
    %v4748 = vadd.f32 %v4678, %v4690
    %v4749 = vadd.f32 %v4679, %v4690
    %v4750 = vadd.f32 %v4680, %v4690
    %v4751 = vadd.f32 %v4681, %v4690
    %v4752 = vadd.f32 %v4682, %v4690
    %v4753 = vadd.f32 %v4683, %v4690
    %v4754 = vadd.f32 %v4684, %v4690
    %v4755 = vadd.f32 %v4685, %v4690
    %v4820 = vrot.slane %v4693, 7
    %v4821 = vsel %vm3794, %v4820, %v4692
    %v4822 = vrot.slane %v4694, 6
    %v4823 = vsel %vm3797, %v4822, %v4821
    %v4824 = vrot.slane %v4695, 5
    %v4825 = vsel %vm3800, %v4824, %v4823
    %v4826 = vrot.slane %v4696, 4
    %v4827 = vsel %vm3803, %v4826, %v4825
    %v4828 = vrot.slane %v4697, 3
    %v4829 = vsel %vm3806, %v4828, %v4827
    %v4830 = vrot.slane %v4698, 2
    %v4831 = vsel %vm3809, %v4830, %v4829
    %v4832 = vrot.slane %v4699, 1
    %v4833 = vsel %vm3812, %v4832, %v4831
    %v4834 = vrot.slane %v4701, 7
    %v4835 = vsel %vm3794, %v4834, %v4700
    %v4836 = vrot.slane %v4702, 6
    %v4837 = vsel %vm3797, %v4836, %v4835
    %v4838 = vrot.slane %v4703, 5
    %v4839 = vsel %vm3800, %v4838, %v4837
    %v4840 = vrot.slane %v4704, 4
    %v4841 = vsel %vm3803, %v4840, %v4839
    %v4842 = vrot.slane %v4705, 3
    %v4843 = vsel %vm3806, %v4842, %v4841
    %v4844 = vrot.slane %v4706, 2
    %v4845 = vsel %vm3809, %v4844, %v4843
    %v4846 = vrot.slane %v4707, 1
    %v4847 = vsel %vm3812, %v4846, %v4845
    %v4848 = vrot.slane %v4709, 7
    %v4849 = vsel %vm3794, %v4848, %v4708
    %v4850 = vrot.slane %v4710, 6
    %v4851 = vsel %vm3797, %v4850, %v4849
    %v4852 = vrot.slane %v4711, 5
    %v4853 = vsel %vm3800, %v4852, %v4851
    %v4854 = vrot.slane %v4712, 4
    %v4855 = vsel %vm3803, %v4854, %v4853
    %v4856 = vrot.slane %v4713, 3
    %v4857 = vsel %vm3806, %v4856, %v4855
    %v4858 = vrot.slane %v4714, 2
    %v4859 = vsel %vm3809, %v4858, %v4857
    %v4860 = vrot.slane %v4715, 1
    %v4861 = vsel %vm3812, %v4860, %v4859
    %v4862 = vrot.slane %v4717, 7
    %v4863 = vsel %vm3794, %v4862, %v4716
    %v4864 = vrot.slane %v4718, 6
    %v4865 = vsel %vm3797, %v4864, %v4863
    %v4866 = vrot.slane %v4719, 5
    %v4867 = vsel %vm3800, %v4866, %v4865
    %v4868 = vrot.slane %v4720, 4
    %v4869 = vsel %vm3803, %v4868, %v4867
    %v4870 = vrot.slane %v4721, 3
    %v4871 = vsel %vm3806, %v4870, %v4869
    %v4872 = vrot.slane %v4722, 2
    %v4873 = vsel %vm3809, %v4872, %v4871
    %v4874 = vrot.slane %v4723, 1
    %v4875 = vsel %vm3812, %v4874, %v4873
    %v4876 = vrot.slane %v4725, 7
    %v4877 = vsel %vm3794, %v4876, %v4724
    %v4878 = vrot.slane %v4726, 6
    %v4879 = vsel %vm3797, %v4878, %v4877
    %v4880 = vrot.slane %v4727, 5
    %v4881 = vsel %vm3800, %v4880, %v4879
    %v4882 = vrot.slane %v4728, 4
    %v4883 = vsel %vm3803, %v4882, %v4881
    %v4884 = vrot.slane %v4729, 3
    %v4885 = vsel %vm3806, %v4884, %v4883
    %v4886 = vrot.slane %v4730, 2
    %v4887 = vsel %vm3809, %v4886, %v4885
    %v4888 = vrot.slane %v4731, 1
    %v4889 = vsel %vm3812, %v4888, %v4887
    %v4890 = vrot.slane %v4733, 7
    %v4891 = vsel %vm3794, %v4890, %v4732
    %v4892 = vrot.slane %v4734, 6
    %v4893 = vsel %vm3797, %v4892, %v4891
    %v4894 = vrot.slane %v4735, 5
    %v4895 = vsel %vm3800, %v4894, %v4893
    %v4896 = vrot.slane %v4736, 4
    %v4897 = vsel %vm3803, %v4896, %v4895
    %v4898 = vrot.slane %v4737, 3
    %v4899 = vsel %vm3806, %v4898, %v4897
    %v4900 = vrot.slane %v4738, 2
    %v4901 = vsel %vm3809, %v4900, %v4899
    %v4902 = vrot.slane %v4739, 1
    %v4903 = vsel %vm3812, %v4902, %v4901
    %v4904 = vrot.slane %v4741, 7
    %v4905 = vsel %vm3794, %v4904, %v4740
    %v4906 = vrot.slane %v4742, 6
    %v4907 = vsel %vm3797, %v4906, %v4905
    %v4908 = vrot.slane %v4743, 5
    %v4909 = vsel %vm3800, %v4908, %v4907
    %v4910 = vrot.slane %v4744, 4
    %v4911 = vsel %vm3803, %v4910, %v4909
    %v4912 = vrot.slane %v4745, 3
    %v4913 = vsel %vm3806, %v4912, %v4911
    %v4914 = vrot.slane %v4746, 2
    %v4915 = vsel %vm3809, %v4914, %v4913
    %v4916 = vrot.slane %v4747, 1
    %v4917 = vsel %vm3812, %v4916, %v4915
    %v4918 = vrot.slane %v4749, 7
    %v4919 = vsel %vm3794, %v4918, %v4748
    %v4920 = vrot.slane %v4750, 6
    %v4921 = vsel %vm3797, %v4920, %v4919
    %v4922 = vrot.slane %v4751, 5
    %v4923 = vsel %vm3800, %v4922, %v4921
    %v4924 = vrot.slane %v4752, 4
    %v4925 = vsel %vm3803, %v4924, %v4923
    %v4926 = vrot.slane %v4753, 3
    %v4927 = vsel %vm3806, %v4926, %v4925
    %v4928 = vrot.slane %v4754, 2
    %v4929 = vsel %vm3809, %v4928, %v4927
    %v4930 = vrot.slane %v4755, 1
    %v4931 = vsel %vm3812, %v4930, %v4929
    %4940 = vst [vmem:[#allocation2] sm:$0xff] %v4833
    %4941 = vst [vmem:[#allocation2 + $0x8] sm:$0xff] %v4847
    %4942 = vst [vmem:[#allocation2 + $0x10] sm:$0xff] %v4861
    %4943 = vst [vmem:[#allocation2 + $0x18] sm:$0xff] %v4875
    %4944 = vst [vmem:[#allocation2 + $0x20] sm:$0xff] %v4889
    %4945 = vst [vmem:[#allocation2 + $0x28] sm:$0xff] %v4903
    %4946 = vst [vmem:[#allocation2 + $0x30] sm:$0xff] %v4917
    %4947 = vst [vmem:[#allocation2 + $0x38] sm:$0xff] %v4931
    %4948 = vadd.xlane.f32.xlu0 %v2591
    %v4949 = vpop.xlane.xlu0 %4948
    %4950 = vadd.xlane.f32.xlu0 %v2592
    %v4951 = vpop.xlane.xlu0 %4950
    %4952 = vadd.xlane.f32.xlu0 %v2593
    %v4953 = vpop.xlane.xlu0 %4952
    %4954 = vadd.xlane.f32.xlu0 %v2594
    %v4955 = vpop.xlane.xlu0 %4954
    %4956 = vadd.xlane.f32.xlu0 %v2595
    %v4957 = vpop.xlane.xlu0 %4956
    %4958 = vadd.xlane.f32.xlu0 %v2596
    %v4959 = vpop.xlane.xlu0 %4958
    %4960 = vadd.xlane.f32.xlu0 %v2597
    %v4961 = vpop.xlane.xlu0 %4960
    %4962 = vadd.xlane.f32.xlu0 %v2598
    %v4963 = vpop.xlane.xlu0 %4962
    %4964 = vadd.xlane.f32.xlu0 %v2599
    %v4965 = vpop.xlane.xlu0 %4964
    %4966 = vadd.xlane.f32.xlu0 %v2600
    %v4967 = vpop.xlane.xlu0 %4966
    %4968 = vadd.xlane.f32.xlu0 %v2601
    %v4969 = vpop.xlane.xlu0 %4968
    %4970 = vadd.xlane.f32.xlu0 %v2602
    %v4971 = vpop.xlane.xlu0 %4970
    %4972 = vadd.xlane.f32.xlu0 %v2603
    %v4973 = vpop.xlane.xlu0 %4972
    %4974 = vadd.xlane.f32.xlu0 %v2604
    %v4975 = vpop.xlane.xlu0 %4974
    %4976 = vadd.xlane.f32.xlu0 %v2605
    %v4977 = vpop.xlane.xlu0 %4976
    %4978 = vadd.xlane.f32.xlu0 %v2606
    %v4979 = vpop.xlane.xlu0 %4978
    %4980 = vadd.xlane.f32.xlu0 %v2607
    %v4981 = vpop.xlane.xlu0 %4980
    %4982 = vadd.xlane.f32.xlu0 %v2608
    %v4983 = vpop.xlane.xlu0 %4982
    %4984 = vadd.xlane.f32.xlu0 %v2609
    %v4985 = vpop.xlane.xlu0 %4984
    %4986 = vadd.xlane.f32.xlu0 %v2610
    %v4987 = vpop.xlane.xlu0 %4986
    %4988 = vadd.xlane.f32.xlu0 %v2611
    %v4989 = vpop.xlane.xlu0 %4988
    %4990 = vadd.xlane.f32.xlu0 %v2612
    %v4991 = vpop.xlane.xlu0 %4990
    %4992 = vadd.xlane.f32.xlu0 %v2613
    %v4993 = vpop.xlane.xlu0 %4992
    %4994 = vadd.xlane.f32.xlu0 %v2614
    %v4995 = vpop.xlane.xlu0 %4994
    %4996 = vadd.xlane.f32.xlu0 %v2615
    %v4997 = vpop.xlane.xlu0 %4996
    %4998 = vadd.xlane.f32.xlu0 %v2616
    %v4999 = vpop.xlane.xlu0 %4998
    %5000 = vadd.xlane.f32.xlu0 %v2617
    %v5001 = vpop.xlane.xlu0 %5000
    %5002 = vadd.xlane.f32.xlu0 %v2618
    %v5003 = vpop.xlane.xlu0 %5002
    %5004 = vadd.xlane.f32.xlu0 %v2619
    %v5005 = vpop.xlane.xlu0 %5004
    %5006 = vadd.xlane.f32.xlu0 %v2620
    %v5007 = vpop.xlane.xlu0 %5006
    %5008 = vadd.xlane.f32.xlu0 %v2621
    %v5009 = vpop.xlane.xlu0 %5008
    %5010 = vadd.xlane.f32.xlu0 %v2622
    %v5011 = vpop.xlane.xlu0 %5010
    %5012 = vadd.xlane.f32.xlu0 %v2623
    %v5013 = vpop.xlane.xlu0 %5012
    %5014 = vadd.xlane.f32.xlu0 %v2624
    %v5015 = vpop.xlane.xlu0 %5014
    %5016 = vadd.xlane.f32.xlu0 %v2625
    %v5017 = vpop.xlane.xlu0 %5016
    %5018 = vadd.xlane.f32.xlu0 %v2626
    %v5019 = vpop.xlane.xlu0 %5018
    %5020 = vadd.xlane.f32.xlu0 %v2627
    %v5021 = vpop.xlane.xlu0 %5020
    %5022 = vadd.xlane.f32.xlu0 %v2628
    %v5023 = vpop.xlane.xlu0 %5022
    %5024 = vadd.xlane.f32.xlu0 %v2629
    %v5025 = vpop.xlane.xlu0 %5024
    %5026 = vadd.xlane.f32.xlu0 %v2630
    %v5027 = vpop.xlane.xlu0 %5026
    %5028 = vadd.xlane.f32.xlu0 %v2631
    %v5029 = vpop.xlane.xlu0 %5028
    %5030 = vadd.xlane.f32.xlu0 %v2632
    %v5031 = vpop.xlane.xlu0 %5030
    %5032 = vadd.xlane.f32.xlu0 %v2633
    %v5033 = vpop.xlane.xlu0 %5032
    %5034 = vadd.xlane.f32.xlu0 %v2634
    %v5035 = vpop.xlane.xlu0 %5034
    %5036 = vadd.xlane.f32.xlu0 %v2635
    %v5037 = vpop.xlane.xlu0 %5036
    %5038 = vadd.xlane.f32.xlu0 %v2636
    %v5039 = vpop.xlane.xlu0 %5038
    %5040 = vadd.xlane.f32.xlu0 %v2637
    %v5041 = vpop.xlane.xlu0 %5040
    %5042 = vadd.xlane.f32.xlu0 %v2638
    %v5043 = vpop.xlane.xlu0 %5042
    %5044 = vadd.xlane.f32.xlu0 %v2639
    %v5045 = vpop.xlane.xlu0 %5044
    %5046 = vadd.xlane.f32.xlu0 %v2640
    %v5047 = vpop.xlane.xlu0 %5046
    %5048 = vadd.xlane.f32.xlu0 %v2641
    %v5049 = vpop.xlane.xlu0 %5048
    %5050 = vadd.xlane.f32.xlu0 %v2642
    %v5051 = vpop.xlane.xlu0 %5050
    %5052 = vadd.xlane.f32.xlu0 %v2643
    %v5053 = vpop.xlane.xlu0 %5052
    %5054 = vadd.xlane.f32.xlu0 %v2644
    %v5055 = vpop.xlane.xlu0 %5054
    %5056 = vadd.xlane.f32.xlu0 %v2645
    %v5057 = vpop.xlane.xlu0 %5056
    %5058 = vadd.xlane.f32.xlu0 %v2646
    %v5059 = vpop.xlane.xlu0 %5058
    %5060 = vadd.xlane.f32.xlu0 %v2647
    %v5061 = vpop.xlane.xlu0 %5060
    %5062 = vadd.xlane.f32.xlu0 %v2648
    %v5063 = vpop.xlane.xlu0 %5062
    %5064 = vadd.xlane.f32.xlu0 %v2649
    %v5065 = vpop.xlane.xlu0 %5064
    %5066 = vadd.xlane.f32.xlu0 %v2650
    %v5067 = vpop.xlane.xlu0 %5066
    %5068 = vadd.xlane.f32.xlu0 %v2651
    %v5069 = vpop.xlane.xlu0 %5068
    %5070 = vadd.xlane.f32.xlu0 %v2652
    %v5071 = vpop.xlane.xlu0 %5070
    %5072 = vadd.xlane.f32.xlu0 %v2653
    %v5073 = vpop.xlane.xlu0 %5072
    %5074 = vadd.xlane.f32.xlu0 %v2654
    %v5075 = vpop.xlane.xlu0 %5074
    %v5076 = vmul.f32 %v4949, %v802
    %v5077 = vmul.f32 %v4951, %v802
    %v5078 = vmul.f32 %v4953, %v802
    %v5079 = vmul.f32 %v4955, %v802
    %v5080 = vmul.f32 %v4957, %v802
    %v5081 = vmul.f32 %v4959, %v802
    %v5082 = vmul.f32 %v4961, %v802
    %v5083 = vmul.f32 %v4963, %v802
    %v5084 = vmul.f32 %v4965, %v802
    %v5085 = vmul.f32 %v4967, %v802
    %v5086 = vmul.f32 %v4969, %v802
    %v5087 = vmul.f32 %v4971, %v802
    %v5088 = vmul.f32 %v4973, %v802
    %v5089 = vmul.f32 %v4975, %v802
    %v5090 = vmul.f32 %v4977, %v802
    %v5091 = vmul.f32 %v4979, %v802
    %v5092 = vmul.f32 %v4981, %v802
    %v5093 = vmul.f32 %v4983, %v802
    %v5094 = vmul.f32 %v4985, %v802
    %v5095 = vmul.f32 %v4987, %v802
    %v5096 = vmul.f32 %v4989, %v802
    %v5097 = vmul.f32 %v4991, %v802
    %v5098 = vmul.f32 %v4993, %v802
    %v5099 = vmul.f32 %v4995, %v802
    %v5100 = vmul.f32 %v4997, %v802
    %v5101 = vmul.f32 %v4999, %v802
    %v5102 = vmul.f32 %v5001, %v802
    %v5103 = vmul.f32 %v5003, %v802
    %v5104 = vmul.f32 %v5005, %v802
    %v5105 = vmul.f32 %v5007, %v802
    %v5106 = vmul.f32 %v5009, %v802
    %v5107 = vmul.f32 %v5011, %v802
    %v5108 = vmul.f32 %v5013, %v802
    %v5109 = vmul.f32 %v5015, %v802
    %v5110 = vmul.f32 %v5017, %v802
    %v5111 = vmul.f32 %v5019, %v802
    %v5112 = vmul.f32 %v5021, %v802
    %v5113 = vmul.f32 %v5023, %v802
    %v5114 = vmul.f32 %v5025, %v802
    %v5115 = vmul.f32 %v5027, %v802
    %v5116 = vmul.f32 %v5029, %v802
    %v5117 = vmul.f32 %v5031, %v802
    %v5118 = vmul.f32 %v5033, %v802
    %v5119 = vmul.f32 %v5035, %v802
    %v5120 = vmul.f32 %v5037, %v802
    %v5121 = vmul.f32 %v5039, %v802
    %v5122 = vmul.f32 %v5041, %v802
    %v5123 = vmul.f32 %v5043, %v802
    %v5124 = vmul.f32 %v5045, %v802
    %v5125 = vmul.f32 %v5047, %v802
    %v5126 = vmul.f32 %v5049, %v802
    %v5127 = vmul.f32 %v5051, %v802
    %v5128 = vmul.f32 %v5053, %v802
    %v5129 = vmul.f32 %v5055, %v802
    %v5130 = vmul.f32 %v5057, %v802
    %v5131 = vmul.f32 %v5059, %v802
    %v5132 = vmul.f32 %v5061, %v802
    %v5133 = vmul.f32 %v5063, %v802
    %v5134 = vmul.f32 %v5065, %v802
    %v5135 = vmul.f32 %v5067, %v802
    %v5136 = vmul.f32 %v5069, %v802
    %v5137 = vmul.f32 %v5071, %v802
    %v5138 = vmul.f32 %v5073, %v802
    %v5139 = vmul.f32 %v5075, %v802
    %v5140 = vsub.f32 %v2591, %v5076
    %v5141 = vsub.f32 %v2592, %v5077
    %v5142 = vsub.f32 %v2593, %v5078
    %v5143 = vsub.f32 %v2594, %v5079
    %v5144 = vsub.f32 %v2595, %v5080
    %v5145 = vsub.f32 %v2596, %v5081
    %v5146 = vsub.f32 %v2597, %v5082
    %v5147 = vsub.f32 %v2598, %v5083
    %v5148 = vsub.f32 %v2599, %v5084
    %v5149 = vsub.f32 %v2600, %v5085
    %v5150 = vsub.f32 %v2601, %v5086
    %v5151 = vsub.f32 %v2602, %v5087
    %v5152 = vsub.f32 %v2603, %v5088
    %v5153 = vsub.f32 %v2604, %v5089
    %v5154 = vsub.f32 %v2605, %v5090
    %v5155 = vsub.f32 %v2606, %v5091
    %v5156 = vsub.f32 %v2607, %v5092
    %v5157 = vsub.f32 %v2608, %v5093
    %v5158 = vsub.f32 %v2609, %v5094
    %v5159 = vsub.f32 %v2610, %v5095
    %v5160 = vsub.f32 %v2611, %v5096
    %v5161 = vsub.f32 %v2612, %v5097
    %v5162 = vsub.f32 %v2613, %v5098
    %v5163 = vsub.f32 %v2614, %v5099
    %v5164 = vsub.f32 %v2615, %v5100
    %v5165 = vsub.f32 %v2616, %v5101
    %v5166 = vsub.f32 %v2617, %v5102
    %v5167 = vsub.f32 %v2618, %v5103
    %v5168 = vsub.f32 %v2619, %v5104
    %v5169 = vsub.f32 %v2620, %v5105
    %v5170 = vsub.f32 %v2621, %v5106
    %v5171 = vsub.f32 %v2622, %v5107
    %v5172 = vsub.f32 %v2623, %v5108
    %v5173 = vsub.f32 %v2624, %v5109
    %v5174 = vsub.f32 %v2625, %v5110
    %v5175 = vsub.f32 %v2626, %v5111
    %v5176 = vsub.f32 %v2627, %v5112
    %v5177 = vsub.f32 %v2628, %v5113
    %v5178 = vsub.f32 %v2629, %v5114
    %v5179 = vsub.f32 %v2630, %v5115
    %v5180 = vsub.f32 %v2631, %v5116
    %v5181 = vsub.f32 %v2632, %v5117
    %v5182 = vsub.f32 %v2633, %v5118
    %v5183 = vsub.f32 %v2634, %v5119
    %v5184 = vsub.f32 %v2635, %v5120
    %v5185 = vsub.f32 %v2636, %v5121
    %v5186 = vsub.f32 %v2637, %v5122
    %v5187 = vsub.f32 %v2638, %v5123
    %v5188 = vsub.f32 %v2639, %v5124
    %v5189 = vsub.f32 %v2640, %v5125
    %v5190 = vsub.f32 %v2641, %v5126
    %v5191 = vsub.f32 %v2642, %v5127
    %v5192 = vsub.f32 %v2643, %v5128
    %v5193 = vsub.f32 %v2644, %v5129
    %v5194 = vsub.f32 %v2645, %v5130
    %v5195 = vsub.f32 %v2646, %v5131
    %v5196 = vsub.f32 %v2647, %v5132
    %v5197 = vsub.f32 %v2648, %v5133
    %v5198 = vsub.f32 %v2649, %v5134
    %v5199 = vsub.f32 %v2650, %v5135
    %v5200 = vsub.f32 %v2651, %v5136
    %v5201 = vsub.f32 %v2652, %v5137
    %v5202 = vsub.f32 %v2653, %v5138
    %v5203 = vsub.f32 %v2654, %v5139
    %v5204 = vmul.f32 %v5140, %v5140
    %v5205 = vmul.f32 %v5141, %v5141
    %v5206 = vmul.f32 %v5142, %v5142
    %v5207 = vmul.f32 %v5143, %v5143
    %v5208 = vmul.f32 %v5144, %v5144
    %v5209 = vmul.f32 %v5145, %v5145
    %v5210 = vmul.f32 %v5146, %v5146
    %v5211 = vmul.f32 %v5147, %v5147
    %v5212 = vmul.f32 %v5148, %v5148
    %v5213 = vmul.f32 %v5149, %v5149
    %v5214 = vmul.f32 %v5150, %v5150
    %v5215 = vmul.f32 %v5151, %v5151
    %v5216 = vmul.f32 %v5152, %v5152
    %v5217 = vmul.f32 %v5153, %v5153
    %v5218 = vmul.f32 %v5154, %v5154
    %v5219 = vmul.f32 %v5155, %v5155
    %v5220 = vmul.f32 %v5156, %v5156
    %v5221 = vmul.f32 %v5157, %v5157
    %v5222 = vmul.f32 %v5158, %v5158
    %v5223 = vmul.f32 %v5159, %v5159
    %v5224 = vmul.f32 %v5160, %v5160
    %v5225 = vmul.f32 %v5161, %v5161
    %v5226 = vmul.f32 %v5162, %v5162
    %v5227 = vmul.f32 %v5163, %v5163
    %v5228 = vmul.f32 %v5164, %v5164
    %v5229 = vmul.f32 %v5165, %v5165
    %v5230 = vmul.f32 %v5166, %v5166
    %v5231 = vmul.f32 %v5167, %v5167
    %v5232 = vmul.f32 %v5168, %v5168
    %v5233 = vmul.f32 %v5169, %v5169
    %v5234 = vmul.f32 %v5170, %v5170
    %v5235 = vmul.f32 %v5171, %v5171
    %v5236 = vmul.f32 %v5172, %v5172
    %v5237 = vmul.f32 %v5173, %v5173
    %v5238 = vmul.f32 %v5174, %v5174
    %v5239 = vmul.f32 %v5175, %v5175
    %v5240 = vmul.f32 %v5176, %v5176
    %v5241 = vmul.f32 %v5177, %v5177
    %v5242 = vmul.f32 %v5178, %v5178
    %v5243 = vmul.f32 %v5179, %v5179
    %v5244 = vmul.f32 %v5180, %v5180
    %v5245 = vmul.f32 %v5181, %v5181
    %v5246 = vmul.f32 %v5182, %v5182
    %v5247 = vmul.f32 %v5183, %v5183
    %v5248 = vmul.f32 %v5184, %v5184
    %v5249 = vmul.f32 %v5185, %v5185
    %v5250 = vmul.f32 %v5186, %v5186
    %v5251 = vmul.f32 %v5187, %v5187
    %v5252 = vmul.f32 %v5188, %v5188
    %v5253 = vmul.f32 %v5189, %v5189
    %v5254 = vmul.f32 %v5190, %v5190
    %v5255 = vmul.f32 %v5191, %v5191
    %v5256 = vmul.f32 %v5192, %v5192
    %v5257 = vmul.f32 %v5193, %v5193
    %v5258 = vmul.f32 %v5194, %v5194
    %v5259 = vmul.f32 %v5195, %v5195
    %v5260 = vmul.f32 %v5196, %v5196
    %v5261 = vmul.f32 %v5197, %v5197
    %v5262 = vmul.f32 %v5198, %v5198
    %v5263 = vmul.f32 %v5199, %v5199
    %v5264 = vmul.f32 %v5200, %v5200
    %v5265 = vmul.f32 %v5201, %v5201
    %v5266 = vmul.f32 %v5202, %v5202
    %v5267 = vmul.f32 %v5203, %v5203
    %5268 = vadd.xlane.f32.xlu0 %v5204
    %v5269 = vpop.xlane.xlu0 %5268
    %5270 = vadd.xlane.f32.xlu0 %v5205
    %v5271 = vpop.xlane.xlu0 %5270
    %5272 = vadd.xlane.f32.xlu0 %v5206
    %v5273 = vpop.xlane.xlu0 %5272
    %5274 = vadd.xlane.f32.xlu0 %v5207
    %v5275 = vpop.xlane.xlu0 %5274
    %5276 = vadd.xlane.f32.xlu0 %v5208
    %v5277 = vpop.xlane.xlu0 %5276
    %5278 = vadd.xlane.f32.xlu0 %v5209
    %v5279 = vpop.xlane.xlu0 %5278
    %5280 = vadd.xlane.f32.xlu0 %v5210
    %v5281 = vpop.xlane.xlu0 %5280
    %5282 = vadd.xlane.f32.xlu0 %v5211
    %v5283 = vpop.xlane.xlu0 %5282
    %5284 = vadd.xlane.f32.xlu0 %v5212
    %v5285 = vpop.xlane.xlu0 %5284
    %5286 = vadd.xlane.f32.xlu0 %v5213
    %v5287 = vpop.xlane.xlu0 %5286
    %5288 = vadd.xlane.f32.xlu0 %v5214
    %v5289 = vpop.xlane.xlu0 %5288
    %5290 = vadd.xlane.f32.xlu0 %v5215
    %v5291 = vpop.xlane.xlu0 %5290
    %5292 = vadd.xlane.f32.xlu0 %v5216
    %v5293 = vpop.xlane.xlu0 %5292
    %5294 = vadd.xlane.f32.xlu0 %v5217
    %v5295 = vpop.xlane.xlu0 %5294
    %5296 = vadd.xlane.f32.xlu0 %v5218
    %v5297 = vpop.xlane.xlu0 %5296
    %5298 = vadd.xlane.f32.xlu0 %v5219
    %v5299 = vpop.xlane.xlu0 %5298
    %5300 = vadd.xlane.f32.xlu0 %v5220
    %v5301 = vpop.xlane.xlu0 %5300
    %5302 = vadd.xlane.f32.xlu0 %v5221
    %v5303 = vpop.xlane.xlu0 %5302
    %5304 = vadd.xlane.f32.xlu0 %v5222
    %v5305 = vpop.xlane.xlu0 %5304
    %5306 = vadd.xlane.f32.xlu0 %v5223
    %v5307 = vpop.xlane.xlu0 %5306
    %5308 = vadd.xlane.f32.xlu0 %v5224
    %v5309 = vpop.xlane.xlu0 %5308
    %5310 = vadd.xlane.f32.xlu0 %v5225
    %v5311 = vpop.xlane.xlu0 %5310
    %5312 = vadd.xlane.f32.xlu0 %v5226
    %v5313 = vpop.xlane.xlu0 %5312
    %5314 = vadd.xlane.f32.xlu0 %v5227
    %v5315 = vpop.xlane.xlu0 %5314
    %5316 = vadd.xlane.f32.xlu0 %v5228
    %v5317 = vpop.xlane.xlu0 %5316
    %5318 = vadd.xlane.f32.xlu0 %v5229
    %v5319 = vpop.xlane.xlu0 %5318
    %5320 = vadd.xlane.f32.xlu0 %v5230
    %v5321 = vpop.xlane.xlu0 %5320
    %5322 = vadd.xlane.f32.xlu0 %v5231
    %v5323 = vpop.xlane.xlu0 %5322
    %5324 = vadd.xlane.f32.xlu0 %v5232
    %v5325 = vpop.xlane.xlu0 %5324
    %5326 = vadd.xlane.f32.xlu0 %v5233
    %v5327 = vpop.xlane.xlu0 %5326
    %5328 = vadd.xlane.f32.xlu0 %v5234
    %v5329 = vpop.xlane.xlu0 %5328
    %5330 = vadd.xlane.f32.xlu0 %v5235
    %v5331 = vpop.xlane.xlu0 %5330
    %5332 = vadd.xlane.f32.xlu0 %v5236
    %v5333 = vpop.xlane.xlu0 %5332
    %5334 = vadd.xlane.f32.xlu0 %v5237
    %v5335 = vpop.xlane.xlu0 %5334
    %5336 = vadd.xlane.f32.xlu0 %v5238
    %v5337 = vpop.xlane.xlu0 %5336
    %5338 = vadd.xlane.f32.xlu0 %v5239
    %v5339 = vpop.xlane.xlu0 %5338
    %5340 = vadd.xlane.f32.xlu0 %v5240
    %v5341 = vpop.xlane.xlu0 %5340
    %5342 = vadd.xlane.f32.xlu0 %v5241
    %v5343 = vpop.xlane.xlu0 %5342
    %5344 = vadd.xlane.f32.xlu0 %v5242
    %v5345 = vpop.xlane.xlu0 %5344
    %5346 = vadd.xlane.f32.xlu0 %v5243
    %v5347 = vpop.xlane.xlu0 %5346
    %5348 = vadd.xlane.f32.xlu0 %v5244
    %v5349 = vpop.xlane.xlu0 %5348
    %5350 = vadd.xlane.f32.xlu0 %v5245
    %v5351 = vpop.xlane.xlu0 %5350
    %5352 = vadd.xlane.f32.xlu0 %v5246
    %v5353 = vpop.xlane.xlu0 %5352
    %5354 = vadd.xlane.f32.xlu0 %v5247
    %v5355 = vpop.xlane.xlu0 %5354
    %5356 = vadd.xlane.f32.xlu0 %v5248
    %v5357 = vpop.xlane.xlu0 %5356
    %5358 = vadd.xlane.f32.xlu0 %v5249
    %v5359 = vpop.xlane.xlu0 %5358
    %5360 = vadd.xlane.f32.xlu0 %v5250
    %v5361 = vpop.xlane.xlu0 %5360
    %5362 = vadd.xlane.f32.xlu0 %v5251
    %v5363 = vpop.xlane.xlu0 %5362
    %5364 = vadd.xlane.f32.xlu0 %v5252
    %v5365 = vpop.xlane.xlu0 %5364
    %5366 = vadd.xlane.f32.xlu0 %v5253
    %v5367 = vpop.xlane.xlu0 %5366
    %5368 = vadd.xlane.f32.xlu0 %v5254
    %v5369 = vpop.xlane.xlu0 %5368
    %5370 = vadd.xlane.f32.xlu0 %v5255
    %v5371 = vpop.xlane.xlu0 %5370
    %5372 = vadd.xlane.f32.xlu0 %v5256
    %v5373 = vpop.xlane.xlu0 %5372
    %5374 = vadd.xlane.f32.xlu0 %v5257
    %v5375 = vpop.xlane.xlu0 %5374
    %5376 = vadd.xlane.f32.xlu0 %v5258
    %v5377 = vpop.xlane.xlu0 %5376
    %5378 = vadd.xlane.f32.xlu0 %v5259
    %v5379 = vpop.xlane.xlu0 %5378
    %5380 = vadd.xlane.f32.xlu0 %v5260
    %v5381 = vpop.xlane.xlu0 %5380
    %5382 = vadd.xlane.f32.xlu0 %v5261
    %v5383 = vpop.xlane.xlu0 %5382
    %5384 = vadd.xlane.f32.xlu0 %v5262
    %v5385 = vpop.xlane.xlu0 %5384
    %5386 = vadd.xlane.f32.xlu0 %v5263
    %v5387 = vpop.xlane.xlu0 %5386
    %5388 = vadd.xlane.f32.xlu0 %v5264
    %v5389 = vpop.xlane.xlu0 %5388
    %5390 = vadd.xlane.f32.xlu0 %v5265
    %v5391 = vpop.xlane.xlu0 %5390
    %5392 = vadd.xlane.f32.xlu0 %v5266
    %v5393 = vpop.xlane.xlu0 %5392
    %5394 = vadd.xlane.f32.xlu0 %v5267
    %v5395 = vpop.xlane.xlu0 %5394
    %v5396 = vmul.f32 %v5269, %v802
    %v5397 = vmul.f32 %v5271, %v802
    %v5398 = vmul.f32 %v5273, %v802
    %v5399 = vmul.f32 %v5275, %v802
    %v5400 = vmul.f32 %v5277, %v802
    %v5401 = vmul.f32 %v5279, %v802
    %v5402 = vmul.f32 %v5281, %v802
    %v5403 = vmul.f32 %v5283, %v802
    %v5404 = vmul.f32 %v5285, %v802
    %v5405 = vmul.f32 %v5287, %v802
    %v5406 = vmul.f32 %v5289, %v802
    %v5407 = vmul.f32 %v5291, %v802
    %v5408 = vmul.f32 %v5293, %v802
    %v5409 = vmul.f32 %v5295, %v802
    %v5410 = vmul.f32 %v5297, %v802
    %v5411 = vmul.f32 %v5299, %v802
    %v5412 = vmul.f32 %v5301, %v802
    %v5413 = vmul.f32 %v5303, %v802
    %v5414 = vmul.f32 %v5305, %v802
    %v5415 = vmul.f32 %v5307, %v802
    %v5416 = vmul.f32 %v5309, %v802
    %v5417 = vmul.f32 %v5311, %v802
    %v5418 = vmul.f32 %v5313, %v802
    %v5419 = vmul.f32 %v5315, %v802
    %v5420 = vmul.f32 %v5317, %v802
    %v5421 = vmul.f32 %v5319, %v802
    %v5422 = vmul.f32 %v5321, %v802
    %v5423 = vmul.f32 %v5323, %v802
    %v5424 = vmul.f32 %v5325, %v802
    %v5425 = vmul.f32 %v5327, %v802
    %v5426 = vmul.f32 %v5329, %v802
    %v5427 = vmul.f32 %v5331, %v802
    %v5428 = vmul.f32 %v5333, %v802
    %v5429 = vmul.f32 %v5335, %v802
    %v5430 = vmul.f32 %v5337, %v802
    %v5431 = vmul.f32 %v5339, %v802
    %v5432 = vmul.f32 %v5341, %v802
    %v5433 = vmul.f32 %v5343, %v802
    %v5434 = vmul.f32 %v5345, %v802
    %v5435 = vmul.f32 %v5347, %v802
    %v5436 = vmul.f32 %v5349, %v802
    %v5437 = vmul.f32 %v5351, %v802
    %v5438 = vmul.f32 %v5353, %v802
    %v5439 = vmul.f32 %v5355, %v802
    %v5440 = vmul.f32 %v5357, %v802
    %v5441 = vmul.f32 %v5359, %v802
    %v5442 = vmul.f32 %v5361, %v802
    %v5443 = vmul.f32 %v5363, %v802
    %v5444 = vmul.f32 %v5365, %v802
    %v5445 = vmul.f32 %v5367, %v802
    %v5446 = vmul.f32 %v5369, %v802
    %v5447 = vmul.f32 %v5371, %v802
    %v5448 = vmul.f32 %v5373, %v802
    %v5449 = vmul.f32 %v5375, %v802
    %v5450 = vmul.f32 %v5377, %v802
    %v5451 = vmul.f32 %v5379, %v802
    %v5452 = vmul.f32 %v5381, %v802
    %v5453 = vmul.f32 %v5383, %v802
    %v5454 = vmul.f32 %v5385, %v802
    %v5455 = vmul.f32 %v5387, %v802
    %v5456 = vmul.f32 %v5389, %v802
    %v5457 = vmul.f32 %v5391, %v802
    %v5458 = vmul.f32 %v5393, %v802
    %v5459 = vmul.f32 %v5395, %v802
    %v5460 = vadd.f32 %v5396, 1e-05
    %v5461 = vadd.f32 %v5397, 1e-05
    %v5462 = vadd.f32 %v5398, 1e-05
    %v5463 = vadd.f32 %v5399, 1e-05
    %v5464 = vadd.f32 %v5400, 1e-05
    %v5465 = vadd.f32 %v5401, 1e-05
    %v5466 = vadd.f32 %v5402, 1e-05
    %v5467 = vadd.f32 %v5403, 1e-05
    %v5468 = vadd.f32 %v5404, 1e-05
    %v5469 = vadd.f32 %v5405, 1e-05
    %v5470 = vadd.f32 %v5406, 1e-05
    %v5471 = vadd.f32 %v5407, 1e-05
    %v5472 = vadd.f32 %v5408, 1e-05
    %v5473 = vadd.f32 %v5409, 1e-05
    %v5474 = vadd.f32 %v5410, 1e-05
    %v5475 = vadd.f32 %v5411, 1e-05
    %v5476 = vadd.f32 %v5412, 1e-05
    %v5477 = vadd.f32 %v5413, 1e-05
    %v5478 = vadd.f32 %v5414, 1e-05
    %v5479 = vadd.f32 %v5415, 1e-05
    %v5480 = vadd.f32 %v5416, 1e-05
    %v5481 = vadd.f32 %v5417, 1e-05
    %v5482 = vadd.f32 %v5418, 1e-05
    %v5483 = vadd.f32 %v5419, 1e-05
    %v5484 = vadd.f32 %v5420, 1e-05
    %v5485 = vadd.f32 %v5421, 1e-05
    %v5486 = vadd.f32 %v5422, 1e-05
    %v5487 = vadd.f32 %v5423, 1e-05
    %v5488 = vadd.f32 %v5424, 1e-05
    %v5489 = vadd.f32 %v5425, 1e-05
    %v5490 = vadd.f32 %v5426, 1e-05
    %v5491 = vadd.f32 %v5427, 1e-05
    %v5492 = vadd.f32 %v5428, 1e-05
    %v5493 = vadd.f32 %v5429, 1e-05
    %v5494 = vadd.f32 %v5430, 1e-05
    %v5495 = vadd.f32 %v5431, 1e-05
    %v5496 = vadd.f32 %v5432, 1e-05
    %v5497 = vadd.f32 %v5433, 1e-05
    %v5498 = vadd.f32 %v5434, 1e-05
    %v5499 = vadd.f32 %v5435, 1e-05
    %v5500 = vadd.f32 %v5436, 1e-05
    %v5501 = vadd.f32 %v5437, 1e-05
    %v5502 = vadd.f32 %v5438, 1e-05
    %v5503 = vadd.f32 %v5439, 1e-05
    %v5504 = vadd.f32 %v5440, 1e-05
    %v5505 = vadd.f32 %v5441, 1e-05
    %v5506 = vadd.f32 %v5442, 1e-05
    %v5507 = vadd.f32 %v5443, 1e-05
    %v5508 = vadd.f32 %v5444, 1e-05
    %v5509 = vadd.f32 %v5445, 1e-05
    %v5510 = vadd.f32 %v5446, 1e-05
    %v5511 = vadd.f32 %v5447, 1e-05
    %v5512 = vadd.f32 %v5448, 1e-05
    %v5513 = vadd.f32 %v5449, 1e-05
    %v5514 = vadd.f32 %v5450, 1e-05
    %v5515 = vadd.f32 %v5451, 1e-05
    %v5516 = vadd.f32 %v5452, 1e-05
    %v5517 = vadd.f32 %v5453, 1e-05
    %v5518 = vadd.f32 %v5454, 1e-05
    %v5519 = vadd.f32 %v5455, 1e-05
    %v5520 = vadd.f32 %v5456, 1e-05
    %v5521 = vadd.f32 %v5457, 1e-05
    %v5522 = vadd.f32 %v5458, 1e-05
    %v5523 = vadd.f32 %v5459, 1e-05
    %v5524 = vrsqrt.pop %v5460
    %v5525 = vrsqrt.pop %v5461
    %v5526 = vrsqrt.pop %v5462
    %v5527 = vrsqrt.pop %v5463
    %v5528 = vrsqrt.pop %v5464
    %v5529 = vrsqrt.pop %v5465
    %v5530 = vrsqrt.pop %v5466
    %v5531 = vrsqrt.pop %v5467
    %v5532 = vrsqrt.pop %v5468
    %v5533 = vrsqrt.pop %v5469
    %v5534 = vrsqrt.pop %v5470
    %v5535 = vrsqrt.pop %v5471
    %v5536 = vrsqrt.pop %v5472
    %v5537 = vrsqrt.pop %v5473
    %v5538 = vrsqrt.pop %v5474
    %v5539 = vrsqrt.pop %v5475
    %v5540 = vrsqrt.pop %v5476
    %v5541 = vrsqrt.pop %v5477
    %v5542 = vrsqrt.pop %v5478
    %v5543 = vrsqrt.pop %v5479
    %v5544 = vrsqrt.pop %v5480
    %v5545 = vrsqrt.pop %v5481
    %v5546 = vrsqrt.pop %v5482
    %v5547 = vrsqrt.pop %v5483
    %v5548 = vrsqrt.pop %v5484
    %v5549 = vrsqrt.pop %v5485
    %v5550 = vrsqrt.pop %v5486
    %v5551 = vrsqrt.pop %v5487
    %v5552 = vrsqrt.pop %v5488
    %v5553 = vrsqrt.pop %v5489
    %v5554 = vrsqrt.pop %v5490
    %v5555 = vrsqrt.pop %v5491
    %v5556 = vrsqrt.pop %v5492
    %v5557 = vrsqrt.pop %v5493
    %v5558 = vrsqrt.pop %v5494
    %v5559 = vrsqrt.pop %v5495
    %v5560 = vrsqrt.pop %v5496
    %v5561 = vrsqrt.pop %v5497
    %v5562 = vrsqrt.pop %v5498
    %v5563 = vrsqrt.pop %v5499
    %v5564 = vrsqrt.pop %v5500
    %v5565 = vrsqrt.pop %v5501
    %v5566 = vrsqrt.pop %v5502
    %v5567 = vrsqrt.pop %v5503
    %v5568 = vrsqrt.pop %v5504
    %v5569 = vrsqrt.pop %v5505
    %v5570 = vrsqrt.pop %v5506
    %v5571 = vrsqrt.pop %v5507
    %v5572 = vrsqrt.pop %v5508
    %v5573 = vrsqrt.pop %v5509
    %v5574 = vrsqrt.pop %v5510
    %v5575 = vrsqrt.pop %v5511
    %v5576 = vrsqrt.pop %v5512
    %v5577 = vrsqrt.pop %v5513
    %v5578 = vrsqrt.pop %v5514
    %v5579 = vrsqrt.pop %v5515
    %v5580 = vrsqrt.pop %v5516
    %v5581 = vrsqrt.pop %v5517
    %v5582 = vrsqrt.pop %v5518
    %v5583 = vrsqrt.pop %v5519
    %v5584 = vrsqrt.pop %v5520
    %v5585 = vrsqrt.pop %v5521
    %v5586 = vrsqrt.pop %v5522
    %v5587 = vrsqrt.pop %v5523
    %v5588 = vmul.f32 %v5140, %v5524
    %v5589 = vmul.f32 %v5141, %v5525
    %v5590 = vmul.f32 %v5142, %v5526
    %v5591 = vmul.f32 %v5143, %v5527
    %v5592 = vmul.f32 %v5144, %v5528
    %v5593 = vmul.f32 %v5145, %v5529
    %v5594 = vmul.f32 %v5146, %v5530
    %v5595 = vmul.f32 %v5147, %v5531
    %v5596 = vmul.f32 %v5148, %v5532
    %v5597 = vmul.f32 %v5149, %v5533
    %v5598 = vmul.f32 %v5150, %v5534
    %v5599 = vmul.f32 %v5151, %v5535
    %v5600 = vmul.f32 %v5152, %v5536
    %v5601 = vmul.f32 %v5153, %v5537
    %v5602 = vmul.f32 %v5154, %v5538
    %v5603 = vmul.f32 %v5155, %v5539
    %v5604 = vmul.f32 %v5156, %v5540
    %v5605 = vmul.f32 %v5157, %v5541
    %v5606 = vmul.f32 %v5158, %v5542
    %v5607 = vmul.f32 %v5159, %v5543
    %v5608 = vmul.f32 %v5160, %v5544
    %v5609 = vmul.f32 %v5161, %v5545
    %v5610 = vmul.f32 %v5162, %v5546
    %v5611 = vmul.f32 %v5163, %v5547
    %v5612 = vmul.f32 %v5164, %v5548
    %v5613 = vmul.f32 %v5165, %v5549
    %v5614 = vmul.f32 %v5166, %v5550
    %v5615 = vmul.f32 %v5167, %v5551
    %v5616 = vmul.f32 %v5168, %v5552
    %v5617 = vmul.f32 %v5169, %v5553
    %v5618 = vmul.f32 %v5170, %v5554
    %v5619 = vmul.f32 %v5171, %v5555
    %v5620 = vmul.f32 %v5172, %v5556
    %v5621 = vmul.f32 %v5173, %v5557
    %v5622 = vmul.f32 %v5174, %v5558
    %v5623 = vmul.f32 %v5175, %v5559
    %v5624 = vmul.f32 %v5176, %v5560
    %v5625 = vmul.f32 %v5177, %v5561
    %v5626 = vmul.f32 %v5178, %v5562
    %v5627 = vmul.f32 %v5179, %v5563
    %v5628 = vmul.f32 %v5180, %v5564
    %v5629 = vmul.f32 %v5181, %v5565
    %v5630 = vmul.f32 %v5182, %v5566
    %v5631 = vmul.f32 %v5183, %v5567
    %v5632 = vmul.f32 %v5184, %v5568
    %v5633 = vmul.f32 %v5185, %v5569
    %v5634 = vmul.f32 %v5186, %v5570
    %v5635 = vmul.f32 %v5187, %v5571
    %v5636 = vmul.f32 %v5188, %v5572
    %v5637 = vmul.f32 %v5189, %v5573
    %v5638 = vmul.f32 %v5190, %v5574
    %v5639 = vmul.f32 %v5191, %v5575
    %v5640 = vmul.f32 %v5192, %v5576
    %v5641 = vmul.f32 %v5193, %v5577
    %v5642 = vmul.f32 %v5194, %v5578
    %v5643 = vmul.f32 %v5195, %v5579
    %v5644 = vmul.f32 %v5196, %v5580
    %v5645 = vmul.f32 %v5197, %v5581
    %v5646 = vmul.f32 %v5198, %v5582
    %v5647 = vmul.f32 %v5199, %v5583
    %v5648 = vmul.f32 %v5200, %v5584
    %v5649 = vmul.f32 %v5201, %v5585
    %v5650 = vmul.f32 %v5202, %v5586
    %v5651 = vmul.f32 %v5203, %v5587
    %v5652 = vmul.f32 %v5588, %v4620
    %v5653 = vmul.f32 %v5589, %v4620
    %v5654 = vmul.f32 %v5590, %v4620
    %v5655 = vmul.f32 %v5591, %v4620
    %v5656 = vmul.f32 %v5592, %v4620
    %v5657 = vmul.f32 %v5593, %v4620
    %v5658 = vmul.f32 %v5594, %v4620
    %v5659 = vmul.f32 %v5595, %v4620
    %v5660 = vmul.f32 %v5596, %v4620
    %v5661 = vmul.f32 %v5597, %v4620
    %v5662 = vmul.f32 %v5598, %v4620
    %v5663 = vmul.f32 %v5599, %v4620
    %v5664 = vmul.f32 %v5600, %v4620
    %v5665 = vmul.f32 %v5601, %v4620
    %v5666 = vmul.f32 %v5602, %v4620
    %v5667 = vmul.f32 %v5603, %v4620
    %v5668 = vmul.f32 %v5604, %v4620
    %v5669 = vmul.f32 %v5605, %v4620
    %v5670 = vmul.f32 %v5606, %v4620
    %v5671 = vmul.f32 %v5607, %v4620
    %v5672 = vmul.f32 %v5608, %v4620
    %v5673 = vmul.f32 %v5609, %v4620
    %v5674 = vmul.f32 %v5610, %v4620
    %v5675 = vmul.f32 %v5611, %v4620
    %v5676 = vmul.f32 %v5612, %v4620
    %v5677 = vmul.f32 %v5613, %v4620
    %v5678 = vmul.f32 %v5614, %v4620
    %v5679 = vmul.f32 %v5615, %v4620
    %v5680 = vmul.f32 %v5616, %v4620
    %v5681 = vmul.f32 %v5617, %v4620
    %v5682 = vmul.f32 %v5618, %v4620
    %v5683 = vmul.f32 %v5619, %v4620
    %v5684 = vmul.f32 %v5620, %v4620
    %v5685 = vmul.f32 %v5621, %v4620
    %v5686 = vmul.f32 %v5622, %v4620
    %v5687 = vmul.f32 %v5623, %v4620
    %v5688 = vmul.f32 %v5624, %v4620
    %v5689 = vmul.f32 %v5625, %v4620
    %v5690 = vmul.f32 %v5626, %v4620
    %v5691 = vmul.f32 %v5627, %v4620
    %v5692 = vmul.f32 %v5628, %v4620
    %v5693 = vmul.f32 %v5629, %v4620
    %v5694 = vmul.f32 %v5630, %v4620
    %v5695 = vmul.f32 %v5631, %v4620
    %v5696 = vmul.f32 %v5632, %v4620
    %v5697 = vmul.f32 %v5633, %v4620
    %v5698 = vmul.f32 %v5634, %v4620
    %v5699 = vmul.f32 %v5635, %v4620
    %v5700 = vmul.f32 %v5636, %v4620
    %v5701 = vmul.f32 %v5637, %v4620
    %v5702 = vmul.f32 %v5638, %v4620
    %v5703 = vmul.f32 %v5639, %v4620
    %v5704 = vmul.f32 %v5640, %v4620
    %v5705 = vmul.f32 %v5641, %v4620
    %v5706 = vmul.f32 %v5642, %v4620
    %v5707 = vmul.f32 %v5643, %v4620
    %v5708 = vmul.f32 %v5644, %v4620
    %v5709 = vmul.f32 %v5645, %v4620
    %v5710 = vmul.f32 %v5646, %v4620
    %v5711 = vmul.f32 %v5647, %v4620
    %v5712 = vmul.f32 %v5648, %v4620
    %v5713 = vmul.f32 %v5649, %v4620
    %v5714 = vmul.f32 %v5650, %v4620
    %v5715 = vmul.f32 %v5651, %v4620
    %v5716 = vadd.f32 %v5652, %v4690
    %v5717 = vadd.f32 %v5653, %v4690
    %v5718 = vadd.f32 %v5654, %v4690
    %v5719 = vadd.f32 %v5655, %v4690
    %v5720 = vadd.f32 %v5656, %v4690
    %v5721 = vadd.f32 %v5657, %v4690
    %v5722 = vadd.f32 %v5658, %v4690
    %v5723 = vadd.f32 %v5659, %v4690
    %v5724 = vadd.f32 %v5660, %v4690
    %v5725 = vadd.f32 %v5661, %v4690
    %v5726 = vadd.f32 %v5662, %v4690
    %v5727 = vadd.f32 %v5663, %v4690
    %v5728 = vadd.f32 %v5664, %v4690
    %v5729 = vadd.f32 %v5665, %v4690
    %v5730 = vadd.f32 %v5666, %v4690
    %v5731 = vadd.f32 %v5667, %v4690
    %v5732 = vadd.f32 %v5668, %v4690
    %v5733 = vadd.f32 %v5669, %v4690
    %v5734 = vadd.f32 %v5670, %v4690
    %v5735 = vadd.f32 %v5671, %v4690
    %v5736 = vadd.f32 %v5672, %v4690
    %v5737 = vadd.f32 %v5673, %v4690
    %v5738 = vadd.f32 %v5674, %v4690
    %v5739 = vadd.f32 %v5675, %v4690
    %v5740 = vadd.f32 %v5676, %v4690
    %v5741 = vadd.f32 %v5677, %v4690
    %v5742 = vadd.f32 %v5678, %v4690
    %v5743 = vadd.f32 %v5679, %v4690
    %v5744 = vadd.f32 %v5680, %v4690
    %v5745 = vadd.f32 %v5681, %v4690
    %v5746 = vadd.f32 %v5682, %v4690
    %v5747 = vadd.f32 %v5683, %v4690
    %v5748 = vadd.f32 %v5684, %v4690
    %v5749 = vadd.f32 %v5685, %v4690
    %v5750 = vadd.f32 %v5686, %v4690
    %v5751 = vadd.f32 %v5687, %v4690
    %v5752 = vadd.f32 %v5688, %v4690
    %v5753 = vadd.f32 %v5689, %v4690
    %v5754 = vadd.f32 %v5690, %v4690
    %v5755 = vadd.f32 %v5691, %v4690
    %v5756 = vadd.f32 %v5692, %v4690
    %v5757 = vadd.f32 %v5693, %v4690
    %v5758 = vadd.f32 %v5694, %v4690
    %v5759 = vadd.f32 %v5695, %v4690
    %v5760 = vadd.f32 %v5696, %v4690
    %v5761 = vadd.f32 %v5697, %v4690
    %v5762 = vadd.f32 %v5698, %v4690
    %v5763 = vadd.f32 %v5699, %v4690
    %v5764 = vadd.f32 %v5700, %v4690
    %v5765 = vadd.f32 %v5701, %v4690
    %v5766 = vadd.f32 %v5702, %v4690
    %v5767 = vadd.f32 %v5703, %v4690
    %v5768 = vadd.f32 %v5704, %v4690
    %v5769 = vadd.f32 %v5705, %v4690
    %v5770 = vadd.f32 %v5706, %v4690
    %v5771 = vadd.f32 %v5707, %v4690
    %v5772 = vadd.f32 %v5708, %v4690
    %v5773 = vadd.f32 %v5709, %v4690
    %v5774 = vadd.f32 %v5710, %v4690
    %v5775 = vadd.f32 %v5711, %v4690
    %v5776 = vadd.f32 %v5712, %v4690
    %v5777 = vadd.f32 %v5713, %v4690
    %v5778 = vadd.f32 %v5714, %v4690
    %v5779 = vadd.f32 %v5715, %v4690
    %v5780 = vpack.c.bf16 %v5717, %v5716
    %v5781 = vpack.c.bf16 %v5719, %v5718
    %v5782 = vpack.c.bf16 %v5721, %v5720
    %v5783 = vpack.c.bf16 %v5723, %v5722
    %v5784 = vpack.c.bf16 %v5725, %v5724
    %v5785 = vpack.c.bf16 %v5727, %v5726
    %v5786 = vpack.c.bf16 %v5729, %v5728
    %v5787 = vpack.c.bf16 %v5731, %v5730
    %v5788 = vpack.c.bf16 %v5733, %v5732
    %v5789 = vpack.c.bf16 %v5735, %v5734
    %v5790 = vpack.c.bf16 %v5737, %v5736
    %v5791 = vpack.c.bf16 %v5739, %v5738
    %v5792 = vpack.c.bf16 %v5741, %v5740
    %v5793 = vpack.c.bf16 %v5743, %v5742
    %v5794 = vpack.c.bf16 %v5745, %v5744
    %v5795 = vpack.c.bf16 %v5747, %v5746
    %v5796 = vpack.c.bf16 %v5749, %v5748
    %v5797 = vpack.c.bf16 %v5751, %v5750
    %v5798 = vpack.c.bf16 %v5753, %v5752
    %v5799 = vpack.c.bf16 %v5755, %v5754
    %v5800 = vpack.c.bf16 %v5757, %v5756
    %v5801 = vpack.c.bf16 %v5759, %v5758
    %v5802 = vpack.c.bf16 %v5761, %v5760
    %v5803 = vpack.c.bf16 %v5763, %v5762
    %v5804 = vpack.c.bf16 %v5765, %v5764
    %v5805 = vpack.c.bf16 %v5767, %v5766
    %v5806 = vpack.c.bf16 %v5769, %v5768
    %v5807 = vpack.c.bf16 %v5771, %v5770
    %v5808 = vpack.c.bf16 %v5773, %v5772
    %v5809 = vpack.c.bf16 %v5775, %v5774
    %v5810 = vpack.c.bf16 %v5777, %v5776
    %v5811 = vpack.c.bf16 %v5779, %v5778
    %v5844 = vunpack.c.l.b16 %v5780
    %v5845 = vunpack.c.h.b16 %v5780
    %v5846 = vunpack.c.l.b16 %v5781
    %v5847 = vunpack.c.h.b16 %v5781
    %v5848 = vunpack.c.l.b16 %v5782
    %v5849 = vunpack.c.h.b16 %v5782
    %v5850 = vunpack.c.l.b16 %v5783
    %v5851 = vunpack.c.h.b16 %v5783
    %v5852 = vunpack.c.l.b16 %v5784
    %v5853 = vunpack.c.h.b16 %v5784
    %v5854 = vunpack.c.l.b16 %v5785
    %v5855 = vunpack.c.h.b16 %v5785
    %v5856 = vunpack.c.l.b16 %v5786
    %v5857 = vunpack.c.h.b16 %v5786
    %v5858 = vunpack.c.l.b16 %v5787
    %v5859 = vunpack.c.h.b16 %v5787
    %v5860 = vunpack.c.l.b16 %v5788
    %v5861 = vunpack.c.h.b16 %v5788
    %v5862 = vunpack.c.l.b16 %v5789
    %v5863 = vunpack.c.h.b16 %v5789
    %v5864 = vunpack.c.l.b16 %v5790
    %v5865 = vunpack.c.h.b16 %v5790
    %v5866 = vunpack.c.l.b16 %v5791
    %v5867 = vunpack.c.h.b16 %v5791
    %v5868 = vunpack.c.l.b16 %v5792
    %v5869 = vunpack.c.h.b16 %v5792
    %v5870 = vunpack.c.l.b16 %v5793
    %v5871 = vunpack.c.h.b16 %v5793
    %v5872 = vunpack.c.l.b16 %v5794
    %v5873 = vunpack.c.h.b16 %v5794
    %v5874 = vunpack.c.l.b16 %v5795
    %v5875 = vunpack.c.h.b16 %v5795
    %v5876 = vunpack.c.l.b16 %v5796
    %v5877 = vunpack.c.h.b16 %v5796
    %v5878 = vunpack.c.l.b16 %v5797
    %v5879 = vunpack.c.h.b16 %v5797
    %v5880 = vunpack.c.l.b16 %v5798
    %v5881 = vunpack.c.h.b16 %v5798
    %v5882 = vunpack.c.l.b16 %v5799
    %v5883 = vunpack.c.h.b16 %v5799
    %v5884 = vunpack.c.l.b16 %v5800
    %v5885 = vunpack.c.h.b16 %v5800
    %v5886 = vunpack.c.l.b16 %v5801
    %v5887 = vunpack.c.h.b16 %v5801
    %v5888 = vunpack.c.l.b16 %v5802
    %v5889 = vunpack.c.h.b16 %v5802
    %v5890 = vunpack.c.l.b16 %v5803
    %v5891 = vunpack.c.h.b16 %v5803
    %v5892 = vunpack.c.l.b16 %v5804
    %v5893 = vunpack.c.h.b16 %v5804
    %v5894 = vunpack.c.l.b16 %v5805
    %v5895 = vunpack.c.h.b16 %v5805
    %v5896 = vunpack.c.l.b16 %v5806
    %v5897 = vunpack.c.h.b16 %v5806
    %v5898 = vunpack.c.l.b16 %v5807
    %v5899 = vunpack.c.h.b16 %v5807
    %v5900 = vunpack.c.l.b16 %v5808
    %v5901 = vunpack.c.h.b16 %v5808
    %v5902 = vunpack.c.l.b16 %v5809
    %v5903 = vunpack.c.h.b16 %v5809
    %v5904 = vunpack.c.l.b16 %v5810
    %v5905 = vunpack.c.h.b16 %v5810
    %v5906 = vunpack.c.l.b16 %v5811
    %v5907 = vunpack.c.h.b16 %v5811
    %v5908 = vpack.c.b16 %v5844, %v5844
    %v5909 = vpack.c.b16 %v5845, %v5845
    %v5910 = vpack.c.b16 %v5846, %v5846
    %v5911 = vpack.c.b16 %v5847, %v5847
    %v5912 = vpack.c.b16 %v5848, %v5848
    %v5913 = vpack.c.b16 %v5849, %v5849
    %v5914 = vpack.c.b16 %v5850, %v5850
    %v5915 = vpack.c.b16 %v5851, %v5851
    %v5916 = vpack.c.b16 %v5852, %v5852
    %v5917 = vpack.c.b16 %v5853, %v5853
    %v5918 = vpack.c.b16 %v5854, %v5854
    %v5919 = vpack.c.b16 %v5855, %v5855
    %v5920 = vpack.c.b16 %v5856, %v5856
    %v5921 = vpack.c.b16 %v5857, %v5857
    %v5922 = vpack.c.b16 %v5858, %v5858
    %v5923 = vpack.c.b16 %v5859, %v5859
    %v5924 = vpack.c.b16 %v5860, %v5860
    %v5925 = vpack.c.b16 %v5861, %v5861
    %v5926 = vpack.c.b16 %v5862, %v5862
    %v5927 = vpack.c.b16 %v5863, %v5863
    %v5928 = vpack.c.b16 %v5864, %v5864
    %v5929 = vpack.c.b16 %v5865, %v5865
    %v5930 = vpack.c.b16 %v5866, %v5866
    %v5931 = vpack.c.b16 %v5867, %v5867
    %v5932 = vpack.c.b16 %v5868, %v5868
    %v5933 = vpack.c.b16 %v5869, %v5869
    %v5934 = vpack.c.b16 %v5870, %v5870
    %v5935 = vpack.c.b16 %v5871, %v5871
    %v5936 = vpack.c.b16 %v5872, %v5872
    %v5937 = vpack.c.b16 %v5873, %v5873
    %v5938 = vpack.c.b16 %v5874, %v5874
    %v5939 = vpack.c.b16 %v5875, %v5875
    %v5940 = vpack.c.b16 %v5876, %v5876
    %v5941 = vpack.c.b16 %v5877, %v5877
    %v5942 = vpack.c.b16 %v5878, %v5878
    %v5943 = vpack.c.b16 %v5879, %v5879
    %v5944 = vpack.c.b16 %v5880, %v5880
    %v5945 = vpack.c.b16 %v5881, %v5881
    %v5946 = vpack.c.b16 %v5882, %v5882
    %v5947 = vpack.c.b16 %v5883, %v5883
    %v5948 = vpack.c.b16 %v5884, %v5884
    %v5949 = vpack.c.b16 %v5885, %v5885
    %v5950 = vpack.c.b16 %v5886, %v5886
    %v5951 = vpack.c.b16 %v5887, %v5887
    %v5952 = vpack.c.b16 %v5888, %v5888
    %v5953 = vpack.c.b16 %v5889, %v5889
    %v5954 = vpack.c.b16 %v5890, %v5890
    %v5955 = vpack.c.b16 %v5891, %v5891
    %v5956 = vpack.c.b16 %v5892, %v5892
    %v5957 = vpack.c.b16 %v5893, %v5893
    %v5958 = vpack.c.b16 %v5894, %v5894
    %v5959 = vpack.c.b16 %v5895, %v5895
    %v5960 = vpack.c.b16 %v5896, %v5896
    %v5961 = vpack.c.b16 %v5897, %v5897
    %v5962 = vpack.c.b16 %v5898, %v5898
    %v5963 = vpack.c.b16 %v5899, %v5899
    %v5964 = vpack.c.b16 %v5900, %v5900
    %v5965 = vpack.c.b16 %v5901, %v5901
    %v5966 = vpack.c.b16 %v5902, %v5902
    %v5967 = vpack.c.b16 %v5903, %v5903
    %v5968 = vpack.c.b16 %v5904, %v5904
    %v5969 = vpack.c.b16 %v5905, %v5905
    %v5970 = vpack.c.b16 %v5906, %v5906
    %v5971 = vpack.c.b16 %v5907, %v5907
    %6036 = vst [vmem:[#allocation4] sm:$0xf] %v5908
    %6037 = vst [vmem:[#allocation4 + $0x4] sm:$0xf] %v5909
    %6038 = vst [vmem:[#allocation4 + $0x8] sm:$0xf] %v5910
    %6039 = vst [vmem:[#allocation4 + $0xc] sm:$0xf] %v5911
    %6040 = vst [vmem:[#allocation4 + $0x10] sm:$0xf] %v5912
    %6041 = vst [vmem:[#allocation4 + $0x14] sm:$0xf] %v5913
    %6042 = vst [vmem:[#allocation4 + $0x18] sm:$0xf] %v5914
    %6043 = vst [vmem:[#allocation4 + $0x1c] sm:$0xf] %v5915
    %6044 = vst [vmem:[#allocation4 + $0x20] sm:$0xf] %v5916
    %6045 = vst [vmem:[#allocation4 + $0x24] sm:$0xf] %v5917
    %6046 = vst [vmem:[#allocation4 + $0x28] sm:$0xf] %v5918
    %6047 = vst [vmem:[#allocation4 + $0x2c] sm:$0xf] %v5919
    %6048 = vst [vmem:[#allocation4 + $0x30] sm:$0xf] %v5920
    %6049 = vst [vmem:[#allocation4 + $0x34] sm:$0xf] %v5921
    %6050 = vst [vmem:[#allocation4 + $0x38] sm:$0xf] %v5922
    %6051 = vst [vmem:[#allocation4 + $0x3c] sm:$0xf] %v5923
    %6052 = vst [vmem:[#allocation4 + $0x40] sm:$0xf] %v5924
    %6053 = vst [vmem:[#allocation4 + $0x44] sm:$0xf] %v5925
    %6054 = vst [vmem:[#allocation4 + $0x48] sm:$0xf] %v5926
    %6055 = vst [vmem:[#allocation4 + $0x4c] sm:$0xf] %v5927
    %6056 = vst [vmem:[#allocation4 + $0x50] sm:$0xf] %v5928
    %6057 = vst [vmem:[#allocation4 + $0x54] sm:$0xf] %v5929
    %6058 = vst [vmem:[#allocation4 + $0x58] sm:$0xf] %v5930
    %6059 = vst [vmem:[#allocation4 + $0x5c] sm:$0xf] %v5931
    %6060 = vst [vmem:[#allocation4 + $0x60] sm:$0xf] %v5932
    %6061 = vst [vmem:[#allocation4 + $0x64] sm:$0xf] %v5933
    %6062 = vst [vmem:[#allocation4 + $0x68] sm:$0xf] %v5934
    %6063 = vst [vmem:[#allocation4 + $0x6c] sm:$0xf] %v5935
    %6064 = vst [vmem:[#allocation4 + $0x70] sm:$0xf] %v5936
    %6065 = vst [vmem:[#allocation4 + $0x74] sm:$0xf] %v5937
    %6066 = vst [vmem:[#allocation4 + $0x78] sm:$0xf] %v5938
    %6067 = vst [vmem:[#allocation4 + $0x7c] sm:$0xf] %v5939
    %6068 = vst [vmem:[#allocation4 + $0x80] sm:$0xf] %v5940
    %6069 = vst [vmem:[#allocation4 + $0x84] sm:$0xf] %v5941
    %6070 = vst [vmem:[#allocation4 + $0x88] sm:$0xf] %v5942
    %6071 = vst [vmem:[#allocation4 + $0x8c] sm:$0xf] %v5943
    %6072 = vst [vmem:[#allocation4 + $0x90] sm:$0xf] %v5944
    %6073 = vst [vmem:[#allocation4 + $0x94] sm:$0xf] %v5945
    %6074 = vst [vmem:[#allocation4 + $0x98] sm:$0xf] %v5946
    %6075 = vst [vmem:[#allocation4 + $0x9c] sm:$0xf] %v5947
    %6076 = vst [vmem:[#allocation4 + $0xa0] sm:$0xf] %v5948
    %6077 = vst [vmem:[#allocation4 + $0xa4] sm:$0xf] %v5949
    %6078 = vst [vmem:[#allocation4 + $0xa8] sm:$0xf] %v5950
    %6079 = vst [vmem:[#allocation4 + $0xac] sm:$0xf] %v5951
    %6080 = vst [vmem:[#allocation4 + $0xb0] sm:$0xf] %v5952
    %6081 = vst [vmem:[#allocation4 + $0xb4] sm:$0xf] %v5953
    %6082 = vst [vmem:[#allocation4 + $0xb8] sm:$0xf] %v5954
    %6083 = vst [vmem:[#allocation4 + $0xbc] sm:$0xf] %v5955
    %6084 = vst [vmem:[#allocation4 + $0xc0] sm:$0xf] %v5956
    %6085 = vst [vmem:[#allocation4 + $0xc4] sm:$0xf] %v5957
    %6086 = vst [vmem:[#allocation4 + $0xc8] sm:$0xf] %v5958
    %6087 = vst [vmem:[#allocation4 + $0xcc] sm:$0xf] %v5959
    %6088 = vst [vmem:[#allocation4 + $0xd0] sm:$0xf] %v5960
    %6089 = vst [vmem:[#allocation4 + $0xd4] sm:$0xf] %v5961
    %6090 = vst [vmem:[#allocation4 + $0xd8] sm:$0xf] %v5962
    %6091 = vst [vmem:[#allocation4 + $0xdc] sm:$0xf] %v5963
    %6092 = vst [vmem:[#allocation4 + $0xe0] sm:$0xf] %v5964
    %6093 = vst [vmem:[#allocation4 + $0xe4] sm:$0xf] %v5965
    %6094 = vst [vmem:[#allocation4 + $0xe8] sm:$0xf] %v5966
    %6095 = vst [vmem:[#allocation4 + $0xec] sm:$0xf] %v5967
    %6096 = vst [vmem:[#allocation4 + $0xf0] sm:$0xf] %v5968
    %6097 = vst [vmem:[#allocation4 + $0xf4] sm:$0xf] %v5969
    %6098 = vst [vmem:[#allocation4 + $0xf8] sm:$0xf] %v5970
    %6099 = vst [vmem:[#allocation4 + $0xfc] sm:$0xf] %v5971
    // Predicated region
    $region58: #{input_block.1} parent=1 // pred_check
      _
    $region59: #{input_block.1} parent=1 // pred_check_branch
      %6101 = sbr.rel (0) target = $region61
    $region60: #{input_block.1} parent=1 // pred_region
      %s6103 = ssub.s32 1024, 1024
      %6104 = vsyncadd [#allocation3], %s6103
      %s6105 = sshll.u32 [#allocation2], 4
      %s6106 = int_to_ptr.vmem [resolvable:$true] %s6105
      %6111 = dma.vmem_to_hbm [thread:$0]  %s6106, 1024, %s14, [#allocation3], 128, 128, 8
    $region61: #{input_block.1} parent=1 // pred_fallthru
      _
    // Predicated region
    $region62: #{input_block.1} parent=1 // pred_check
      _
    $region63: #{input_block.1} parent=1 // pred_check_branch
      %6113 = sbr.rel (0) target = $region65
    $region64: #{input_block.1} parent=1 // pred_region
      %s6115 = ssub.s32 4096, 4096
      %6116 = vsyncadd [#allocation5], %s6115
      %s6117 = sshll.u32 [#allocation4], 4
      %s6118 = int_to_ptr.vmem [resolvable:$true] %s6117
      %6123 = dma.vmem_to_hbm [thread:$0]  %s6118, 4096, %s15, [#allocation5], 64, 64, 4
    $region65: #{input_block.1} parent=1 // pred_fallthru
      _
    // Predicated region
    $region66: #{input_block.1} parent=1 // pred_check
      _
    $region67: #{input_block.1} parent=1 // pred_check_branch
      %6125 = sbr.rel (0) target = $region69
    $region68: #{input_block.1} parent=1 // pred_region
      %6126 = dma.done [#allocation3], 1024
    $region69: #{input_block.1} parent=1 // pred_fallthru
      _
    // Predicated region
    $region70: #{input_block.1} parent=1 // pred_check
      _
    $region71: #{input_block.1} parent=1 // pred_check_branch
      %6128 = sbr.rel (0) target = $region73
    $region72: #{input_block.1} parent=1 // pred_region
      %6129 = dma.done [#allocation5], 4096
    $region73: #{input_block.1} parent=1 // pred_fallthru
      _
    %6130 = vsyncpa [#allocation3], 1
    %6131 = vsyncpa [#allocation5], 1

</llo_original>
